<compile_context>
chip_gen: v7x
topology: tpu7x:2x2x1
jax: 0.10.0
libtpu: 0.0.40
codegen_flags: <defaults>
</compile_context>

<pallas_src>
import jax
import jax.numpy as jnp
from jax.experimental import pallas as pl
from jax.experimental.pallas import tpu as pltpu

# ----- hyper-params (small, consistent with the module's argparse opts) -----
LATENT_DIM = 32
CHANNELS = 4
IMG_SIZE = 16
N_FEATURES = CHANNELS * IMG_SIZE * IMG_SIZE  # 1024
HIDDEN = (128, 256, 512, 1024)
BATCH = 2
NEG_SLOPE = 0.2
TN = 256  # output-feature tile for the final (1024 x 1024) layer


def _leaky_relu(x, slope=NEG_SLOPE):
    return jnp.where(x > 0, x, slope * x)


def generator_kernel(z_ref,
                     w1_ref, b1_ref,
                     w2_ref, b2_ref,
                     w3_ref, b3_ref,
                     w4_ref, b4_ref,
                     w5_ref, b5_ref,
                     out_ref,
                     h4_ref):
    """Grid axis iterates over 256-wide column blocks of the output layer.

    Step 0 computes the full layer-1..4 trunk (all of those weights have
    constant block indices, so they are DMA'd exactly once) and caches the
    layer-4 activation in a bf16 VMEM scratch.  Every step then consumes one
    (1024, TN) slice of w5 — whose DMA is pipelined by Pallas against the
    previous step's compute — and writes one lane-dense (B, TN) output block.
    """
    j = pl.program_id(0)

    @pl.when(j == 0)
    def _():
        x = z_ref[...].astype(jnp.bfloat16)

        # layer 1: latent -> 128, LeakyReLU (no dropout)
        h = jnp.dot(x, w1_ref[...], preferred_element_type=jnp.float32)
        h = _leaky_relu(h + b1_ref[...].astype(jnp.float32))

        # layer 2: 128 -> 256, LeakyReLU (+ dropout = identity in eval)
        h = jnp.dot(h.astype(jnp.bfloat16), w2_ref[...],
                    preferred_element_type=jnp.float32)
        h = _leaky_relu(h + b2_ref[...].astype(jnp.float32))

        # layer 3: 256 -> 512
        h = jnp.dot(h.astype(jnp.bfloat16), w3_ref[...],
                    preferred_element_type=jnp.float32)
        h = _leaky_relu(h + b3_ref[...].astype(jnp.float32))

        # layer 4: 512 -> 1024
        h = jnp.dot(h.astype(jnp.bfloat16), w4_ref[...],
                    preferred_element_type=jnp.float32)
        h = _leaky_relu(h + b4_ref[...].astype(jnp.float32))

        # cache as bf16 once; re-used (no re-cast) by every output block.
        h4_ref[...] = h.astype(jnp.bfloat16)

    # output layer, one N-block per grid step: 1024 -> TN, tanh
    y = jnp.dot(h4_ref[...], w5_ref[...], preferred_element_type=jnp.float32)
    y = y + b5_ref[...].astype(jnp.float32)
    out_ref[...] = jnp.tanh(y).astype(out_ref.dtype)


def init_params(key):
    """Deterministic init mimicking nn.Linear default; stored in bfloat16."""
    dims = (LATENT_DIM,) + HIDDEN + (N_FEATURES,)
    params = []
    for i in range(len(dims) - 1):
        fan_in, fan_out = dims[i], dims[i + 1]
        key, kw, kb = jax.random.split(key, 3)
        bound = 1.0 / jnp.sqrt(fan_in)
        w = jax.random.uniform(kw, (fan_in, fan_out), jnp.float32, -bound, bound)
        b = jax.random.uniform(kb, (1, fan_out), jnp.float32, -bound, bound)
        params.append((w.astype(jnp.bfloat16), b.astype(jnp.bfloat16)))
    return params


def _cost_estimate(batch):
    dims = (LATENT_DIM,) + HIDDEN + (N_FEATURES,)
    mac = sum(dims[i] * dims[i + 1] for i in range(len(dims) - 1))
    flops = 2 * batch * mac
    transcendentals = batch * N_FEATURES                       # tanh
    weight_bytes = 2 * mac                                     # bf16 weights
    bias_bytes = 2 * sum(dims[1:])                             # bf16 biases
    io_bytes = 4 * batch * (LATENT_DIM + N_FEATURES)           # f32 z + out
    return pl.CostEstimate(flops=flops,
                           transcendentals=transcendentals,
                           bytes_accessed=weight_bytes + bias_bytes + io_bytes)


@jax.jit
def generator_forward(z, params):
    B = z.shape[0]
    flat_args = [z]
    for w, b in params:
        flat_args.extend([w, b])

    def _full(shape):
        # whole-array block, resident across the grid (constant block index)
        return pl.BlockSpec(shape, lambda j: (0,) * len(shape))

    (w1, b1), (w2, b2), (w3, b3), (w4, b4), (w5, b5) = params

    in_specs = [
        _full(z.shape),
        _full(w1.shape), _full(b1.shape),
        _full(w2.shape), _full(b2.shape),
        _full(w3.shape), _full(b3.shape),
        _full(w4.shape), _full(b4.shape),
        # final layer streamed in 256-wide column blocks (pipelined DMA)
        pl.BlockSpec((HIDDEN[3], TN), lambda j: (0, j)),
        pl.BlockSpec((1, TN), lambda j: (0, j)),
    ]
    out_spec = pl.BlockSpec((B, TN), lambda j: (0, j))

    out_flat = pl.pallas_call(
        generator_kernel,
        out_shape=jax.ShapeDtypeStruct((B, N_FEATURES), jnp.float32),
        grid_spec=pltpu.PrefetchScalarGridSpec(
            num_scalar_prefetch=0,
            grid=(N_FEATURES // TN,),
            in_specs=in_specs,
            out_specs=out_spec,
            scratch_shapes=[pltpu.VMEM((B, HIDDEN[3]), jnp.bfloat16)],
        ),
        compiler_params=pltpu.CompilerParams(
            # steps > 0 consume the scratch written at step 0 -> not parallel
            dimension_semantics=("arbitrary",),
            vmem_limit_bytes=16 << 20,
        ),
        cost_estimate=_cost_estimate(B),
    )(*flat_args)

    # img = img.view(B, channels, img_size, img_size)  (NCHW, matching PyTorch)
    return out_flat.reshape(B, CHANNELS, IMG_SIZE, IMG_SIZE)


def generator_ref(z, params):
    """Pure-JAX reference (same bf16-input / f32-accumulate numerics)."""
    h = z
    n = len(params)
    for i, (w, b) in enumerate(params):
        h = jnp.dot(h.astype(jnp.bfloat16), w,
                    preferred_element_type=jnp.float32)
        h = h + b.astype(jnp.float32)
        if i < n - 1:
            h = _leaky_relu(h)
        else:
            h = jnp.tanh(h)
    return h.reshape(z.shape[0], CHANNELS, IMG_SIZE, IMG_SIZE)


if __name__ == "__main__":
    key = jax.random.PRNGKey(0)
    key, zkey = jax.random.split(key)
    params = init_params(key)
    z = jax.random.normal(zkey, (BATCH, LATENT_DIM), jnp.float32)

    img = generator_forward(z, params)
    img = jax.block_until_ready(img)

    assert img.shape == (BATCH, CHANNELS, IMG_SIZE, IMG_SIZE), img.shape
    assert img.dtype == jnp.float32, img.dtype

    ref = generator_ref(z, params)
    # bf16 matmul inputs (f32 accumulation) on both paths; tanh output in [-1,1]
    assert jnp.allclose(img, ref, atol=2e-2, rtol=2e-2), (
        float(jnp.max(jnp.abs(img - ref))))

    print("KERNEL_OK")
</pallas_src>

<mosaic_0001>
module attributes {stable_mosaic.version = 11 : i64} {
  func.func @generator_kernel(%arg0: i32, %arg1: memref<2x32xf32, #tpu.memory_space<vmem>>, %arg2: memref<32x128xbf16, #tpu.memory_space<vmem>>, %arg3: memref<1x128xbf16, #tpu.memory_space<vmem>>, %arg4: memref<128x256xbf16, #tpu.memory_space<vmem>>, %arg5: memref<1x256xbf16, #tpu.memory_space<vmem>>, %arg6: memref<256x512xbf16, #tpu.memory_space<vmem>>, %arg7: memref<1x512xbf16, #tpu.memory_space<vmem>>, %arg8: memref<512x1024xbf16, #tpu.memory_space<vmem>>, %arg9: memref<1x1024xbf16, #tpu.memory_space<vmem>>, %arg10: memref<1024x256xbf16, #tpu.memory_space<vmem>>, %arg11: memref<1x256xbf16, #tpu.memory_space<vmem>>, %arg12: memref<2x256xf32, #tpu.memory_space<vmem>>, %arg13: memref<2x1024xbf16, #tpu.memory_space<vmem>>) attributes {dimension_semantics = [#tpu.dimension_semantics<arbitrary>], iteration_bounds = array<i64: 4>, scalar_prefetch = 0 : i64, scratch_operands = 1 : i64, tpu.core_type = #tpu.core_type<tc>, window_params = [{pipeline_mode = #tpu.pipeline_mode<synchronous>, transform_indices = @transform_0, window_bounds = array<i64: 2, 32>}, {pipeline_mode = #tpu.pipeline_mode<synchronous>, transform_indices = @transform_1, window_bounds = array<i64: 32, 128>}, {pipeline_mode = #tpu.pipeline_mode<synchronous>, transform_indices = @transform_2, window_bounds = array<i64: 1, 128>}, {pipeline_mode = #tpu.pipeline_mode<synchronous>, transform_indices = @transform_3, window_bounds = array<i64: 128, 256>}, {pipeline_mode = #tpu.pipeline_mode<synchronous>, transform_indices = @transform_4, window_bounds = array<i64: 1, 256>}, {pipeline_mode = #tpu.pipeline_mode<synchronous>, transform_indices = @transform_5, window_bounds = array<i64: 256, 512>}, {pipeline_mode = #tpu.pipeline_mode<synchronous>, transform_indices = @transform_6, window_bounds = array<i64: 1, 512>}, {pipeline_mode = #tpu.pipeline_mode<synchronous>, transform_indices = @transform_7, window_bounds = array<i64: 512, 1024>}, {pipeline_mode = #tpu.pipeline_mode<synchronous>, transform_indices = @transform_8, window_bounds = array<i64: 1, 1024>}, {transform_indices = @transform_9, window_bounds = array<i64: 1024, 256>}, {transform_indices = @transform_10, window_bounds = array<i64: 1, 256>}, {transform_indices = @transform_11, window_bounds = array<i64: 2, 256>}]} {
    %c0_i32 = arith.constant 0 : i32
    %0 = arith.cmpi eq, %arg0, %c0_i32 : i32
    %1 = arith.extui %0 : i1 to i32
    %c0_i32_0 = arith.constant 0 : i32
    %2 = arith.cmpi ne, %1, %c0_i32_0 : i32
    scf.if %2 {
      %c0_8 = arith.constant 0 : index
      %c0_9 = arith.constant 0 : index
      %12 = vector.load %arg1[%c0_8, %c0_9] : memref<2x32xf32, #tpu.memory_space<vmem>>, vector<2x32xf32>
      %13 = arith.truncf %12 : vector<2x32xf32> to vector<2x32xbf16>
      %c0_10 = arith.constant 0 : index
      %c0_11 = arith.constant 0 : index
      %14 = vector.load %arg2[%c0_10, %c0_11] : memref<32x128xbf16, #tpu.memory_space<vmem>>, vector<32x128xbf16>
      %cst_12 = arith.constant dense<0.000000e+00> : vector<2x128xf32>
      %15 = tpu.matmul %13, %14, %cst_12 {dimension_numbers = #tpu.dot_dimension_numbers<[1], [0], [0], [1], [0, 0, 1, 1], [], []>} : vector<2x32xbf16>, vector<32x128xbf16>, vector<2x128xf32> -> vector<2x128xf32>
      %c0_13 = arith.constant 0 : index
      %c0_14 = arith.constant 0 : index
      %16 = vector.load %arg3[%c0_13, %c0_14] : memref<1x128xbf16, #tpu.memory_space<vmem>>, vector<1x128xbf16>
      %17 = arith.extf %16 : vector<1x128xbf16> to vector<1x128xf32>
      %18 = vector.broadcast %17 : vector<1x128xf32> to vector<2x128xf32>
      %19 = arith.addf %15, %18 : vector<2x128xf32>
      %cst_15 = arith.constant 0.000000e+00 : f32
      %20 = vector.broadcast %cst_15 : f32 to vector<2x128xf32>
      %21 = arith.cmpf ogt, %19, %20 : vector<2x128xf32>
      %cst_16 = arith.constant 2.000000e-01 : f32
      %22 = vector.broadcast %cst_16 : f32 to vector<2x128xf32>
      %23 = arith.mulf %22, %19 : vector<2x128xf32>
      %24 = arith.select %21, %19, %23 : vector<2x128xi1>, vector<2x128xf32>
      %25 = arith.truncf %24 : vector<2x128xf32> to vector<2x128xbf16>
      %c0_17 = arith.constant 0 : index
      %c0_18 = arith.constant 0 : index
      %26 = vector.load %arg4[%c0_17, %c0_18] : memref<128x256xbf16, #tpu.memory_space<vmem>>, vector<128x256xbf16>
      %cst_19 = arith.constant dense<0.000000e+00> : vector<2x256xf32>
      %27 = tpu.matmul %25, %26, %cst_19 {dimension_numbers = #tpu.dot_dimension_numbers<[1], [0], [0], [1], [0, 0, 1, 1], [], []>} : vector<2x128xbf16>, vector<128x256xbf16>, vector<2x256xf32> -> vector<2x256xf32>
      %c0_20 = arith.constant 0 : index
      %c0_21 = arith.constant 0 : index
      %28 = vector.load %arg5[%c0_20, %c0_21] : memref<1x256xbf16, #tpu.memory_space<vmem>>, vector<1x256xbf16>
      %29 = arith.extf %28 : vector<1x256xbf16> to vector<1x256xf32>
      %30 = vector.broadcast %29 : vector<1x256xf32> to vector<2x256xf32>
      %31 = arith.addf %27, %30 : vector<2x256xf32>
      %cst_22 = arith.constant 0.000000e+00 : f32
      %32 = vector.broadcast %cst_22 : f32 to vector<2x256xf32>
      %33 = arith.cmpf ogt, %31, %32 : vector<2x256xf32>
      %cst_23 = arith.constant 2.000000e-01 : f32
      %34 = vector.broadcast %cst_23 : f32 to vector<2x256xf32>
      %35 = arith.mulf %34, %31 : vector<2x256xf32>
      %36 = arith.select %33, %31, %35 : vector<2x256xi1>, vector<2x256xf32>
      %37 = arith.truncf %36 : vector<2x256xf32> to vector<2x256xbf16>
      %c0_24 = arith.constant 0 : index
      %c0_25 = arith.constant 0 : index
      %38 = vector.load %arg6[%c0_24, %c0_25] : memref<256x512xbf16, #tpu.memory_space<vmem>>, vector<256x512xbf16>
      %cst_26 = arith.constant dense<0.000000e+00> : vector<2x512xf32>
      %39 = tpu.matmul %37, %38, %cst_26 {dimension_numbers = #tpu.dot_dimension_numbers<[1], [0], [0], [1], [0, 0, 1, 1], [], []>} : vector<2x256xbf16>, vector<256x512xbf16>, vector<2x512xf32> -> vector<2x512xf32>
      %c0_27 = arith.constant 0 : index
      %c0_28 = arith.constant 0 : index
      %40 = vector.load %arg7[%c0_27, %c0_28] : memref<1x512xbf16, #tpu.memory_space<vmem>>, vector<1x512xbf16>
      %41 = arith.extf %40 : vector<1x512xbf16> to vector<1x512xf32>
      %42 = vector.broadcast %41 : vector<1x512xf32> to vector<2x512xf32>
      %43 = arith.addf %39, %42 : vector<2x512xf32>
      %cst_29 = arith.constant 0.000000e+00 : f32
      %44 = vector.broadcast %cst_29 : f32 to vector<2x512xf32>
      %45 = arith.cmpf ogt, %43, %44 : vector<2x512xf32>
      %cst_30 = arith.constant 2.000000e-01 : f32
      %46 = vector.broadcast %cst_30 : f32 to vector<2x512xf32>
      %47 = arith.mulf %46, %43 : vector<2x512xf32>
      %48 = arith.select %45, %43, %47 : vector<2x512xi1>, vector<2x512xf32>
      %49 = arith.truncf %48 : vector<2x512xf32> to vector<2x512xbf16>
      %c0_31 = arith.constant 0 : index
      %c0_32 = arith.constant 0 : index
      %50 = vector.load %arg8[%c0_31, %c0_32] : memref<512x1024xbf16, #tpu.memory_space<vmem>>, vector<512x1024xbf16>
      %cst_33 = arith.constant dense<0.000000e+00> : vector<2x1024xf32>
      %51 = tpu.matmul %49, %50, %cst_33 {dimension_numbers = #tpu.dot_dimension_numbers<[1], [0], [0], [1], [0, 0, 1, 1], [], []>} : vector<2x512xbf16>, vector<512x1024xbf16>, vector<2x1024xf32> -> vector<2x1024xf32>
      %c0_34 = arith.constant 0 : index
      %c0_35 = arith.constant 0 : index
      %52 = vector.load %arg9[%c0_34, %c0_35] : memref<1x1024xbf16, #tpu.memory_space<vmem>>, vector<1x1024xbf16>
      %53 = arith.extf %52 : vector<1x1024xbf16> to vector<1x1024xf32>
      %54 = vector.broadcast %53 : vector<1x1024xf32> to vector<2x1024xf32>
      %55 = arith.addf %51, %54 : vector<2x1024xf32>
      %cst_36 = arith.constant 0.000000e+00 : f32
      %56 = vector.broadcast %cst_36 : f32 to vector<2x1024xf32>
      %57 = arith.cmpf ogt, %55, %56 : vector<2x1024xf32>
      %cst_37 = arith.constant 2.000000e-01 : f32
      %58 = vector.broadcast %cst_37 : f32 to vector<2x1024xf32>
      %59 = arith.mulf %58, %55 : vector<2x1024xf32>
      %60 = arith.select %57, %55, %59 : vector<2x1024xi1>, vector<2x1024xf32>
      %61 = arith.truncf %60 : vector<2x1024xf32> to vector<2x1024xbf16>
      %c0_38 = arith.constant 0 : index
      %c0_39 = arith.constant 0 : index
      %62 = vector.load %arg13[%c0_38, %c0_39] : memref<2x1024xbf16, #tpu.memory_space<vmem>>, vector<2x1024xbf16>
      tpu.vector_store %arg13[%c0_38, %c0_39], %61 {strides = array<i32>} : memref<2x1024xbf16, #tpu.memory_space<vmem>>, vector<2x1024xbf16>,
    } else {
    }
    %c0 = arith.constant 0 : index
    %c0_1 = arith.constant 0 : index
    %3 = vector.load %arg13[%c0, %c0_1] : memref<2x1024xbf16, #tpu.memory_space<vmem>>, vector<2x1024xbf16>
    %c0_2 = arith.constant 0 : index
    %c0_3 = arith.constant 0 : index
    %4 = vector.load %arg10[%c0_2, %c0_3] : memref<1024x256xbf16, #tpu.memory_space<vmem>>, vector<1024x256xbf16>
    %cst = arith.constant dense<0.000000e+00> : vector<2x256xf32>
    %5 = tpu.matmul %3, %4, %cst {dimension_numbers = #tpu.dot_dimension_numbers<[1], [0], [0], [1], [0, 0, 1, 1], [], []>} : vector<2x1024xbf16>, vector<1024x256xbf16>, vector<2x256xf32> -> vector<2x256xf32>
    %c0_4 = arith.constant 0 : index
    %c0_5 = arith.constant 0 : index
    %6 = vector.load %arg11[%c0_4, %c0_5] : memref<1x256xbf16, #tpu.memory_space<vmem>>, vector<1x256xbf16>
    %7 = arith.extf %6 : vector<1x256xbf16> to vector<1x256xf32>
    %8 = vector.broadcast %7 : vector<1x256xf32> to vector<2x256xf32>
    %9 = arith.addf %5, %8 : vector<2x256xf32>
    %10 = math.tanh %9 : vector<2x256xf32>
    %c0_6 = arith.constant 0 : index
    %c0_7 = arith.constant 0 : index
    %11 = vector.load %arg12[%c0_6, %c0_7] : memref<2x256xf32, #tpu.memory_space<vmem>>, vector<2x256xf32>
    tpu.vector_store %arg12[%c0_6, %c0_7], %10 {strides = array<i32>} : memref<2x256xf32, #tpu.memory_space<vmem>>, vector<2x256xf32>,
    return
  }
  func.func @transform_0(%arg0: i32) -> (i32, i32) {
    %c0_i32 = arith.constant 0 : i32
    %c0_i32_0 = arith.constant 0 : i32
    %c0_i32_1 = arith.constant 0 : i32
    return %c0_i32, %c0_i32_0 : i32, i32
  }
  func.func @transform_1(%arg0: i32) -> (i32, i32) {
    %c0_i32 = arith.constant 0 : i32
    %c0_i32_0 = arith.constant 0 : i32
    %c0_i32_1 = arith.constant 0 : i32
    return %c0_i32, %c0_i32_0 : i32, i32
  }
  func.func @transform_2(%arg0: i32) -> (i32, i32) {
    %c0_i32 = arith.constant 0 : i32
    %c0_i32_0 = arith.constant 0 : i32
    %c0_i32_1 = arith.constant 0 : i32
    return %c0_i32, %c0_i32_0 : i32, i32
  }
  func.func @transform_3(%arg0: i32) -> (i32, i32) {
    %c0_i32 = arith.constant 0 : i32
    %c0_i32_0 = arith.constant 0 : i32
    %c0_i32_1 = arith.constant 0 : i32
    return %c0_i32, %c0_i32_0 : i32, i32
  }
  func.func @transform_4(%arg0: i32) -> (i32, i32) {
    %c0_i32 = arith.constant 0 : i32
    %c0_i32_0 = arith.constant 0 : i32
    %c0_i32_1 = arith.constant 0 : i32
    return %c0_i32, %c0_i32_0 : i32, i32
  }
  func.func @transform_5(%arg0: i32) -> (i32, i32) {
    %c0_i32 = arith.constant 0 : i32
    %c0_i32_0 = arith.constant 0 : i32
    %c0_i32_1 = arith.constant 0 : i32
    return %c0_i32, %c0_i32_0 : i32, i32
  }
  func.func @transform_6(%arg0: i32) -> (i32, i32) {
    %c0_i32 = arith.constant 0 : i32
    %c0_i32_0 = arith.constant 0 : i32
    %c0_i32_1 = arith.constant 0 : i32
    return %c0_i32, %c0_i32_0 : i32, i32
  }
  func.func @transform_7(%arg0: i32) -> (i32, i32) {
    %c0_i32 = arith.constant 0 : i32
    %c0_i32_0 = arith.constant 0 : i32
    %c0_i32_1 = arith.constant 0 : i32
    return %c0_i32, %c0_i32_0 : i32, i32
  }
  func.func @transform_8(%arg0: i32) -> (i32, i32) {
    %c0_i32 = arith.constant 0 : i32
    %c0_i32_0 = arith.constant 0 : i32
    %c0_i32_1 = arith.constant 0 : i32
    return %c0_i32, %c0_i32_0 : i32, i32
  }
  func.func @transform_9(%arg0: i32) -> (i32, i32) {
    %c0_i32 = arith.constant 0 : i32
    %c0_i32_0 = arith.constant 0 : i32
    return %c0_i32, %arg0 : i32, i32
  }
  func.func @transform_10(%arg0: i32) -> (i32, i32) {
    %c0_i32 = arith.constant 0 : i32
    %c0_i32_0 = arith.constant 0 : i32
    return %c0_i32, %arg0 : i32, i32
  }
  func.func @transform_11(%arg0: i32) -> (i32, i32) {
    %c0_i32 = arith.constant 0 : i32
    %c0_i32_0 = arith.constant 0 : i32
    return %c0_i32, %arg0 : i32, i32
  }
}

</mosaic_0001>

<llo_original>
// kernel: generator_forward.1
$region0: #{generator_forward.1}
  #allocation0 [shape = 'u32[]', space=smem, size = 0x4, offset = 0x4, fixed_abs, tag = 'smem constant byte address 0x4 - core index']
  #allocation1 [shape = 'u32[144,128]{1,0:T(1,128)}', space=vmem, size = 0x12000, scoped, tag = 'internal scratch']
  #allocation2 [shape = 'bf16[2,1024]{1,0:T(2,128)(2,1)}', space=vmem, size = 0x1000, scoped, tag = 'scratch operand']
  %s0 = inlined_call_operand.hbm [shape: f32[2,32], index: 0, kind: input, shape index: {}]
  %s1 = inlined_call_operand.hbm [shape: bf16[32,128], index: 1, kind: input, shape index: {}]
  %s2 = inlined_call_operand.hbm [shape: bf16[1,128], index: 2, kind: input, shape index: {}]
  %s3 = inlined_call_operand.hbm [shape: bf16[128,256], index: 3, kind: input, shape index: {}]
  %s4 = inlined_call_operand.hbm [shape: bf16[1,256], index: 4, kind: input, shape index: {}]
  %s5 = inlined_call_operand.hbm [shape: bf16[256,512], index: 5, kind: input, shape index: {}]
  %s6 = inlined_call_operand.hbm [shape: bf16[1,512], index: 6, kind: input, shape index: {}]
  %s7 = inlined_call_operand.hbm [shape: bf16[512,1024], index: 7, kind: input, shape index: {}]
  %s8 = inlined_call_operand.hbm [shape: bf16[1,1024], index: 8, kind: input, shape index: {}]
  %s9 = inlined_call_operand.hbm [shape: bf16[1024,1024], index: 9, kind: input, shape index: {}]
  %s10 = inlined_call_operand.hbm [shape: bf16[1,1024], index: 10, kind: input, shape index: {}]
  %s11 = inlined_call_operand.vmem [shape: f32[2,1024], index: 11, kind: output, shape index: {}]
  %s12 = sld [smem:[#allocation0]]
  $region125: #{generator_forward.1} parent=0
    _
  %s14 = ssub.s32 1, %s12
  %s15 = scalar_select 0, %s14, %s12
  $region1: #{generator_forward.1} parent=0
    #allocation3 [shape = 'u8[1024]{0}', space=vmem, size = 0x400, scoped, tag = 'input window, operand 0, single buffered']
    #allocation4 [shape = 's32[2]{0}', space=sflag, size = 0x8, scoped, tag = 'scoped memory for generator_forward.1']
    #allocation5 [shape = 'u8[8192]{0}', space=vmem, size = 0x2000, scoped, tag = 'input window, operand 1, single buffered']
    #allocation6 [shape = 's32[1]{0}', space=sflag, size = 0x4, scoped, tag = 'scoped memory for generator_forward.1']
    #allocation7 [shape = 'u8[512]{0}', space=vmem, size = 0x400, scoped, tag = 'input window, operand 2, single buffered']
    #allocation8 [shape = 'u8[65536]{0}', space=vmem, size = 0x10000, scoped, tag = 'input window, operand 3, single buffered']
    #allocation9 [shape = 's32[1]{0}', space=sflag, size = 0x4, scoped, tag = 'scoped memory for generator_forward.1']
    #allocation10 [shape = 'u8[1024]{0}', space=vmem, size = 0x400, scoped, tag = 'input window, operand 4, single buffered']
    #allocation11 [shape = 'u8[262144]{0}', space=vmem, size = 0x40000, scoped, tag = 'input window, operand 5, single buffered']
    #allocation12 [shape = 's32[1]{0}', space=sflag, size = 0x4, scoped, tag = 'scoped memory for generator_forward.1']
    #allocation13 [shape = 'u8[2048]{0}', space=vmem, size = 0x800, scoped, tag = 'input window, operand 6, single buffered']
    #allocation14 [shape = 'u8[1048576]{0}', space=vmem, size = 0x100000, scoped, tag = 'input window, operand 7, single buffered']
    #allocation15 [shape = 's32[1]{0}', space=sflag, size = 0x4, scoped, tag = 'scoped memory for generator_forward.1']
    #allocation16 [shape = 'u8[4096]{0}', space=vmem, size = 0x1000, scoped, tag = 'input window, operand 8, single buffered']
    #allocation17 [shape = 'u8[1048576]{0}', space=vmem, size = 0x100000, scoped, tag = 'input window, operand 9']
    #allocation18 [shape = 's32[2]{0}', space=sflag, size = 0x8, scoped, tag = 'scoped memory for generator_forward.1']
    #allocation19 [shape = 'u8[2048]{0}', space=vmem, size = 0x800, scoped, tag = 'input window, operand 10']
    %16 = vsyncpa [#allocation4], 0
    %17 = vsyncpa [#allocation6], 0
    %18 = vsyncpa [#allocation9], 0
    %19 = vsyncpa [#allocation12], 0
    %20 = vsyncpa [#allocation15], 0
    %21 = vsyncpa [#allocation18], 0
    %s22 = scalar_lea.sflag [#allocation18], 1
    %23 = vsyncpa %s22, 0
    loop: start=0, step=1, limit=6
    $region2: #{generator_forward.1} parent=1 // loop_pre_header
      _
    $region3: #{generator_forward.1} parent=1 // loop_header
      %s25 = sphi 0, %s29
      %p26 = scmp.ge.s32.totalorder %s25, 6
      %s33 = sphi 0, %s33
      %s35 = sphi 0, %s33
      %s36 = sphi 0, %s35
      %s50 = sphi 0, %s36
      %s54 = sphi 0, %s54
      %s56 = sphi 0, %s54
      %s57 = sphi 0, %s56
      %s71 = sphi 0, %s57
      %s75 = sphi 0, %s75
      %s77 = sphi 0, %s75
      %s78 = sphi 0, %s77
      %s92 = sphi 0, %s78
      %s96 = sphi 0, %s96
      %s98 = sphi 0, %s96
      %s99 = sphi 0, %s98
      %s113 = sphi 0, %s99
      %s117 = sphi 0, %s117
      %s119 = sphi 0, %s117
      %s120 = sphi 0, %s119
      %s134 = sphi 0, %s120
      %s138 = sphi 0, %s138
      %s140 = sphi 0, %s138
      %s141 = sphi 0, %s140
      %s155 = sphi 0, %s141
      %s159 = sphi 0, %s159
      %s161 = sphi 0, %s159
      %s162 = sphi 0, %s161
      %s176 = sphi 0, %s162
      %s180 = sphi 0, %s180
      %s182 = sphi 0, %s180
      %s183 = sphi 0, %s182
      %s197 = sphi 0, %s183
      %s201 = sphi 0, %s201
      %s203 = sphi 0, %s201
      %s204 = sphi 0, %s203
      %s218 = sphi 0, %s204
      %s224 = sphi 0, %s226
      %s227 = sphi 0, %s224
      %s228 = sphi 0, %s227
      %s244 = sphi 0, %s228
      %s250 = sphi 0, %s252
      %s253 = sphi 0, %s250
      %s254 = sphi 0, %s253
      %s270 = sphi 0, %s254
      %s276 = sphi 0, %s278
      %s279 = sphi 0, %s276
      %s280 = sphi 0, %s279
      %s296 = sphi 0, %s280
    $region4: #{generator_forward.1} parent=1 // loop_header_branch
      %28 = sbr.rel (%p26) target = $region8
    $region5: #{generator_forward.1} parent=1 // loop_body
      %s30 = ssub.s32 %s25, 1
      %s31 = ssub.s32 %s25, 2
      %s32 = sadd.s32 %s25, 1
      %s34 = sadd.s32 %s33, 1
      %p37 = scmp.eq.s32.totalorder %s25, 3
      %p38 = scmp.ne.s32.totalorder %s33, %s35
      %p39 = scmp.eq.s32.totalorder %s25, 0
      %p40 = por %p38, %p39
      %p41 = scmp.ne.s32.totalorder %s33, %s35
      %p42 = scmp.eq.s32.totalorder %s30, 3
      %p43 = por %p41, %p42
      %p44 = scmp.ne.s32.totalorder %s35, %s36
      %p45 = scmp.eq.s32.totalorder %s30, 0
      %p46 = por %p44, %p45
      %p47 = scmp.ne.s32.totalorder %s35, %s36
      %p48 = scmp.eq.s32.totalorder %s31, 3
      %p49 = por %p47, %p48
      %p51 = scmp.ne.s32.totalorder %s36, %s50
      %p52 = scmp.eq.s32.totalorder %s31, 0
      %p53 = por %p51, %p52
      %s55 = sadd.s32 %s54, 1
      %p58 = scmp.eq.s32.totalorder %s25, 3
      %p59 = scmp.ne.s32.totalorder %s54, %s56
      %p60 = scmp.eq.s32.totalorder %s25, 0
      %p61 = por %p59, %p60
      %p62 = scmp.ne.s32.totalorder %s54, %s56
      %p63 = scmp.eq.s32.totalorder %s30, 3
      %p64 = por %p62, %p63
      %p65 = scmp.ne.s32.totalorder %s56, %s57
      %p66 = scmp.eq.s32.totalorder %s30, 0
      %p67 = por %p65, %p66
      %p68 = scmp.ne.s32.totalorder %s56, %s57
      %p69 = scmp.eq.s32.totalorder %s31, 3
      %p70 = por %p68, %p69
      %p72 = scmp.ne.s32.totalorder %s57, %s71
      %p73 = scmp.eq.s32.totalorder %s31, 0
      %p74 = por %p72, %p73
      %s76 = sadd.s32 %s75, 1
      %p79 = scmp.eq.s32.totalorder %s25, 3
      %p80 = scmp.ne.s32.totalorder %s75, %s77
      %p81 = scmp.eq.s32.totalorder %s25, 0
      %p82 = por %p80, %p81
      %p83 = scmp.ne.s32.totalorder %s75, %s77
      %p84 = scmp.eq.s32.totalorder %s30, 3
      %p85 = por %p83, %p84
      %p86 = scmp.ne.s32.totalorder %s77, %s78
      %p87 = scmp.eq.s32.totalorder %s30, 0
      %p88 = por %p86, %p87
      %p89 = scmp.ne.s32.totalorder %s77, %s78
      %p90 = scmp.eq.s32.totalorder %s31, 3
      %p91 = por %p89, %p90
      %p93 = scmp.ne.s32.totalorder %s78, %s92
      %p94 = scmp.eq.s32.totalorder %s31, 0
      %p95 = por %p93, %p94
      %s97 = sadd.s32 %s96, 1
      %p100 = scmp.eq.s32.totalorder %s25, 3
      %p101 = scmp.ne.s32.totalorder %s96, %s98
      %p102 = scmp.eq.s32.totalorder %s25, 0
      %p103 = por %p101, %p102
      %p104 = scmp.ne.s32.totalorder %s96, %s98
      %p105 = scmp.eq.s32.totalorder %s30, 3
      %p106 = por %p104, %p105
      %p107 = scmp.ne.s32.totalorder %s98, %s99
      %p108 = scmp.eq.s32.totalorder %s30, 0
      %p109 = por %p107, %p108
      %p110 = scmp.ne.s32.totalorder %s98, %s99
      %p111 = scmp.eq.s32.totalorder %s31, 3
      %p112 = por %p110, %p111
      %p114 = scmp.ne.s32.totalorder %s99, %s113
      %p115 = scmp.eq.s32.totalorder %s31, 0
      %p116 = por %p114, %p115
      %s118 = sadd.s32 %s117, 1
      %p121 = scmp.eq.s32.totalorder %s25, 3
      %p122 = scmp.ne.s32.totalorder %s117, %s119
      %p123 = scmp.eq.s32.totalorder %s25, 0
      %p124 = por %p122, %p123
      %p125 = scmp.ne.s32.totalorder %s117, %s119
      %p126 = scmp.eq.s32.totalorder %s30, 3
      %p127 = por %p125, %p126
      %p128 = scmp.ne.s32.totalorder %s119, %s120
      %p129 = scmp.eq.s32.totalorder %s30, 0
      %p130 = por %p128, %p129
      %p131 = scmp.ne.s32.totalorder %s119, %s120
      %p132 = scmp.eq.s32.totalorder %s31, 3
      %p133 = por %p131, %p132
      %p135 = scmp.ne.s32.totalorder %s120, %s134
      %p136 = scmp.eq.s32.totalorder %s31, 0
      %p137 = por %p135, %p136
      %s139 = sadd.s32 %s138, 1
      %p142 = scmp.eq.s32.totalorder %s25, 3
      %p143 = scmp.ne.s32.totalorder %s138, %s140
      %p144 = scmp.eq.s32.totalorder %s25, 0
      %p145 = por %p143, %p144
      %p146 = scmp.ne.s32.totalorder %s138, %s140
      %p147 = scmp.eq.s32.totalorder %s30, 3
      %p148 = por %p146, %p147
      %p149 = scmp.ne.s32.totalorder %s140, %s141
      %p150 = scmp.eq.s32.totalorder %s30, 0
      %p151 = por %p149, %p150
      %p152 = scmp.ne.s32.totalorder %s140, %s141
      %p153 = scmp.eq.s32.totalorder %s31, 3
      %p154 = por %p152, %p153
      %p156 = scmp.ne.s32.totalorder %s141, %s155
      %p157 = scmp.eq.s32.totalorder %s31, 0
      %p158 = por %p156, %p157
      %s160 = sadd.s32 %s159, 1
      %p163 = scmp.eq.s32.totalorder %s25, 3
      %p164 = scmp.ne.s32.totalorder %s159, %s161
      %p165 = scmp.eq.s32.totalorder %s25, 0
      %p166 = por %p164, %p165
      %p167 = scmp.ne.s32.totalorder %s159, %s161
      %p168 = scmp.eq.s32.totalorder %s30, 3
      %p169 = por %p167, %p168
      %p170 = scmp.ne.s32.totalorder %s161, %s162
      %p171 = scmp.eq.s32.totalorder %s30, 0
      %p172 = por %p170, %p171
      %p173 = scmp.ne.s32.totalorder %s161, %s162
      %p174 = scmp.eq.s32.totalorder %s31, 3
      %p175 = por %p173, %p174
      %p177 = scmp.ne.s32.totalorder %s162, %s176
      %p178 = scmp.eq.s32.totalorder %s31, 0
      %p179 = por %p177, %p178
      %s181 = sadd.s32 %s180, 1
      %p184 = scmp.eq.s32.totalorder %s25, 3
      %p185 = scmp.ne.s32.totalorder %s180, %s182
      %p186 = scmp.eq.s32.totalorder %s25, 0
      %p187 = por %p185, %p186
      %p188 = scmp.ne.s32.totalorder %s180, %s182
      %p189 = scmp.eq.s32.totalorder %s30, 3
      %p190 = por %p188, %p189
      %p191 = scmp.ne.s32.totalorder %s182, %s183
      %p192 = scmp.eq.s32.totalorder %s30, 0
      %p193 = por %p191, %p192
      %p194 = scmp.ne.s32.totalorder %s182, %s183
      %p195 = scmp.eq.s32.totalorder %s31, 3
      %p196 = por %p194, %p195
      %p198 = scmp.ne.s32.totalorder %s183, %s197
      %p199 = scmp.eq.s32.totalorder %s31, 0
      %p200 = por %p198, %p199
      %s202 = sadd.s32 %s201, 1
      %p205 = scmp.eq.s32.totalorder %s25, 3
      %p206 = scmp.ne.s32.totalorder %s201, %s203
      %p207 = scmp.eq.s32.totalorder %s25, 0
      %p208 = por %p206, %p207
      %p209 = scmp.ne.s32.totalorder %s201, %s203
      %p210 = scmp.eq.s32.totalorder %s30, 3
      %p211 = por %p209, %p210
      %p212 = scmp.ne.s32.totalorder %s203, %s204
      %p213 = scmp.eq.s32.totalorder %s30, 0
      %p214 = por %p212, %p213
      %p215 = scmp.ne.s32.totalorder %s203, %s204
      %p216 = scmp.eq.s32.totalorder %s31, 3
      %p217 = por %p215, %p216
      %p219 = scmp.ne.s32.totalorder %s204, %s218
      %p220 = scmp.eq.s32.totalorder %s31, 0
      %p221 = por %p219, %p220
      %s222 = ssub.s32 %s25, %s32
      %p223 = scmp.eq.s32.totalorder %s222, 0
      %s225 = sadd.s32 %s224, 1
      %s226 = scalar_select %p223, %s224, %s225
      %p229 = pneg %p223
      %p230 = scmp.eq.s32.totalorder %s25, 3
      %p231 = por %p229, %p230
      %p232 = scmp.ne.s32.totalorder %s224, %s227
      %p233 = scmp.eq.s32.totalorder %s25, 0
      %p234 = por %p232, %p233
      %p235 = scmp.ne.s32.totalorder %s224, %s227
      %p236 = scmp.eq.s32.totalorder %s30, 3
      %p237 = por %p235, %p236
      %p238 = scmp.ne.s32.totalorder %s227, %s228
      %p239 = scmp.eq.s32.totalorder %s30, 0
      %p240 = por %p238, %p239
      %p241 = scmp.ne.s32.totalorder %s227, %s228
      %p242 = scmp.eq.s32.totalorder %s31, 3
      %p243 = por %p241, %p242
      %p245 = scmp.ne.s32.totalorder %s228, %s244
      %p246 = scmp.eq.s32.totalorder %s31, 0
      %p247 = por %p245, %p246
      %s248 = ssub.s32 %s25, %s32
      %p249 = scmp.eq.s32.totalorder %s248, 0
      %s251 = sadd.s32 %s250, 1
      %s252 = scalar_select %p249, %s250, %s251
      %p255 = pneg %p249
      %p256 = scmp.eq.s32.totalorder %s25, 3
      %p257 = por %p255, %p256
      %p258 = scmp.ne.s32.totalorder %s250, %s253
      %p259 = scmp.eq.s32.totalorder %s25, 0
      %p260 = por %p258, %p259
      %p261 = scmp.ne.s32.totalorder %s250, %s253
      %p262 = scmp.eq.s32.totalorder %s30, 3
      %p263 = por %p261, %p262
      %p264 = scmp.ne.s32.totalorder %s253, %s254
      %p265 = scmp.eq.s32.totalorder %s30, 0
      %p266 = por %p264, %p265
      %p267 = scmp.ne.s32.totalorder %s253, %s254
      %p268 = scmp.eq.s32.totalorder %s31, 3
      %p269 = por %p267, %p268
      %p271 = scmp.ne.s32.totalorder %s254, %s270
      %p272 = scmp.eq.s32.totalorder %s31, 0
      %p273 = por %p271, %p272
      %s274 = ssub.s32 %s25, %s32
      %p275 = scmp.eq.s32.totalorder %s274, 0
      %s277 = sadd.s32 %s276, 1
      %s278 = scalar_select %p275, %s276, %s277
      %p281 = pneg %p275
      %p282 = scmp.eq.s32.totalorder %s25, 3
      %p283 = por %p281, %p282
      %p284 = scmp.ne.s32.totalorder %s276, %s279
      %p285 = scmp.eq.s32.totalorder %s25, 0
      %p286 = por %p284, %p285
      %p287 = scmp.ne.s32.totalorder %s276, %s279
      %p288 = scmp.eq.s32.totalorder %s30, 3
      %p289 = por %p287, %p288
      %p290 = scmp.ne.s32.totalorder %s279, %s280
      %p291 = scmp.eq.s32.totalorder %s30, 0
      %p292 = por %p290, %p291
      %p293 = scmp.ne.s32.totalorder %s279, %s280
      %p294 = scmp.eq.s32.totalorder %s31, 3
      %p295 = por %p293, %p294
      %p297 = scmp.ne.s32.totalorder %s280, %s296
      %p298 = scmp.eq.s32.totalorder %s31, 0
      %p299 = por %p297, %p298
      %p300 = scmp.le.s32.totalorder 1, %s25
      %p301 = scmp.lt.s32.totalorder %s25, 5
      %p302 = pnand %p300, %p301
      %p303 = pneg %p302
      // Predicated region
      $region9: #{generator_forward.1} parent=5 // pred_check
        _
      $region10: #{generator_forward.1} parent=5 // pred_check_branch
        %305 = sbr.rel (%p302) target = $region12
      $region11: #{generator_forward.1} parent=5 // pred_region
        %s306 = ssub.s32 %s25, 1
        // Predicated region
        $region13: #{generator_forward.1} parent=11 // pred_check
          %p307 = pneg %p46
        $region14: #{generator_forward.1} parent=11 // pred_check_branch
          %309 = sbr.rel (%p307) target = $region16
        $region15: #{generator_forward.1} parent=11 // pred_region
          %s311 = ssub.s32 32, 32
          %312 = vsyncadd [#allocation4], %s311
          %s314 = sshll.u32 [#allocation3], 4
          %s315 = int_to_ptr.vmem [resolvable:$true] %s314
          %317 = dma.hbm_to_vmem [thread:$0]  %s0, 32, %s315, [#allocation4]
        $region16: #{generator_forward.1} parent=11 // pred_fallthru
          _
        // Predicated region
        $region17: #{generator_forward.1} parent=11 // pred_check
          %p318 = pneg %p67
        $region18: #{generator_forward.1} parent=11 // pred_check_branch
          %320 = sbr.rel (%p318) target = $region20
        $region19: #{generator_forward.1} parent=11 // pred_region
          %s322 = ssub.s32 256, 256
          %323 = vsyncadd [#allocation6], %s322
          %s324 = sshll.u32 [#allocation5], 4
          %s325 = int_to_ptr.vmem [resolvable:$true] %s324
          %330 = dma.hbm_to_vmem [thread:$0]  %s1, 256, %s325, [#allocation6], 64, 64, 4
        $region20: #{generator_forward.1} parent=11 // pred_fallthru
          _
        // Predicated region
        $region21: #{generator_forward.1} parent=11 // pred_check
          %p331 = pneg %p88
        $region22: #{generator_forward.1} parent=11 // pred_check_branch
          %333 = sbr.rel (%p331) target = $region24
        $region23: #{generator_forward.1} parent=11 // pred_region
          %s335 = ssub.s32 16, 16
          %336 = vsyncadd [#allocation6], %s335
          %s338 = sshll.u32 [#allocation7], 4
          %s339 = int_to_ptr.vmem [resolvable:$true] %s338
          %341 = dma.hbm_to_vmem [thread:$0]  %s2, 16, %s339, [#allocation6]
        $region24: #{generator_forward.1} parent=11 // pred_fallthru
          _
        // Predicated region
        $region25: #{generator_forward.1} parent=11 // pred_check
          %p342 = pneg %p109
        $region26: #{generator_forward.1} parent=11 // pred_check_branch
          %344 = sbr.rel (%p342) target = $region28
        $region27: #{generator_forward.1} parent=11 // pred_region
          %s346 = ssub.s32 2048, 2048
          %347 = vsyncadd [#allocation9], %s346
          %s348 = sshll.u32 [#allocation8], 4
          %s349 = int_to_ptr.vmem [resolvable:$true] %s348
          %354 = dma.hbm_to_vmem [thread:$0]  %s3, 2048, %s349, [#allocation9], 128, 128, 8
        $region28: #{generator_forward.1} parent=11 // pred_fallthru
          _
        // Predicated region
        $region29: #{generator_forward.1} parent=11 // pred_check
          %p355 = pneg %p130
        $region30: #{generator_forward.1} parent=11 // pred_check_branch
          %357 = sbr.rel (%p355) target = $region32
        $region31: #{generator_forward.1} parent=11 // pred_region
          %s359 = ssub.s32 32, 32
          %360 = vsyncadd [#allocation9], %s359
          %s362 = sshll.u32 [#allocation10], 4
          %s363 = int_to_ptr.vmem [resolvable:$true] %s362
          %365 = dma.hbm_to_vmem [thread:$0]  %s4, 32, %s363, [#allocation9]
        $region32: #{generator_forward.1} parent=11 // pred_fallthru
          _
        // Predicated region
        $region33: #{generator_forward.1} parent=11 // pred_check
          %p366 = pneg %p151
        $region34: #{generator_forward.1} parent=11 // pred_check_branch
          %368 = sbr.rel (%p366) target = $region36
        $region35: #{generator_forward.1} parent=11 // pred_region
          %s370 = ssub.s32 8192, 8192
          %371 = vsyncadd [#allocation12], %s370
          %s372 = sshll.u32 [#allocation11], 4
          %s373 = int_to_ptr.vmem [resolvable:$true] %s372
          %378 = dma.hbm_to_vmem [thread:$0]  %s5, 8192, %s373, [#allocation12], 256, 256, 16
        $region36: #{generator_forward.1} parent=11 // pred_fallthru
          _
        // Predicated region
        $region37: #{generator_forward.1} parent=11 // pred_check
          %p379 = pneg %p172
        $region38: #{generator_forward.1} parent=11 // pred_check_branch
          %381 = sbr.rel (%p379) target = $region40
        $region39: #{generator_forward.1} parent=11 // pred_region
          %s383 = ssub.s32 64, 64
          %384 = vsyncadd [#allocation12], %s383
          %s386 = sshll.u32 [#allocation13], 4
          %s387 = int_to_ptr.vmem [resolvable:$true] %s386
          %389 = dma.hbm_to_vmem [thread:$0]  %s6, 64, %s387, [#allocation12]
        $region40: #{generator_forward.1} parent=11 // pred_fallthru
          _
        // Predicated region
        $region41: #{generator_forward.1} parent=11 // pred_check
          %p390 = pneg %p193
        $region42: #{generator_forward.1} parent=11 // pred_check_branch
          %392 = sbr.rel (%p390) target = $region44
        $region43: #{generator_forward.1} parent=11 // pred_region
          %s394 = ssub.s32 32768, 32768
          %395 = vsyncadd [#allocation15], %s394
          %s396 = sshll.u32 [#allocation14], 4
          %s397 = int_to_ptr.vmem [resolvable:$true] %s396
          %402 = dma.hbm_to_vmem [thread:$0]  %s7, 32768, %s397, [#allocation15], 512, 512, 32
        $region44: #{generator_forward.1} parent=11 // pred_fallthru
          _
        // Predicated region
        $region45: #{generator_forward.1} parent=11 // pred_check
          %p403 = pneg %p214
        $region46: #{generator_forward.1} parent=11 // pred_check_branch
          %405 = sbr.rel (%p403) target = $region48
        $region47: #{generator_forward.1} parent=11 // pred_region
          %s407 = ssub.s32 128, 128
          %408 = vsyncadd [#allocation15], %s407
          %s410 = sshll.u32 [#allocation16], 4
          %s411 = int_to_ptr.vmem [resolvable:$true] %s410
          %413 = dma.hbm_to_vmem [thread:$0]  %s8, 128, %s411, [#allocation15]
        $region48: #{generator_forward.1} parent=11 // pred_fallthru
          _
      $region12: #{generator_forward.1} parent=5 // pred_fallthru
        _
      %p414 = scmp.lt.s32.totalorder %s25, 4
      // Predicated region
      $region49: #{generator_forward.1} parent=5 // pred_check
        %p415 = pneg %p414
      $region50: #{generator_forward.1} parent=5 // pred_check_branch
        %417 = sbr.rel (%p415) target = $region52
      $region51: #{generator_forward.1} parent=5 // pred_region
        // Predicated region
        $region53: #{generator_forward.1} parent=51 // pred_check
          %p418 = pneg %p234
        $region54: #{generator_forward.1} parent=51 // pred_check_branch
          %420 = sbr.rel (%p418) target = $region56
        $region55: #{generator_forward.1} parent=51 // pred_region
          %s421 = sand.u32 %s25, 1
          %s422 = scalar_lea.sflag [#allocation18], %s421
          %s423 = sand.u32 %s224, 1
          %s424 = smul.addr %s423, 1024
          %s425 = scalar_lea.vmem [#allocation17], %s424
          %s426 = smul.u32 2, %s25
          %s428 = ssub.s32 16384, 16384
          %429 = vsyncadd %s422, %s428
          %s430 = smul.addr %s426, 64
          %s431 = scalar_lea.hbm %s9, %s430
          %s432 = sshll.u32 %s425, 4
          %s433 = int_to_ptr.vmem [resolvable:$true] %s432
          %438 = dma.hbm_to_vmem [thread:$0]  %s431, 16384, %s433, %s422, 512, 128, 8
        $region56: #{generator_forward.1} parent=51 // pred_fallthru
          _
        // Predicated region
        $region57: #{generator_forward.1} parent=51 // pred_check
          %p439 = pneg %p260
        $region58: #{generator_forward.1} parent=51 // pred_check_branch
          %441 = sbr.rel (%p439) target = $region60
        $region59: #{generator_forward.1} parent=51 // pred_region
          %s442 = sand.u32 %s25, 1
          %s443 = scalar_lea.sflag [#allocation18], %s442
          %s444 = sand.u32 %s250, 1
          %s445 = smul.addr %s444, 2
          %s446 = scalar_lea.vmem [#allocation19], %s445
          %s447 = smul.u32 2, %s25
          %s449 = ssub.s32 32, 32
          %450 = vsyncadd %s443, %s449
          %s451 = smul.addr %s447, 16
          %s452 = scalar_lea.hbm %s10, %s451
          %s454 = sshll.u32 %s446, 4
          %s455 = int_to_ptr.vmem [resolvable:$true] %s454
          %457 = dma.hbm_to_vmem [thread:$0]  %s452, 32, %s455, %s443
        $region60: #{generator_forward.1} parent=51 // pred_fallthru
          _
      $region52: #{generator_forward.1} parent=5 // pred_fallthru
        _
      %p458 = scmp.le.s32.totalorder 1, %s25
      %p459 = scmp.lt.s32.totalorder %s25, 5
      %p460 = pnand %p458, %p459
      %p461 = pneg %p460
      // Predicated region
      $region61: #{generator_forward.1} parent=5 // pred_check
        _
      $region62: #{generator_forward.1} parent=5 // pred_check_branch
        %463 = sbr.rel (%p460) target = $region64
      $region63: #{generator_forward.1} parent=5 // pred_region
        %s464 = ssub.s32 %s25, 1
        // Predicated region
        $region65: #{generator_forward.1} parent=63 // pred_check
          %p465 = pneg %p46
        $region66: #{generator_forward.1} parent=63 // pred_check_branch
          %467 = sbr.rel (%p465) target = $region68
        $region67: #{generator_forward.1} parent=63 // pred_region
          %468 = dma.done [#allocation4], 32
        $region68: #{generator_forward.1} parent=63 // pred_fallthru
          _
        // Predicated region
        $region69: #{generator_forward.1} parent=63 // pred_check
          %p469 = pneg %p67
        $region70: #{generator_forward.1} parent=63 // pred_check_branch
          %471 = sbr.rel (%p469) target = $region72
        $region71: #{generator_forward.1} parent=63 // pred_region
          %472 = dma.done [#allocation6], 256
        $region72: #{generator_forward.1} parent=63 // pred_fallthru
          _
        // Predicated region
        $region73: #{generator_forward.1} parent=63 // pred_check
          %p473 = pneg %p88
        $region74: #{generator_forward.1} parent=63 // pred_check_branch
          %475 = sbr.rel (%p473) target = $region76
        $region75: #{generator_forward.1} parent=63 // pred_region
          %476 = dma.done [#allocation6], 16
        $region76: #{generator_forward.1} parent=63 // pred_fallthru
          _
        // Predicated region
        $region77: #{generator_forward.1} parent=63 // pred_check
          %p477 = pneg %p109
        $region78: #{generator_forward.1} parent=63 // pred_check_branch
          %479 = sbr.rel (%p477) target = $region80
        $region79: #{generator_forward.1} parent=63 // pred_region
          %480 = dma.done [#allocation9], 2048
        $region80: #{generator_forward.1} parent=63 // pred_fallthru
          _
        // Predicated region
        $region81: #{generator_forward.1} parent=63 // pred_check
          %p481 = pneg %p130
        $region82: #{generator_forward.1} parent=63 // pred_check_branch
          %483 = sbr.rel (%p481) target = $region84
        $region83: #{generator_forward.1} parent=63 // pred_region
          %484 = dma.done [#allocation9], 32
        $region84: #{generator_forward.1} parent=63 // pred_fallthru
          _
        // Predicated region
        $region85: #{generator_forward.1} parent=63 // pred_check
          %p485 = pneg %p151
        $region86: #{generator_forward.1} parent=63 // pred_check_branch
          %487 = sbr.rel (%p485) target = $region88
        $region87: #{generator_forward.1} parent=63 // pred_region
          %488 = dma.done [#allocation12], 8192
        $region88: #{generator_forward.1} parent=63 // pred_fallthru
          _
        // Predicated region
        $region89: #{generator_forward.1} parent=63 // pred_check
          %p489 = pneg %p172
        $region90: #{generator_forward.1} parent=63 // pred_check_branch
          %491 = sbr.rel (%p489) target = $region92
        $region91: #{generator_forward.1} parent=63 // pred_region
          %492 = dma.done [#allocation12], 64
        $region92: #{generator_forward.1} parent=63 // pred_fallthru
          _
        // Predicated region
        $region93: #{generator_forward.1} parent=63 // pred_check
          %p493 = pneg %p193
        $region94: #{generator_forward.1} parent=63 // pred_check_branch
          %495 = sbr.rel (%p493) target = $region96
        $region95: #{generator_forward.1} parent=63 // pred_region
          %496 = dma.done [#allocation15], 32768
        $region96: #{generator_forward.1} parent=63 // pred_fallthru
          _
        // Predicated region
        $region97: #{generator_forward.1} parent=63 // pred_check
          %p497 = pneg %p214
        $region98: #{generator_forward.1} parent=63 // pred_check_branch
          %499 = sbr.rel (%p497) target = $region100
        $region99: #{generator_forward.1} parent=63 // pred_region
          %500 = dma.done [#allocation15], 128
        $region100: #{generator_forward.1} parent=63 // pred_fallthru
          _
        %s501 = sand.u32 %s30, 1
        %s502 = scalar_lea.sflag [#allocation18], %s501
        %s503 = sand.u32 %s227, 1
        %s504 = smul.addr %s503, 1024
        %s505 = scalar_lea.vmem [#allocation17], %s504
        // Predicated region
        $region101: #{generator_forward.1} parent=63 // pred_check
          %p506 = pneg %p240
        $region102: #{generator_forward.1} parent=63 // pred_check_branch
          %508 = sbr.rel (%p506) target = $region104
        $region103: #{generator_forward.1} parent=63 // pred_region
          %509 = dma.done %s502, 16384
        $region104: #{generator_forward.1} parent=63 // pred_fallthru
          _
        %s510 = sand.u32 %s30, 1
        %s511 = scalar_lea.sflag [#allocation18], %s510
        %s512 = sand.u32 %s253, 1
        %s513 = smul.addr %s512, 2
        %s514 = scalar_lea.vmem [#allocation19], %s513
        // Predicated region
        $region105: #{generator_forward.1} parent=63 // pred_check
          %p515 = pneg %p266
        $region106: #{generator_forward.1} parent=63 // pred_check_branch
          %517 = sbr.rel (%p515) target = $region108
        $region107: #{generator_forward.1} parent=63 // pred_region
          %518 = dma.done %s511, 32
        $region108: #{generator_forward.1} parent=63 // pred_fallthru
          _
        %p519 = pneg %p46
        %p520 = pneg %p43
        %p521 = pneg %p67
        %p522 = pneg %p64
        %p523 = pneg %p88
        %p524 = pneg %p85
        %p525 = pneg %p109
        %p526 = pneg %p106
        %p527 = pneg %p130
        %p528 = pneg %p127
        %p529 = pneg %p151
        %p530 = pneg %p148
        %p531 = pneg %p172
        %p532 = pneg %p169
        %p533 = pneg %p193
        %p534 = pneg %p190
        %p535 = pneg %p214
        %p536 = pneg %p211
        %s537 = sand.u32 %s30, 1
        %s538 = scalar_lea.sflag [#allocation18], %s537
        %s539 = sand.u32 %s227, 1
        %s540 = smul.addr %s539, 1024
        %s541 = scalar_lea.vmem [#allocation17], %s540
        %p542 = pneg %p240
        %p543 = pneg %p237
        %s544 = sand.u32 %s30, 1
        %s545 = scalar_lea.sflag [#allocation18], %s544
        %s546 = sand.u32 %s253, 1
        %s547 = smul.addr %s546, 2
        %s548 = scalar_lea.vmem [#allocation19], %s547
        %p549 = pneg %p266
        %p550 = pneg %p263
        %p551 = pneg %p292
        %p552 = pneg %p289
        %s553 = smul.u32 2, %s30
        %p554 = scmp.lt.s32.totalorder %s553, 7
        %s555 = scalar_select %p554, %s553, 7
        %s556 = smul.addr %s555, 2
        %s557 = scalar_lea.vmem %s11, %s556
        %s558 = smul.u32 2, %s30
        %s559 = smul.u32 2, %s30
        %s560 = smul.u32 2, %s30
        %p561 = scmp.lt.s32.totalorder %s560, 7
        %s562 = scalar_select %p561, %s560, 7
        %s563 = smul.addr %s562, 2
        %s564 = scalar_lea.vmem %s11, %s563
        %s565 = smul.u32 2, %s30
        %p567 = scmp.eq.s32.totalorder %s30, 0
        // Predicated region
        $region109: #{generator_forward.1} parent=63 // pred_check
          %p568 = pneg %p567
        $region110: #{generator_forward.1} parent=63 // pred_check_branch
          %570 = sbr.rel (%p568) target = $region112
        $region111: #{generator_forward.1} parent=63 // pred_region
          %v571 = vld [vmem:[#allocation3] sm:$0x3]
          %v572 = vpack.c.bf16 %v571, %v571
          %v573 = vld [vmem:[#allocation5] sm:$0xf]
          %v574 = vld [vmem:[#allocation5 + $0x4] sm:$0xf]
          %v575 = vld [vmem:[#allocation5 + $0x8] sm:$0xf]
          %v576 = vld [vmem:[#allocation5 + $0xc] sm:$0xf]
          %v577 = vld [vmem:[#allocation7] sm:$0x1]
          %v578 = vunpack.c.l.bf16 %v577
          %v579 = vlaneseq
          %v580 = vshrl.u32 %v579, 7
          %v581 = vsub.s32 0, %v580
          %v582 = vrot.slane %v578, %v581
          %v587 = vunpack.c.l.b16 %v573
          %v588 = vunpack.c.l.b16 %v574
          %v589 = vunpack.c.l.b16 %v575
          %v590 = vunpack.c.l.b16 %v576
          %v591 = vpack.c.b16 %v588, %v587
          %v592 = vpack.c.b16 %v590, %v589
          %vm595 = vcmask 261120
          %v597 = vsel %vm595, %v572, 0
          %599 = vmatprep.subr.bf16.mxu0 0
          %600 = vmatpush1.bf16.msra.mxu0 %v591
          %601 = vmatprep.subr.bf16.mxu0 0
          %602 = vmatpush1.bf16.msra.mxu0 %v592
          %603 = vmatprep.subr.bf16.mxu0 0
          %604 = vmatpush1.bf16.msra.mxu0 0
          %605 = vmatprep.subr.bf16.mxu0 0
          %606 = vmatpush1.bf16.msra.mxu0 0
          %607 = vmatprep.subr.bf16.mxu0 0
          %608 = vmatpush1.bf16.msra.mxu0 0
          %609 = vmatprep.subr.bf16.mxu0 0
          %610 = vmatpush1.bf16.msra.mxu0 0
          %611 = vmatprep.subr.bf16.mxu0 0
          %612 = vmatpush1.bf16.msra.mxu0 0
          %613 = vmatprep.subr.bf16.mxu0 0
          %614 = vmatpush1.bf16.msra.mxu0 0
          %615 = vmatprep.subr.bf16.mxu0 0
          %616 = vmatpush1.bf16.msra.mxu0 0
          %617 = vmatprep.subr.bf16.mxu0 0
          %618 = vmatpush1.bf16.msra.mxu0 0
          %619 = vmatprep.subr.bf16.mxu0 0
          %620 = vmatpush1.bf16.msra.mxu0 0
          %621 = vmatprep.subr.bf16.mxu0 0
          %622 = vmatpush1.bf16.msra.mxu0 0
          %623 = vmatprep.subr.bf16.mxu0 0
          %624 = vmatpush1.bf16.msra.mxu0 0
          %625 = vmatprep.subr.bf16.mxu0 0
          %626 = vmatpush1.bf16.msra.mxu0 0
          %627 = vmatprep.subr.bf16.mxu0 0
          %628 = vmatpush1.bf16.msra.mxu0 0
          %629 = vmatprep.subr.bf16.mxu0 0
          %630 = vmatpush1.bf16.msra.mxu0 0
          %631 = vmatprep.mubr.bf16.mxu0 0
          %632 = vmatmul.mubr.bf16.gmra.mrb[0].mxu0 %v597
          %v633 = vpop.f32.mrb[0].mxu0
          %v634 = vadd.f32 %v582, %v633
          %v635 = vpop.f32.mrb[0].mxu0
          %v636 = vpop.f32.mrb[0].mxu0
          %v637 = vpop.f32.mrb[0].mxu0
          %638 = vdwg.mxu0
          %vm639 = vcmp.gt.f32.partialorder %v634, 0.0
          %v640 = vmul.f32 %v634, 0.2
          %v641 = vsel %vm639, %v634, %v640
          %v642 = vpack.c.bf16 %v641, %v641
          %v643 = vld [vmem:[#allocation8] sm:$0xff]
          %v644 = vld [vmem:[#allocation8 + $0x8] sm:$0xff]
          %v645 = vld [vmem:[#allocation8 + $0x10] sm:$0xff]
          %v646 = vld [vmem:[#allocation8 + $0x18] sm:$0xff]
          %v647 = vld [vmem:[#allocation8 + $0x20] sm:$0xff]
          %v648 = vld [vmem:[#allocation8 + $0x28] sm:$0xff]
          %v649 = vld [vmem:[#allocation8 + $0x30] sm:$0xff]
          %v650 = vld [vmem:[#allocation8 + $0x38] sm:$0xff]
          %v651 = vld [vmem:[#allocation8 + $0x40] sm:$0xff]
          %v652 = vld [vmem:[#allocation8 + $0x48] sm:$0xff]
          %v653 = vld [vmem:[#allocation8 + $0x50] sm:$0xff]
          %v654 = vld [vmem:[#allocation8 + $0x58] sm:$0xff]
          %v655 = vld [vmem:[#allocation8 + $0x60] sm:$0xff]
          %v656 = vld [vmem:[#allocation8 + $0x68] sm:$0xff]
          %v657 = vld [vmem:[#allocation8 + $0x70] sm:$0xff]
          %v658 = vld [vmem:[#allocation8 + $0x78] sm:$0xff]
          %v659 = vld [vmem:[#allocation10] sm:$0x3]
          %v660 = vunpack.c.l.bf16 %v659
          %v662 = vlaneseq
          %v663 = vshrl.u32 %v662, 7
          %v664 = vsub.s32 0, %v663
          %v665 = vrot.slane %v660, %v664
          %v666 = vlaneseq
          %v667 = vshrl.u32 %v666, 7
          %v668 = vsub.s32 2, %v667
          %v669 = vrot.slane %v660, %v668
          %v672 = vlaneseq
          %v673 = vshrl.u32 %v672, 7
          %v674 = vsub.s32 0, %v673
          %v675 = vrot.slane %v665, %v674
          %v676 = vlaneseq
          %v677 = vshrl.u32 %v676, 7
          %v678 = vsub.s32 0, %v677
          %v679 = vrot.slane %v669, %v678
          %v696 = vunpack.c.l.b16 %v643
          %v697 = vunpack.c.h.b16 %v643
          %v698 = vunpack.c.l.b16 %v644
          %v699 = vunpack.c.h.b16 %v644
          %v700 = vunpack.c.l.b16 %v645
          %v701 = vunpack.c.h.b16 %v645
          %v702 = vunpack.c.l.b16 %v646
          %v703 = vunpack.c.h.b16 %v646
          %v704 = vunpack.c.l.b16 %v647
          %v705 = vunpack.c.h.b16 %v647
          %v706 = vunpack.c.l.b16 %v648
          %v707 = vunpack.c.h.b16 %v648
          %v708 = vunpack.c.l.b16 %v649
          %v709 = vunpack.c.h.b16 %v649
          %v710 = vunpack.c.l.b16 %v650
          %v711 = vunpack.c.h.b16 %v650
          %v712 = vunpack.c.l.b16 %v651
          %v713 = vunpack.c.h.b16 %v651
          %v714 = vunpack.c.l.b16 %v652
          %v715 = vunpack.c.h.b16 %v652
          %v716 = vunpack.c.l.b16 %v653
          %v717 = vunpack.c.h.b16 %v653
          %v718 = vunpack.c.l.b16 %v654
          %v719 = vunpack.c.h.b16 %v654
          %v720 = vunpack.c.l.b16 %v655
          %v721 = vunpack.c.h.b16 %v655
          %v722 = vunpack.c.l.b16 %v656
          %v723 = vunpack.c.h.b16 %v656
          %v724 = vunpack.c.l.b16 %v657
          %v725 = vunpack.c.h.b16 %v657
          %v726 = vunpack.c.l.b16 %v658
          %v727 = vunpack.c.h.b16 %v658
          %v728 = vpack.c.b16 %v698, %v696
          %v729 = vpack.c.b16 %v699, %v697
          %v730 = vpack.c.b16 %v702, %v700
          %v731 = vpack.c.b16 %v703, %v701
          %v732 = vpack.c.b16 %v706, %v704
          %v733 = vpack.c.b16 %v707, %v705
          %v734 = vpack.c.b16 %v710, %v708
          %v735 = vpack.c.b16 %v711, %v709
          %v736 = vpack.c.b16 %v714, %v712
          %v737 = vpack.c.b16 %v715, %v713
          %v738 = vpack.c.b16 %v718, %v716
          %v739 = vpack.c.b16 %v719, %v717
          %v740 = vpack.c.b16 %v722, %v720
          %v741 = vpack.c.b16 %v723, %v721
          %v742 = vpack.c.b16 %v726, %v724
          %v743 = vpack.c.b16 %v727, %v725
          %760 = vmatprep.subr.bf16.mxu0 %v729
          %761 = vmatpush1.bf16.msra.mxu0 %v728
          %762 = vmatprep.subr.bf16.mxu0 %v731
          %763 = vmatpush1.bf16.msra.mxu0 %v730
          %764 = vmatprep.subr.bf16.mxu0 %v733
          %765 = vmatpush1.bf16.msra.mxu0 %v732
          %766 = vmatprep.subr.bf16.mxu0 %v735
          %767 = vmatpush1.bf16.msra.mxu0 %v734
          %768 = vmatprep.subr.bf16.mxu0 %v737
          %769 = vmatpush1.bf16.msra.mxu0 %v736
          %770 = vmatprep.subr.bf16.mxu0 %v739
          %771 = vmatpush1.bf16.msra.mxu0 %v738
          %772 = vmatprep.subr.bf16.mxu0 %v741
          %773 = vmatpush1.bf16.msra.mxu0 %v740
          %774 = vmatprep.subr.bf16.mxu0 %v743
          %775 = vmatpush1.bf16.msra.mxu0 %v742
          %776 = vmatprep.subr.bf16.mxu0 0
          %777 = vmatpush1.bf16.msra.mxu0 0
          %778 = vmatprep.subr.bf16.mxu0 0
          %779 = vmatpush1.bf16.msra.mxu0 0
          %780 = vmatprep.subr.bf16.mxu0 0
          %781 = vmatpush1.bf16.msra.mxu0 0
          %782 = vmatprep.subr.bf16.mxu0 0
          %783 = vmatpush1.bf16.msra.mxu0 0
          %784 = vmatprep.subr.bf16.mxu0 0
          %785 = vmatpush1.bf16.msra.mxu0 0
          %786 = vmatprep.subr.bf16.mxu0 0
          %787 = vmatpush1.bf16.msra.mxu0 0
          %788 = vmatprep.subr.bf16.mxu0 0
          %789 = vmatpush1.bf16.msra.mxu0 0
          %790 = vmatprep.subr.bf16.mxu0 0
          %791 = vmatpush1.bf16.msra.mxu0 0
          %792 = vmatprep.mubr.bf16.mxu0 0
          %793 = vmatmul.mubr.bf16.gmra.mrb[0].mxu0 %v642
          %v794 = vpop.f32.mrb[0].mxu0
          %v795 = vadd.f32 %v675, %v794
          %v796 = vpop.f32.mrb[0].mxu0
          %v797 = vadd.f32 %v679, %v796
          %v798 = vpop.f32.mrb[0].mxu0
          %v799 = vpop.f32.mrb[0].mxu0
          %800 = vdwg.mxu0
          %vm801 = vcmp.gt.f32.partialorder %v795, 0.0
          %vm802 = vcmp.gt.f32.partialorder %v797, 0.0
          %v803 = vmul.f32 %v795, 0.2
          %v804 = vmul.f32 %v797, 0.2
          %v805 = vsel %vm801, %v795, %v803
          %v806 = vsel %vm802, %v797, %v804
          %v807 = vpack.c.bf16 %v805, %v805
          %v808 = vpack.c.bf16 %v806, %v806
          %v809 = vld [vmem:[#allocation11] sm:$0xff]
          %v810 = vld [vmem:[#allocation11 + $0x8] sm:$0xff]
          %v811 = vld [vmem:[#allocation11 + $0x10] sm:$0xff]
          %v812 = vld [vmem:[#allocation11 + $0x18] sm:$0xff]
          %v813 = vld [vmem:[#allocation11 + $0x20] sm:$0xff]
          %v814 = vld [vmem:[#allocation11 + $0x28] sm:$0xff]
          %v815 = vld [vmem:[#allocation11 + $0x30] sm:$0xff]
          %v816 = vld [vmem:[#allocation11 + $0x38] sm:$0xff]
          %v817 = vld [vmem:[#allocation11 + $0x40] sm:$0xff]
          %v818 = vld [vmem:[#allocation11 + $0x48] sm:$0xff]
          %v819 = vld [vmem:[#allocation11 + $0x50] sm:$0xff]
          %v820 = vld [vmem:[#allocation11 + $0x58] sm:$0xff]
          %v821 = vld [vmem:[#allocation11 + $0x60] sm:$0xff]
          %v822 = vld [vmem:[#allocation11 + $0x68] sm:$0xff]
          %v823 = vld [vmem:[#allocation11 + $0x70] sm:$0xff]
          %v824 = vld [vmem:[#allocation11 + $0x78] sm:$0xff]
          %v825 = vld [vmem:[#allocation11 + $0x80] sm:$0xff]
          %v826 = vld [vmem:[#allocation11 + $0x88] sm:$0xff]
          %v827 = vld [vmem:[#allocation11 + $0x90] sm:$0xff]
          %v828 = vld [vmem:[#allocation11 + $0x98] sm:$0xff]
          %v829 = vld [vmem:[#allocation11 + $0xa0] sm:$0xff]
          %v830 = vld [vmem:[#allocation11 + $0xa8] sm:$0xff]
          %v831 = vld [vmem:[#allocation11 + $0xb0] sm:$0xff]
          %v832 = vld [vmem:[#allocation11 + $0xb8] sm:$0xff]
          %v833 = vld [vmem:[#allocation11 + $0xc0] sm:$0xff]
          %v834 = vld [vmem:[#allocation11 + $0xc8] sm:$0xff]
          %v835 = vld [vmem:[#allocation11 + $0xd0] sm:$0xff]
          %v836 = vld [vmem:[#allocation11 + $0xd8] sm:$0xff]
          %v837 = vld [vmem:[#allocation11 + $0xe0] sm:$0xff]
          %v838 = vld [vmem:[#allocation11 + $0xe8] sm:$0xff]
          %v839 = vld [vmem:[#allocation11 + $0xf0] sm:$0xff]
          %v840 = vld [vmem:[#allocation11 + $0xf8] sm:$0xff]
          %v841 = vld [vmem:[#allocation11 + $0x100] sm:$0xff]
          %v842 = vld [vmem:[#allocation11 + $0x108] sm:$0xff]
          %v843 = vld [vmem:[#allocation11 + $0x110] sm:$0xff]
          %v844 = vld [vmem:[#allocation11 + $0x118] sm:$0xff]
          %v845 = vld [vmem:[#allocation11 + $0x120] sm:$0xff]
          %v846 = vld [vmem:[#allocation11 + $0x128] sm:$0xff]
          %v847 = vld [vmem:[#allocation11 + $0x130] sm:$0xff]
          %v848 = vld [vmem:[#allocation11 + $0x138] sm:$0xff]
          %v849 = vld [vmem:[#allocation11 + $0x140] sm:$0xff]
          %v850 = vld [vmem:[#allocation11 + $0x148] sm:$0xff]
          %v851 = vld [vmem:[#allocation11 + $0x150] sm:$0xff]
          %v852 = vld [vmem:[#allocation11 + $0x158] sm:$0xff]
          %v853 = vld [vmem:[#allocation11 + $0x160] sm:$0xff]
          %v854 = vld [vmem:[#allocation11 + $0x168] sm:$0xff]
          %v855 = vld [vmem:[#allocation11 + $0x170] sm:$0xff]
          %v856 = vld [vmem:[#allocation11 + $0x178] sm:$0xff]
          %v857 = vld [vmem:[#allocation11 + $0x180] sm:$0xff]
          %v858 = vld [vmem:[#allocation11 + $0x188] sm:$0xff]
          %v859 = vld [vmem:[#allocation11 + $0x190] sm:$0xff]
          %v860 = vld [vmem:[#allocation11 + $0x198] sm:$0xff]
          %v861 = vld [vmem:[#allocation11 + $0x1a0] sm:$0xff]
          %v862 = vld [vmem:[#allocation11 + $0x1a8] sm:$0xff]
          %v863 = vld [vmem:[#allocation11 + $0x1b0] sm:$0xff]
          %v864 = vld [vmem:[#allocation11 + $0x1b8] sm:$0xff]
          %v865 = vld [vmem:[#allocation11 + $0x1c0] sm:$0xff]
          %v866 = vld [vmem:[#allocation11 + $0x1c8] sm:$0xff]
          %v867 = vld [vmem:[#allocation11 + $0x1d0] sm:$0xff]
          %v868 = vld [vmem:[#allocation11 + $0x1d8] sm:$0xff]
          %v869 = vld [vmem:[#allocation11 + $0x1e0] sm:$0xff]
          %v870 = vld [vmem:[#allocation11 + $0x1e8] sm:$0xff]
          %v871 = vld [vmem:[#allocation11 + $0x1f0] sm:$0xff]
          %v872 = vld [vmem:[#allocation11 + $0x1f8] sm:$0xff]
          %v873 = vld [vmem:[#allocation13] sm:$0xf]
          %v874 = vunpack.c.l.bf16 %v873
          %v876 = vlaneseq
          %v877 = vshrl.u32 %v876, 7
          %v878 = vsub.s32 0, %v877
          %v879 = vrot.slane %v874, %v878
          %v880 = vlaneseq
          %v881 = vshrl.u32 %v880, 7
          %v882 = vsub.s32 2, %v881
          %v883 = vrot.slane %v874, %v882
          %v884 = vlaneseq
          %v885 = vshrl.u32 %v884, 7
          %v886 = vsub.s32 4, %v885
          %v887 = vrot.slane %v874, %v886
          %v888 = vlaneseq
          %v889 = vshrl.u32 %v888, 7
          %v890 = vsub.s32 6, %v889
          %v891 = vrot.slane %v874, %v890
          %v896 = vlaneseq
          %v897 = vshrl.u32 %v896, 7
          %v898 = vsub.s32 0, %v897
          %v899 = vrot.slane %v879, %v898
          %v900 = vlaneseq
          %v901 = vshrl.u32 %v900, 7
          %v902 = vsub.s32 0, %v901
          %v903 = vrot.slane %v883, %v902
          %v904 = vlaneseq
          %v905 = vshrl.u32 %v904, 7
          %v906 = vsub.s32 0, %v905
          %v907 = vrot.slane %v887, %v906
          %v908 = vlaneseq
          %v909 = vshrl.u32 %v908, 7
          %v910 = vsub.s32 0, %v909
          %v911 = vrot.slane %v891, %v910
          %v976 = vunpack.c.l.b16 %v809
          %v977 = vunpack.c.h.b16 %v809
          %v978 = vunpack.c.l.b16 %v810
          %v979 = vunpack.c.h.b16 %v810
          %v980 = vunpack.c.l.b16 %v811
          %v981 = vunpack.c.h.b16 %v811
          %v982 = vunpack.c.l.b16 %v812
          %v983 = vunpack.c.h.b16 %v812
          %v984 = vunpack.c.l.b16 %v813
          %v985 = vunpack.c.h.b16 %v813
          %v986 = vunpack.c.l.b16 %v814
          %v987 = vunpack.c.h.b16 %v814
          %v988 = vunpack.c.l.b16 %v815
          %v989 = vunpack.c.h.b16 %v815
          %v990 = vunpack.c.l.b16 %v816
          %v991 = vunpack.c.h.b16 %v816
          %v992 = vunpack.c.l.b16 %v817
          %v993 = vunpack.c.h.b16 %v817
          %v994 = vunpack.c.l.b16 %v818
          %v995 = vunpack.c.h.b16 %v818
          %v996 = vunpack.c.l.b16 %v819
          %v997 = vunpack.c.h.b16 %v819
          %v998 = vunpack.c.l.b16 %v820
          %v999 = vunpack.c.h.b16 %v820
          %v1000 = vunpack.c.l.b16 %v821
          %v1001 = vunpack.c.h.b16 %v821
          %v1002 = vunpack.c.l.b16 %v822
          %v1003 = vunpack.c.h.b16 %v822
          %v1004 = vunpack.c.l.b16 %v823
          %v1005 = vunpack.c.h.b16 %v823
          %v1006 = vunpack.c.l.b16 %v824
          %v1007 = vunpack.c.h.b16 %v824
          %v1008 = vunpack.c.l.b16 %v825
          %v1009 = vunpack.c.h.b16 %v825
          %v1010 = vunpack.c.l.b16 %v826
          %v1011 = vunpack.c.h.b16 %v826
          %v1012 = vunpack.c.l.b16 %v827
          %v1013 = vunpack.c.h.b16 %v827
          %v1014 = vunpack.c.l.b16 %v828
          %v1015 = vunpack.c.h.b16 %v828
          %v1016 = vunpack.c.l.b16 %v829
          %v1017 = vunpack.c.h.b16 %v829
          %v1018 = vunpack.c.l.b16 %v830
          %v1019 = vunpack.c.h.b16 %v830
          %v1020 = vunpack.c.l.b16 %v831
          %v1021 = vunpack.c.h.b16 %v831
          %v1022 = vunpack.c.l.b16 %v832
          %v1023 = vunpack.c.h.b16 %v832
          %v1024 = vunpack.c.l.b16 %v833
          %v1025 = vunpack.c.h.b16 %v833
          %v1026 = vunpack.c.l.b16 %v834
          %v1027 = vunpack.c.h.b16 %v834
          %v1028 = vunpack.c.l.b16 %v835
          %v1029 = vunpack.c.h.b16 %v835
          %v1030 = vunpack.c.l.b16 %v836
          %v1031 = vunpack.c.h.b16 %v836
          %v1032 = vunpack.c.l.b16 %v837
          %v1033 = vunpack.c.h.b16 %v837
          %v1034 = vunpack.c.l.b16 %v838
          %v1035 = vunpack.c.h.b16 %v838
          %v1036 = vunpack.c.l.b16 %v839
          %v1037 = vunpack.c.h.b16 %v839
          %v1038 = vunpack.c.l.b16 %v840
          %v1039 = vunpack.c.h.b16 %v840
          %v1040 = vunpack.c.l.b16 %v841
          %v1041 = vunpack.c.h.b16 %v841
          %v1042 = vunpack.c.l.b16 %v842
          %v1043 = vunpack.c.h.b16 %v842
          %v1044 = vunpack.c.l.b16 %v843
          %v1045 = vunpack.c.h.b16 %v843
          %v1046 = vunpack.c.l.b16 %v844
          %v1047 = vunpack.c.h.b16 %v844
          %v1048 = vunpack.c.l.b16 %v845
          %v1049 = vunpack.c.h.b16 %v845
          %v1050 = vunpack.c.l.b16 %v846
          %v1051 = vunpack.c.h.b16 %v846
          %v1052 = vunpack.c.l.b16 %v847
          %v1053 = vunpack.c.h.b16 %v847
          %v1054 = vunpack.c.l.b16 %v848
          %v1055 = vunpack.c.h.b16 %v848
          %v1056 = vunpack.c.l.b16 %v849
          %v1057 = vunpack.c.h.b16 %v849
          %v1058 = vunpack.c.l.b16 %v850
          %v1059 = vunpack.c.h.b16 %v850
          %v1060 = vunpack.c.l.b16 %v851
          %v1061 = vunpack.c.h.b16 %v851
          %v1062 = vunpack.c.l.b16 %v852
          %v1063 = vunpack.c.h.b16 %v852
          %v1064 = vunpack.c.l.b16 %v853
          %v1065 = vunpack.c.h.b16 %v853
          %v1066 = vunpack.c.l.b16 %v854
          %v1067 = vunpack.c.h.b16 %v854
          %v1068 = vunpack.c.l.b16 %v855
          %v1069 = vunpack.c.h.b16 %v855
          %v1070 = vunpack.c.l.b16 %v856
          %v1071 = vunpack.c.h.b16 %v856
          %v1072 = vunpack.c.l.b16 %v857
          %v1073 = vunpack.c.h.b16 %v857
          %v1074 = vunpack.c.l.b16 %v858
          %v1075 = vunpack.c.h.b16 %v858
          %v1076 = vunpack.c.l.b16 %v859
          %v1077 = vunpack.c.h.b16 %v859
          %v1078 = vunpack.c.l.b16 %v860
          %v1079 = vunpack.c.h.b16 %v860
          %v1080 = vunpack.c.l.b16 %v861
          %v1081 = vunpack.c.h.b16 %v861
          %v1082 = vunpack.c.l.b16 %v862
          %v1083 = vunpack.c.h.b16 %v862
          %v1084 = vunpack.c.l.b16 %v863
          %v1085 = vunpack.c.h.b16 %v863
          %v1086 = vunpack.c.l.b16 %v864
          %v1087 = vunpack.c.h.b16 %v864
          %v1088 = vunpack.c.l.b16 %v865
          %v1089 = vunpack.c.h.b16 %v865
          %v1090 = vunpack.c.l.b16 %v866
          %v1091 = vunpack.c.h.b16 %v866
          %v1092 = vunpack.c.l.b16 %v867
          %v1093 = vunpack.c.h.b16 %v867
          %v1094 = vunpack.c.l.b16 %v868
          %v1095 = vunpack.c.h.b16 %v868
          %v1096 = vunpack.c.l.b16 %v869
          %v1097 = vunpack.c.h.b16 %v869
          %v1098 = vunpack.c.l.b16 %v870
          %v1099 = vunpack.c.h.b16 %v870
          %v1100 = vunpack.c.l.b16 %v871
          %v1101 = vunpack.c.h.b16 %v871
          %v1102 = vunpack.c.l.b16 %v872
          %v1103 = vunpack.c.h.b16 %v872
          %v1104 = vpack.c.b16 %v980, %v976
          %v1105 = vpack.c.b16 %v981, %v977
          %v1106 = vpack.c.b16 %v982, %v978
          %v1107 = vpack.c.b16 %v983, %v979
          %v1108 = vpack.c.b16 %v988, %v984
          %v1109 = vpack.c.b16 %v989, %v985
          %v1110 = vpack.c.b16 %v990, %v986
          %v1111 = vpack.c.b16 %v991, %v987
          %v1112 = vpack.c.b16 %v996, %v992
          %v1113 = vpack.c.b16 %v997, %v993
          %v1114 = vpack.c.b16 %v998, %v994
          %v1115 = vpack.c.b16 %v999, %v995
          %v1116 = vpack.c.b16 %v1004, %v1000
          %v1117 = vpack.c.b16 %v1005, %v1001
          %v1118 = vpack.c.b16 %v1006, %v1002
          %v1119 = vpack.c.b16 %v1007, %v1003
          %v1120 = vpack.c.b16 %v1012, %v1008
          %v1121 = vpack.c.b16 %v1013, %v1009
          %v1122 = vpack.c.b16 %v1014, %v1010
          %v1123 = vpack.c.b16 %v1015, %v1011
          %v1124 = vpack.c.b16 %v1020, %v1016
          %v1125 = vpack.c.b16 %v1021, %v1017
          %v1126 = vpack.c.b16 %v1022, %v1018
          %v1127 = vpack.c.b16 %v1023, %v1019
          %v1128 = vpack.c.b16 %v1028, %v1024
          %v1129 = vpack.c.b16 %v1029, %v1025
          %v1130 = vpack.c.b16 %v1030, %v1026
          %v1131 = vpack.c.b16 %v1031, %v1027
          %v1132 = vpack.c.b16 %v1036, %v1032
          %v1133 = vpack.c.b16 %v1037, %v1033
          %v1134 = vpack.c.b16 %v1038, %v1034
          %v1135 = vpack.c.b16 %v1039, %v1035
          %v1136 = vpack.c.b16 %v1044, %v1040
          %v1137 = vpack.c.b16 %v1045, %v1041
          %v1138 = vpack.c.b16 %v1046, %v1042
          %v1139 = vpack.c.b16 %v1047, %v1043
          %v1140 = vpack.c.b16 %v1052, %v1048
          %v1141 = vpack.c.b16 %v1053, %v1049
          %v1142 = vpack.c.b16 %v1054, %v1050
          %v1143 = vpack.c.b16 %v1055, %v1051
          %v1144 = vpack.c.b16 %v1060, %v1056
          %v1145 = vpack.c.b16 %v1061, %v1057
          %v1146 = vpack.c.b16 %v1062, %v1058
          %v1147 = vpack.c.b16 %v1063, %v1059
          %v1148 = vpack.c.b16 %v1068, %v1064
          %v1149 = vpack.c.b16 %v1069, %v1065
          %v1150 = vpack.c.b16 %v1070, %v1066
          %v1151 = vpack.c.b16 %v1071, %v1067
          %v1152 = vpack.c.b16 %v1076, %v1072
          %v1153 = vpack.c.b16 %v1077, %v1073
          %v1154 = vpack.c.b16 %v1078, %v1074
          %v1155 = vpack.c.b16 %v1079, %v1075
          %v1156 = vpack.c.b16 %v1084, %v1080
          %v1157 = vpack.c.b16 %v1085, %v1081
          %v1158 = vpack.c.b16 %v1086, %v1082
          %v1159 = vpack.c.b16 %v1087, %v1083
          %v1160 = vpack.c.b16 %v1092, %v1088
          %v1161 = vpack.c.b16 %v1093, %v1089
          %v1162 = vpack.c.b16 %v1094, %v1090
          %v1163 = vpack.c.b16 %v1095, %v1091
          %v1164 = vpack.c.b16 %v1100, %v1096
          %v1165 = vpack.c.b16 %v1101, %v1097
          %v1166 = vpack.c.b16 %v1102, %v1098
          %v1167 = vpack.c.b16 %v1103, %v1099
          %1232 = vmatprep.subr.bf16.mxu0 %v1105
          %1233 = vmatpush1.bf16.msra.mxu0 %v1104
          %1234 = vmatprep.subr.bf16.mxu0 %v1109
          %1235 = vmatpush1.bf16.msra.mxu0 %v1108
          %1236 = vmatprep.subr.bf16.mxu0 %v1113
          %1237 = vmatpush1.bf16.msra.mxu0 %v1112
          %1238 = vmatprep.subr.bf16.mxu0 %v1117
          %1239 = vmatpush1.bf16.msra.mxu0 %v1116
          %1240 = vmatprep.subr.bf16.mxu0 %v1121
          %1241 = vmatpush1.bf16.msra.mxu0 %v1120
          %1242 = vmatprep.subr.bf16.mxu0 %v1125
          %1243 = vmatpush1.bf16.msra.mxu0 %v1124
          %1244 = vmatprep.subr.bf16.mxu0 %v1129
          %1245 = vmatpush1.bf16.msra.mxu0 %v1128
          %1246 = vmatprep.subr.bf16.mxu0 %v1133
          %1247 = vmatpush1.bf16.msra.mxu0 %v1132
          %1248 = vmatprep.subr.bf16.mxu0 %v1137
          %1249 = vmatpush1.bf16.msra.mxu0 %v1136
          %1250 = vmatprep.subr.bf16.mxu0 %v1141
          %1251 = vmatpush1.bf16.msra.mxu0 %v1140
          %1252 = vmatprep.subr.bf16.mxu0 %v1145
          %1253 = vmatpush1.bf16.msra.mxu0 %v1144
          %1254 = vmatprep.subr.bf16.mxu0 %v1149
          %1255 = vmatpush1.bf16.msra.mxu0 %v1148
          %1256 = vmatprep.subr.bf16.mxu0 %v1153
          %1257 = vmatpush1.bf16.msra.mxu0 %v1152
          %1258 = vmatprep.subr.bf16.mxu0 %v1157
          %1259 = vmatpush1.bf16.msra.mxu0 %v1156
          %1260 = vmatprep.subr.bf16.mxu0 %v1161
          %1261 = vmatpush1.bf16.msra.mxu0 %v1160
          %1262 = vmatprep.subr.bf16.mxu0 %v1165
          %1263 = vmatpush1.bf16.msra.mxu0 %v1164
          %1264 = vmatprep.mubr.bf16.mxu0 %v808
          %1265 = vmatmul.mubr.bf16.gmra.mrb[0].mxu0 %v807
          %v1266 = vpop.f32.mrb[0].mxu0
          %v1267 = vadd.f32 %v899, %v1266
          %v1268 = vpop.f32.mrb[0].mxu0
          %v1269 = vadd.f32 %v903, %v1268
          %v1270 = vpop.f32.mrb[0].mxu0
          %v1271 = vpop.f32.mrb[0].mxu0
          %1272 = vdwg.mxu0
          %1273 = vmatprep.subr.bf16.mxu0 %v1107
          %1274 = vmatpush1.bf16.msra.mxu0 %v1106
          %1275 = vmatprep.subr.bf16.mxu0 %v1111
          %1276 = vmatpush1.bf16.msra.mxu0 %v1110
          %1277 = vmatprep.subr.bf16.mxu0 %v1115
          %1278 = vmatpush1.bf16.msra.mxu0 %v1114
          %1279 = vmatprep.subr.bf16.mxu0 %v1119
          %1280 = vmatpush1.bf16.msra.mxu0 %v1118
          %1281 = vmatprep.subr.bf16.mxu0 %v1123
          %1282 = vmatpush1.bf16.msra.mxu0 %v1122
          %1283 = vmatprep.subr.bf16.mxu0 %v1127
          %1284 = vmatpush1.bf16.msra.mxu0 %v1126
          %1285 = vmatprep.subr.bf16.mxu0 %v1131
          %1286 = vmatpush1.bf16.msra.mxu0 %v1130
          %1287 = vmatprep.subr.bf16.mxu0 %v1135
          %1288 = vmatpush1.bf16.msra.mxu0 %v1134
          %1289 = vmatprep.subr.bf16.mxu0 %v1139
          %1290 = vmatpush1.bf16.msra.mxu0 %v1138
          %1291 = vmatprep.subr.bf16.mxu0 %v1143
          %1292 = vmatpush1.bf16.msra.mxu0 %v1142
          %1293 = vmatprep.subr.bf16.mxu0 %v1147
          %1294 = vmatpush1.bf16.msra.mxu0 %v1146
          %1295 = vmatprep.subr.bf16.mxu0 %v1151
          %1296 = vmatpush1.bf16.msra.mxu0 %v1150
          %1297 = vmatprep.subr.bf16.mxu0 %v1155
          %1298 = vmatpush1.bf16.msra.mxu0 %v1154
          %1299 = vmatprep.subr.bf16.mxu0 %v1159
          %1300 = vmatpush1.bf16.msra.mxu0 %v1158
          %1301 = vmatprep.subr.bf16.mxu0 %v1163
          %1302 = vmatpush1.bf16.msra.mxu0 %v1162
          %1303 = vmatprep.subr.bf16.mxu0 %v1167
          %1304 = vmatpush1.bf16.msra.mxu0 %v1166
          %1305 = vmatprep.mubr.bf16.mxu0 %v808
          %1306 = vmatmul.mubr.bf16.gmra.mrb[0].mxu0 %v807
          %v1307 = vpop.f32.mrb[0].mxu0
          %v1308 = vadd.f32 %v907, %v1307
          %v1309 = vpop.f32.mrb[0].mxu0
          %v1310 = vadd.f32 %v911, %v1309
          %v1311 = vpop.f32.mrb[0].mxu0
          %v1312 = vpop.f32.mrb[0].mxu0
          %1313 = vdwg.mxu0
          %vm1314 = vcmp.gt.f32.partialorder %v1267, 0.0
          %vm1315 = vcmp.gt.f32.partialorder %v1269, 0.0
          %vm1316 = vcmp.gt.f32.partialorder %v1308, 0.0
          %vm1317 = vcmp.gt.f32.partialorder %v1310, 0.0
          %v1318 = vmul.f32 %v1267, 0.2
          %v1319 = vmul.f32 %v1269, 0.2
          %v1320 = vmul.f32 %v1308, 0.2
          %v1321 = vmul.f32 %v1310, 0.2
          %v1322 = vsel %vm1314, %v1267, %v1318
          %v1323 = vsel %vm1315, %v1269, %v1319
          %v1324 = vsel %vm1316, %v1308, %v1320
          %v1325 = vsel %vm1317, %v1310, %v1321
          %v1326 = vpack.c.bf16 %v1322, %v1322
          %v1327 = vpack.c.bf16 %v1323, %v1323
          %v1328 = vpack.c.bf16 %v1324, %v1324
          %v1329 = vpack.c.bf16 %v1325, %v1325
          %v1330 = vld [vmem:[#allocation14] sm:$0xff]
          %v1331 = vld [vmem:[#allocation14 + $0x8] sm:$0xff]
          %v1332 = vld [vmem:[#allocation14 + $0x10] sm:$0xff]
          %v1333 = vld [vmem:[#allocation14 + $0x18] sm:$0xff]
          %v1334 = vld [vmem:[#allocation14 + $0x20] sm:$0xff]
          %v1335 = vld [vmem:[#allocation14 + $0x28] sm:$0xff]
          %v1336 = vld [vmem:[#allocation14 + $0x30] sm:$0xff]
          %v1337 = vld [vmem:[#allocation14 + $0x38] sm:$0xff]
          %v1338 = vld [vmem:[#allocation14 + $0x40] sm:$0xff]
          %v1339 = vld [vmem:[#allocation14 + $0x48] sm:$0xff]
          %v1340 = vld [vmem:[#allocation14 + $0x50] sm:$0xff]
          %v1341 = vld [vmem:[#allocation14 + $0x58] sm:$0xff]
          %v1342 = vld [vmem:[#allocation14 + $0x60] sm:$0xff]
          %v1343 = vld [vmem:[#allocation14 + $0x68] sm:$0xff]
          %v1344 = vld [vmem:[#allocation14 + $0x70] sm:$0xff]
          %v1345 = vld [vmem:[#allocation14 + $0x78] sm:$0xff]
          %v1346 = vld [vmem:[#allocation14 + $0x80] sm:$0xff]
          %v1347 = vld [vmem:[#allocation14 + $0x88] sm:$0xff]
          %v1348 = vld [vmem:[#allocation14 + $0x90] sm:$0xff]
          %v1349 = vld [vmem:[#allocation14 + $0x98] sm:$0xff]
          %v1350 = vld [vmem:[#allocation14 + $0xa0] sm:$0xff]
          %v1351 = vld [vmem:[#allocation14 + $0xa8] sm:$0xff]
          %v1352 = vld [vmem:[#allocation14 + $0xb0] sm:$0xff]
          %v1353 = vld [vmem:[#allocation14 + $0xb8] sm:$0xff]
          %v1354 = vld [vmem:[#allocation14 + $0xc0] sm:$0xff]
          %v1355 = vld [vmem:[#allocation14 + $0xc8] sm:$0xff]
          %v1356 = vld [vmem:[#allocation14 + $0xd0] sm:$0xff]
          %v1357 = vld [vmem:[#allocation14 + $0xd8] sm:$0xff]
          %v1358 = vld [vmem:[#allocation14 + $0xe0] sm:$0xff]
          %v1359 = vld [vmem:[#allocation14 + $0xe8] sm:$0xff]
          %v1360 = vld [vmem:[#allocation14 + $0xf0] sm:$0xff]
          %v1361 = vld [vmem:[#allocation14 + $0xf8] sm:$0xff]
          %v1362 = vld [vmem:[#allocation14 + $0x100] sm:$0xff]
          %v1363 = vld [vmem:[#allocation14 + $0x108] sm:$0xff]
          %v1364 = vld [vmem:[#allocation14 + $0x110] sm:$0xff]
          %v1365 = vld [vmem:[#allocation14 + $0x118] sm:$0xff]
          %v1366 = vld [vmem:[#allocation14 + $0x120] sm:$0xff]
          %v1367 = vld [vmem:[#allocation14 + $0x128] sm:$0xff]
          %v1368 = vld [vmem:[#allocation14 + $0x130] sm:$0xff]
          %v1369 = vld [vmem:[#allocation14 + $0x138] sm:$0xff]
          %v1370 = vld [vmem:[#allocation14 + $0x140] sm:$0xff]
          %v1371 = vld [vmem:[#allocation14 + $0x148] sm:$0xff]
          %v1372 = vld [vmem:[#allocation14 + $0x150] sm:$0xff]
          %v1373 = vld [vmem:[#allocation14 + $0x158] sm:$0xff]
          %v1374 = vld [vmem:[#allocation14 + $0x160] sm:$0xff]
          %v1375 = vld [vmem:[#allocation14 + $0x168] sm:$0xff]
          %v1376 = vld [vmem:[#allocation14 + $0x170] sm:$0xff]
          %v1377 = vld [vmem:[#allocation14 + $0x178] sm:$0xff]
          %v1378 = vld [vmem:[#allocation14 + $0x180] sm:$0xff]
          %v1379 = vld [vmem:[#allocation14 + $0x188] sm:$0xff]
          %v1380 = vld [vmem:[#allocation14 + $0x190] sm:$0xff]
          %v1381 = vld [vmem:[#allocation14 + $0x198] sm:$0xff]
          %v1382 = vld [vmem:[#allocation14 + $0x1a0] sm:$0xff]
          %v1383 = vld [vmem:[#allocation14 + $0x1a8] sm:$0xff]
          %v1384 = vld [vmem:[#allocation14 + $0x1b0] sm:$0xff]
          %v1385 = vld [vmem:[#allocation14 + $0x1b8] sm:$0xff]
          %v1386 = vld [vmem:[#allocation14 + $0x1c0] sm:$0xff]
          %v1387 = vld [vmem:[#allocation14 + $0x1c8] sm:$0xff]
          %v1388 = vld [vmem:[#allocation14 + $0x1d0] sm:$0xff]
          %v1389 = vld [vmem:[#allocation14 + $0x1d8] sm:$0xff]
          %v1390 = vld [vmem:[#allocation14 + $0x1e0] sm:$0xff]
          %v1391 = vld [vmem:[#allocation14 + $0x1e8] sm:$0xff]
          %v1392 = vld [vmem:[#allocation14 + $0x1f0] sm:$0xff]
          %v1393 = vld [vmem:[#allocation14 + $0x1f8] sm:$0xff]
          %v1394 = vld [vmem:[#allocation14 + $0x200] sm:$0xff]
          %v1395 = vld [vmem:[#allocation14 + $0x208] sm:$0xff]
          %v1396 = vld [vmem:[#allocation14 + $0x210] sm:$0xff]
          %v1397 = vld [vmem:[#allocation14 + $0x218] sm:$0xff]
          %v1398 = vld [vmem:[#allocation14 + $0x220] sm:$0xff]
          %v1399 = vld [vmem:[#allocation14 + $0x228] sm:$0xff]
          %v1400 = vld [vmem:[#allocation14 + $0x230] sm:$0xff]
          %v1401 = vld [vmem:[#allocation14 + $0x238] sm:$0xff]
          %v1402 = vld [vmem:[#allocation14 + $0x240] sm:$0xff]
          %v1403 = vld [vmem:[#allocation14 + $0x248] sm:$0xff]
          %v1404 = vld [vmem:[#allocation14 + $0x250] sm:$0xff]
          %v1405 = vld [vmem:[#allocation14 + $0x258] sm:$0xff]
          %v1406 = vld [vmem:[#allocation14 + $0x260] sm:$0xff]
          %v1407 = vld [vmem:[#allocation14 + $0x268] sm:$0xff]
          %v1408 = vld [vmem:[#allocation14 + $0x270] sm:$0xff]
          %v1409 = vld [vmem:[#allocation14 + $0x278] sm:$0xff]
          %v1410 = vld [vmem:[#allocation14 + $0x280] sm:$0xff]
          %v1411 = vld [vmem:[#allocation14 + $0x288] sm:$0xff]
          %v1412 = vld [vmem:[#allocation14 + $0x290] sm:$0xff]
          %v1413 = vld [vmem:[#allocation14 + $0x298] sm:$0xff]
          %v1414 = vld [vmem:[#allocation14 + $0x2a0] sm:$0xff]
          %v1415 = vld [vmem:[#allocation14 + $0x2a8] sm:$0xff]
          %v1416 = vld [vmem:[#allocation14 + $0x2b0] sm:$0xff]
          %v1417 = vld [vmem:[#allocation14 + $0x2b8] sm:$0xff]
          %v1418 = vld [vmem:[#allocation14 + $0x2c0] sm:$0xff]
          %v1419 = vld [vmem:[#allocation14 + $0x2c8] sm:$0xff]
          %v1420 = vld [vmem:[#allocation14 + $0x2d0] sm:$0xff]
          %v1421 = vld [vmem:[#allocation14 + $0x2d8] sm:$0xff]
          %v1422 = vld [vmem:[#allocation14 + $0x2e0] sm:$0xff]
          %v1423 = vld [vmem:[#allocation14 + $0x2e8] sm:$0xff]
          %v1424 = vld [vmem:[#allocation14 + $0x2f0] sm:$0xff]
          %v1425 = vld [vmem:[#allocation14 + $0x2f8] sm:$0xff]
          %v1426 = vld [vmem:[#allocation14 + $0x300] sm:$0xff]
          %v1427 = vld [vmem:[#allocation14 + $0x308] sm:$0xff]
          %v1428 = vld [vmem:[#allocation14 + $0x310] sm:$0xff]
          %v1429 = vld [vmem:[#allocation14 + $0x318] sm:$0xff]
          %v1430 = vld [vmem:[#allocation14 + $0x320] sm:$0xff]
          %v1431 = vld [vmem:[#allocation14 + $0x328] sm:$0xff]
          %v1432 = vld [vmem:[#allocation14 + $0x330] sm:$0xff]
          %v1433 = vld [vmem:[#allocation14 + $0x338] sm:$0xff]
          %v1434 = vld [vmem:[#allocation14 + $0x340] sm:$0xff]
          %v1435 = vld [vmem:[#allocation14 + $0x348] sm:$0xff]
          %v1436 = vld [vmem:[#allocation14 + $0x350] sm:$0xff]
          %v1437 = vld [vmem:[#allocation14 + $0x358] sm:$0xff]
          %v1438 = vld [vmem:[#allocation14 + $0x360] sm:$0xff]
          %v1439 = vld [vmem:[#allocation14 + $0x368] sm:$0xff]
          %v1440 = vld [vmem:[#allocation14 + $0x370] sm:$0xff]
          %v1441 = vld [vmem:[#allocation14 + $0x378] sm:$0xff]
          %v1442 = vld [vmem:[#allocation14 + $0x380] sm:$0xff]
          %v1443 = vld [vmem:[#allocation14 + $0x388] sm:$0xff]
          %v1444 = vld [vmem:[#allocation14 + $0x390] sm:$0xff]
          %v1445 = vld [vmem:[#allocation14 + $0x398] sm:$0xff]
          %v1446 = vld [vmem:[#allocation14 + $0x3a0] sm:$0xff]
          %v1447 = vld [vmem:[#allocation14 + $0x3a8] sm:$0xff]
          %v1448 = vld [vmem:[#allocation14 + $0x3b0] sm:$0xff]
          %v1449 = vld [vmem:[#allocation14 + $0x3b8] sm:$0xff]
          %v1450 = vld [vmem:[#allocation14 + $0x3c0] sm:$0xff]
          %v1451 = vld [vmem:[#allocation14 + $0x3c8] sm:$0xff]
          %v1452 = vld [vmem:[#allocation14 + $0x3d0] sm:$0xff]
          %v1453 = vld [vmem:[#allocation14 + $0x3d8] sm:$0xff]
          %v1454 = vld [vmem:[#allocation14 + $0x3e0] sm:$0xff]
          %v1455 = vld [vmem:[#allocation14 + $0x3e8] sm:$0xff]
          %v1456 = vld [vmem:[#allocation14 + $0x3f0] sm:$0xff]
          %v1457 = vld [vmem:[#allocation14 + $0x3f8] sm:$0xff]
          %v1458 = vld [vmem:[#allocation14 + $0x400] sm:$0xff]
          %v1459 = vld [vmem:[#allocation14 + $0x408] sm:$0xff]
          %v1460 = vld [vmem:[#allocation14 + $0x410] sm:$0xff]
          %v1461 = vld [vmem:[#allocation14 + $0x418] sm:$0xff]
          %v1462 = vld [vmem:[#allocation14 + $0x420] sm:$0xff]
          %v1463 = vld [vmem:[#allocation14 + $0x428] sm:$0xff]
          %v1464 = vld [vmem:[#allocation14 + $0x430] sm:$0xff]
          %v1465 = vld [vmem:[#allocation14 + $0x438] sm:$0xff]
          %v1466 = vld [vmem:[#allocation14 + $0x440] sm:$0xff]
          %v1467 = vld [vmem:[#allocation14 + $0x448] sm:$0xff]
          %v1468 = vld [vmem:[#allocation14 + $0x450] sm:$0xff]
          %v1469 = vld [vmem:[#allocation14 + $0x458] sm:$0xff]
          %v1470 = vld [vmem:[#allocation14 + $0x460] sm:$0xff]
          %v1471 = vld [vmem:[#allocation14 + $0x468] sm:$0xff]
          %v1472 = vld [vmem:[#allocation14 + $0x470] sm:$0xff]
          %v1473 = vld [vmem:[#allocation14 + $0x478] sm:$0xff]
          %v1474 = vld [vmem:[#allocation14 + $0x480] sm:$0xff]
          %v1475 = vld [vmem:[#allocation14 + $0x488] sm:$0xff]
          %v1476 = vld [vmem:[#allocation14 + $0x490] sm:$0xff]
          %v1477 = vld [vmem:[#allocation14 + $0x498] sm:$0xff]
          %v1478 = vld [vmem:[#allocation14 + $0x4a0] sm:$0xff]
          %v1479 = vld [vmem:[#allocation14 + $0x4a8] sm:$0xff]
          %v1480 = vld [vmem:[#allocation14 + $0x4b0] sm:$0xff]
          %v1481 = vld [vmem:[#allocation14 + $0x4b8] sm:$0xff]
          %v1482 = vld [vmem:[#allocation14 + $0x4c0] sm:$0xff]
          %v1483 = vld [vmem:[#allocation14 + $0x4c8] sm:$0xff]
          %v1484 = vld [vmem:[#allocation14 + $0x4d0] sm:$0xff]
          %v1485 = vld [vmem:[#allocation14 + $0x4d8] sm:$0xff]
          %v1486 = vld [vmem:[#allocation14 + $0x4e0] sm:$0xff]
          %v1487 = vld [vmem:[#allocation14 + $0x4e8] sm:$0xff]
          %v1488 = vld [vmem:[#allocation14 + $0x4f0] sm:$0xff]
          %v1489 = vld [vmem:[#allocation14 + $0x4f8] sm:$0xff]
          %v1490 = vld [vmem:[#allocation14 + $0x500] sm:$0xff]
          %v1491 = vld [vmem:[#allocation14 + $0x508] sm:$0xff]
          %v1492 = vld [vmem:[#allocation14 + $0x510] sm:$0xff]
          %v1493 = vld [vmem:[#allocation14 + $0x518] sm:$0xff]
          %v1494 = vld [vmem:[#allocation14 + $0x520] sm:$0xff]
          %v1495 = vld [vmem:[#allocation14 + $0x528] sm:$0xff]
          %v1496 = vld [vmem:[#allocation14 + $0x530] sm:$0xff]
          %v1497 = vld [vmem:[#allocation14 + $0x538] sm:$0xff]
          %v1498 = vld [vmem:[#allocation14 + $0x540] sm:$0xff]
          %v1499 = vld [vmem:[#allocation14 + $0x548] sm:$0xff]
          %v1500 = vld [vmem:[#allocation14 + $0x550] sm:$0xff]
          %v1501 = vld [vmem:[#allocation14 + $0x558] sm:$0xff]
          %v1502 = vld [vmem:[#allocation14 + $0x560] sm:$0xff]
          %v1503 = vld [vmem:[#allocation14 + $0x568] sm:$0xff]
          %v1504 = vld [vmem:[#allocation14 + $0x570] sm:$0xff]
          %v1505 = vld [vmem:[#allocation14 + $0x578] sm:$0xff]
          %v1506 = vld [vmem:[#allocation14 + $0x580] sm:$0xff]
          %v1507 = vld [vmem:[#allocation14 + $0x588] sm:$0xff]
          %v1508 = vld [vmem:[#allocation14 + $0x590] sm:$0xff]
          %v1509 = vld [vmem:[#allocation14 + $0x598] sm:$0xff]
          %v1510 = vld [vmem:[#allocation14 + $0x5a0] sm:$0xff]
          %v1511 = vld [vmem:[#allocation14 + $0x5a8] sm:$0xff]
          %v1512 = vld [vmem:[#allocation14 + $0x5b0] sm:$0xff]
          %v1513 = vld [vmem:[#allocation14 + $0x5b8] sm:$0xff]
          %v1514 = vld [vmem:[#allocation14 + $0x5c0] sm:$0xff]
          %v1515 = vld [vmem:[#allocation14 + $0x5c8] sm:$0xff]
          %v1516 = vld [vmem:[#allocation14 + $0x5d0] sm:$0xff]
          %v1517 = vld [vmem:[#allocation14 + $0x5d8] sm:$0xff]
          %v1518 = vld [vmem:[#allocation14 + $0x5e0] sm:$0xff]
          %v1519 = vld [vmem:[#allocation14 + $0x5e8] sm:$0xff]
          %v1520 = vld [vmem:[#allocation14 + $0x5f0] sm:$0xff]
          %v1521 = vld [vmem:[#allocation14 + $0x5f8] sm:$0xff]
          %v1522 = vld [vmem:[#allocation14 + $0x600] sm:$0xff]
          %v1523 = vld [vmem:[#allocation14 + $0x608] sm:$0xff]
          %v1524 = vld [vmem:[#allocation14 + $0x610] sm:$0xff]
          %v1525 = vld [vmem:[#allocation14 + $0x618] sm:$0xff]
          %v1526 = vld [vmem:[#allocation14 + $0x620] sm:$0xff]
          %v1527 = vld [vmem:[#allocation14 + $0x628] sm:$0xff]
          %v1528 = vld [vmem:[#allocation14 + $0x630] sm:$0xff]
          %v1529 = vld [vmem:[#allocation14 + $0x638] sm:$0xff]
          %v1530 = vld [vmem:[#allocation14 + $0x640] sm:$0xff]
          %v1531 = vld [vmem:[#allocation14 + $0x648] sm:$0xff]
          %v1532 = vld [vmem:[#allocation14 + $0x650] sm:$0xff]
          %v1533 = vld [vmem:[#allocation14 + $0x658] sm:$0xff]
          %v1534 = vld [vmem:[#allocation14 + $0x660] sm:$0xff]
          %v1535 = vld [vmem:[#allocation14 + $0x668] sm:$0xff]
          %v1536 = vld [vmem:[#allocation14 + $0x670] sm:$0xff]
          %v1537 = vld [vmem:[#allocation14 + $0x678] sm:$0xff]
          %v1538 = vld [vmem:[#allocation14 + $0x680] sm:$0xff]
          %v1539 = vld [vmem:[#allocation14 + $0x688] sm:$0xff]
          %v1540 = vld [vmem:[#allocation14 + $0x690] sm:$0xff]
          %v1541 = vld [vmem:[#allocation14 + $0x698] sm:$0xff]
          %v1542 = vld [vmem:[#allocation14 + $0x6a0] sm:$0xff]
          %v1543 = vld [vmem:[#allocation14 + $0x6a8] sm:$0xff]
          %v1544 = vld [vmem:[#allocation14 + $0x6b0] sm:$0xff]
          %v1545 = vld [vmem:[#allocation14 + $0x6b8] sm:$0xff]
          %v1546 = vld [vmem:[#allocation14 + $0x6c0] sm:$0xff]
          %v1547 = vld [vmem:[#allocation14 + $0x6c8] sm:$0xff]
          %v1548 = vld [vmem:[#allocation14 + $0x6d0] sm:$0xff]
          %v1549 = vld [vmem:[#allocation14 + $0x6d8] sm:$0xff]
          %v1550 = vld [vmem:[#allocation14 + $0x6e0] sm:$0xff]
          %v1551 = vld [vmem:[#allocation14 + $0x6e8] sm:$0xff]
          %v1552 = vld [vmem:[#allocation14 + $0x6f0] sm:$0xff]
          %v1553 = vld [vmem:[#allocation14 + $0x6f8] sm:$0xff]
          %v1554 = vld [vmem:[#allocation14 + $0x700] sm:$0xff]
          %v1555 = vld [vmem:[#allocation14 + $0x708] sm:$0xff]
          %v1556 = vld [vmem:[#allocation14 + $0x710] sm:$0xff]
          %v1557 = vld [vmem:[#allocation14 + $0x718] sm:$0xff]
          %v1558 = vld [vmem:[#allocation14 + $0x720] sm:$0xff]
          %v1559 = vld [vmem:[#allocation14 + $0x728] sm:$0xff]
          %v1560 = vld [vmem:[#allocation14 + $0x730] sm:$0xff]
          %v1561 = vld [vmem:[#allocation14 + $0x738] sm:$0xff]
          %v1562 = vld [vmem:[#allocation14 + $0x740] sm:$0xff]
          %v1563 = vld [vmem:[#allocation14 + $0x748] sm:$0xff]
          %v1564 = vld [vmem:[#allocation14 + $0x750] sm:$0xff]
          %v1565 = vld [vmem:[#allocation14 + $0x758] sm:$0xff]
          %v1566 = vld [vmem:[#allocation14 + $0x760] sm:$0xff]
          %v1567 = vld [vmem:[#allocation14 + $0x768] sm:$0xff]
          %v1568 = vld [vmem:[#allocation14 + $0x770] sm:$0xff]
          %v1569 = vld [vmem:[#allocation14 + $0x778] sm:$0xff]
          %v1570 = vld [vmem:[#allocation14 + $0x780] sm:$0xff]
          %v1571 = vld [vmem:[#allocation14 + $0x788] sm:$0xff]
          %v1572 = vld [vmem:[#allocation14 + $0x790] sm:$0xff]
          %v1573 = vld [vmem:[#allocation14 + $0x798] sm:$0xff]
          %v1574 = vld [vmem:[#allocation14 + $0x7a0] sm:$0xff]
          %v1575 = vld [vmem:[#allocation14 + $0x7a8] sm:$0xff]
          %v1576 = vld [vmem:[#allocation14 + $0x7b0] sm:$0xff]
          %v1577 = vld [vmem:[#allocation14 + $0x7b8] sm:$0xff]
          %v1578 = vld [vmem:[#allocation14 + $0x7c0] sm:$0xff]
          %v1579 = vld [vmem:[#allocation14 + $0x7c8] sm:$0xff]
          %v1580 = vld [vmem:[#allocation14 + $0x7d0] sm:$0xff]
          %v1581 = vld [vmem:[#allocation14 + $0x7d8] sm:$0xff]
          %v1582 = vld [vmem:[#allocation14 + $0x7e0] sm:$0xff]
          %v1583 = vld [vmem:[#allocation14 + $0x7e8] sm:$0xff]
          %v1584 = vld [vmem:[#allocation14 + $0x7f0] sm:$0xff]
          %v1585 = vld [vmem:[#allocation14 + $0x7f8] sm:$0xff]
          %v1586 = vld [vmem:[#allocation16] sm:$0xff]
          %v1587 = vunpack.c.l.bf16 %v1586
          %v1588 = vunpack.c.h.bf16 %v1586
          %v1591 = vlaneseq
          %v1592 = vshrl.u32 %v1591, 7
          %v1593 = vsub.s32 0, %v1592
          %v1594 = vrot.slane %v1587, %v1593
          %v1595 = vlaneseq
          %v1596 = vshrl.u32 %v1595, 7
          %v1597 = vsub.s32 2, %v1596
          %v1598 = vrot.slane %v1587, %v1597
          %v1599 = vlaneseq
          %v1600 = vshrl.u32 %v1599, 7
          %v1601 = vsub.s32 4, %v1600
          %v1602 = vrot.slane %v1587, %v1601
          %v1603 = vlaneseq
          %v1604 = vshrl.u32 %v1603, 7
          %v1605 = vsub.s32 6, %v1604
          %v1606 = vrot.slane %v1587, %v1605
          %v1607 = vlaneseq
          %v1608 = vshrl.u32 %v1607, 7
          %v1609 = vsub.s32 0, %v1608
          %v1610 = vrot.slane %v1588, %v1609
          %v1611 = vlaneseq
          %v1612 = vshrl.u32 %v1611, 7
          %v1613 = vsub.s32 2, %v1612
          %v1614 = vrot.slane %v1588, %v1613
          %v1615 = vlaneseq
          %v1616 = vshrl.u32 %v1615, 7
          %v1617 = vsub.s32 4, %v1616
          %v1618 = vrot.slane %v1588, %v1617
          %v1619 = vlaneseq
          %v1620 = vshrl.u32 %v1619, 7
          %v1621 = vsub.s32 6, %v1620
          %v1622 = vrot.slane %v1588, %v1621
          %v1631 = vlaneseq
          %v1632 = vshrl.u32 %v1631, 7
          %v1633 = vsub.s32 0, %v1632
          %v1634 = vrot.slane %v1594, %v1633
          %v1635 = vlaneseq
          %v1636 = vshrl.u32 %v1635, 7
          %v1637 = vsub.s32 0, %v1636
          %v1638 = vrot.slane %v1598, %v1637
          %v1639 = vlaneseq
          %v1640 = vshrl.u32 %v1639, 7
          %v1641 = vsub.s32 0, %v1640
          %v1642 = vrot.slane %v1602, %v1641
          %v1643 = vlaneseq
          %v1644 = vshrl.u32 %v1643, 7
          %v1645 = vsub.s32 0, %v1644
          %v1646 = vrot.slane %v1606, %v1645
          %v1647 = vlaneseq
          %v1648 = vshrl.u32 %v1647, 7
          %v1649 = vsub.s32 0, %v1648
          %v1650 = vrot.slane %v1610, %v1649
          %v1651 = vlaneseq
          %v1652 = vshrl.u32 %v1651, 7
          %v1653 = vsub.s32 0, %v1652
          %v1654 = vrot.slane %v1614, %v1653
          %v1655 = vlaneseq
          %v1656 = vshrl.u32 %v1655, 7
          %v1657 = vsub.s32 0, %v1656
          %v1658 = vrot.slane %v1618, %v1657
          %v1659 = vlaneseq
          %v1660 = vshrl.u32 %v1659, 7
          %v1661 = vsub.s32 0, %v1660
          %v1662 = vrot.slane %v1622, %v1661
          %v1919 = vunpack.c.l.b16 %v1330
          %v1920 = vunpack.c.h.b16 %v1330
          %v1921 = vunpack.c.l.b16 %v1331
          %v1922 = vunpack.c.h.b16 %v1331
          %v1923 = vunpack.c.l.b16 %v1332
          %v1924 = vunpack.c.h.b16 %v1332
          %v1925 = vunpack.c.l.b16 %v1333
          %v1926 = vunpack.c.h.b16 %v1333
          %v1927 = vunpack.c.l.b16 %v1334
          %v1928 = vunpack.c.h.b16 %v1334
          %v1929 = vunpack.c.l.b16 %v1335
          %v1930 = vunpack.c.h.b16 %v1335
          %v1931 = vunpack.c.l.b16 %v1336
          %v1932 = vunpack.c.h.b16 %v1336
          %v1933 = vunpack.c.l.b16 %v1337
          %v1934 = vunpack.c.h.b16 %v1337
          %v1935 = vunpack.c.l.b16 %v1338
          %v1936 = vunpack.c.h.b16 %v1338
          %v1937 = vunpack.c.l.b16 %v1339
          %v1938 = vunpack.c.h.b16 %v1339
          %v1939 = vunpack.c.l.b16 %v1340
          %v1940 = vunpack.c.h.b16 %v1340
          %v1941 = vunpack.c.l.b16 %v1341
          %v1942 = vunpack.c.h.b16 %v1341
          %v1943 = vunpack.c.l.b16 %v1342
          %v1944 = vunpack.c.h.b16 %v1342
          %v1945 = vunpack.c.l.b16 %v1343
          %v1946 = vunpack.c.h.b16 %v1343
          %v1947 = vunpack.c.l.b16 %v1344
          %v1948 = vunpack.c.h.b16 %v1344
          %v1949 = vunpack.c.l.b16 %v1345
          %v1950 = vunpack.c.h.b16 %v1345
          %v1951 = vunpack.c.l.b16 %v1346
          %v1952 = vunpack.c.h.b16 %v1346
          %v1953 = vunpack.c.l.b16 %v1347
          %v1954 = vunpack.c.h.b16 %v1347
          %v1955 = vunpack.c.l.b16 %v1348
          %v1956 = vunpack.c.h.b16 %v1348
          %v1957 = vunpack.c.l.b16 %v1349
          %v1958 = vunpack.c.h.b16 %v1349
          %v1959 = vunpack.c.l.b16 %v1350
          %v1960 = vunpack.c.h.b16 %v1350
          %v1961 = vunpack.c.l.b16 %v1351
          %v1962 = vunpack.c.h.b16 %v1351
          %v1963 = vunpack.c.l.b16 %v1352
          %v1964 = vunpack.c.h.b16 %v1352
          %v1965 = vunpack.c.l.b16 %v1353
          %v1966 = vunpack.c.h.b16 %v1353
          %v1967 = vunpack.c.l.b16 %v1354
          %v1968 = vunpack.c.h.b16 %v1354
          %v1969 = vunpack.c.l.b16 %v1355
          %v1970 = vunpack.c.h.b16 %v1355
          %v1971 = vunpack.c.l.b16 %v1356
          %v1972 = vunpack.c.h.b16 %v1356
          %v1973 = vunpack.c.l.b16 %v1357
          %v1974 = vunpack.c.h.b16 %v1357
          %v1975 = vunpack.c.l.b16 %v1358
          %v1976 = vunpack.c.h.b16 %v1358
          %v1977 = vunpack.c.l.b16 %v1359
          %v1978 = vunpack.c.h.b16 %v1359
          %v1979 = vunpack.c.l.b16 %v1360
          %v1980 = vunpack.c.h.b16 %v1360
          %v1981 = vunpack.c.l.b16 %v1361
          %v1982 = vunpack.c.h.b16 %v1361
          %v1983 = vunpack.c.l.b16 %v1362
          %v1984 = vunpack.c.h.b16 %v1362
          %v1985 = vunpack.c.l.b16 %v1363
          %v1986 = vunpack.c.h.b16 %v1363
          %v1987 = vunpack.c.l.b16 %v1364
          %v1988 = vunpack.c.h.b16 %v1364
          %v1989 = vunpack.c.l.b16 %v1365
          %v1990 = vunpack.c.h.b16 %v1365
          %v1991 = vunpack.c.l.b16 %v1366
          %v1992 = vunpack.c.h.b16 %v1366
          %v1993 = vunpack.c.l.b16 %v1367
          %v1994 = vunpack.c.h.b16 %v1367
          %v1995 = vunpack.c.l.b16 %v1368
          %v1996 = vunpack.c.h.b16 %v1368
          %v1997 = vunpack.c.l.b16 %v1369
          %v1998 = vunpack.c.h.b16 %v1369
          %v1999 = vunpack.c.l.b16 %v1370
          %v2000 = vunpack.c.h.b16 %v1370
          %v2001 = vunpack.c.l.b16 %v1371
          %v2002 = vunpack.c.h.b16 %v1371
          %v2003 = vunpack.c.l.b16 %v1372
          %v2004 = vunpack.c.h.b16 %v1372
          %v2005 = vunpack.c.l.b16 %v1373
          %v2006 = vunpack.c.h.b16 %v1373
          %v2007 = vunpack.c.l.b16 %v1374
          %v2008 = vunpack.c.h.b16 %v1374
          %v2009 = vunpack.c.l.b16 %v1375
          %v2010 = vunpack.c.h.b16 %v1375
          %v2011 = vunpack.c.l.b16 %v1376
          %v2012 = vunpack.c.h.b16 %v1376
          %v2013 = vunpack.c.l.b16 %v1377
          %v2014 = vunpack.c.h.b16 %v1377
          %v2015 = vunpack.c.l.b16 %v1378
          %v2016 = vunpack.c.h.b16 %v1378
          %v2017 = vunpack.c.l.b16 %v1379
          %v2018 = vunpack.c.h.b16 %v1379
          %v2019 = vunpack.c.l.b16 %v1380
          %v2020 = vunpack.c.h.b16 %v1380
          %v2021 = vunpack.c.l.b16 %v1381
          %v2022 = vunpack.c.h.b16 %v1381
          %v2023 = vunpack.c.l.b16 %v1382
          %v2024 = vunpack.c.h.b16 %v1382
          %v2025 = vunpack.c.l.b16 %v1383
          %v2026 = vunpack.c.h.b16 %v1383
          %v2027 = vunpack.c.l.b16 %v1384
          %v2028 = vunpack.c.h.b16 %v1384
          %v2029 = vunpack.c.l.b16 %v1385
          %v2030 = vunpack.c.h.b16 %v1385
          %v2031 = vunpack.c.l.b16 %v1386
          %v2032 = vunpack.c.h.b16 %v1386
          %v2033 = vunpack.c.l.b16 %v1387
          %v2034 = vunpack.c.h.b16 %v1387
          %v2035 = vunpack.c.l.b16 %v1388
          %v2036 = vunpack.c.h.b16 %v1388
          %v2037 = vunpack.c.l.b16 %v1389
          %v2038 = vunpack.c.h.b16 %v1389
          %v2039 = vunpack.c.l.b16 %v1390
          %v2040 = vunpack.c.h.b16 %v1390
          %v2041 = vunpack.c.l.b16 %v1391
          %v2042 = vunpack.c.h.b16 %v1391
          %v2043 = vunpack.c.l.b16 %v1392
          %v2044 = vunpack.c.h.b16 %v1392
          %v2045 = vunpack.c.l.b16 %v1393
          %v2046 = vunpack.c.h.b16 %v1393
          %v2047 = vunpack.c.l.b16 %v1394
          %v2048 = vunpack.c.h.b16 %v1394
          %v2049 = vunpack.c.l.b16 %v1395
          %v2050 = vunpack.c.h.b16 %v1395
          %v2051 = vunpack.c.l.b16 %v1396
          %v2052 = vunpack.c.h.b16 %v1396
          %v2053 = vunpack.c.l.b16 %v1397
          %v2054 = vunpack.c.h.b16 %v1397
          %v2055 = vunpack.c.l.b16 %v1398
          %v2056 = vunpack.c.h.b16 %v1398
          %v2057 = vunpack.c.l.b16 %v1399
          %v2058 = vunpack.c.h.b16 %v1399
          %v2059 = vunpack.c.l.b16 %v1400
          %v2060 = vunpack.c.h.b16 %v1400
          %v2061 = vunpack.c.l.b16 %v1401
          %v2062 = vunpack.c.h.b16 %v1401
          %v2063 = vunpack.c.l.b16 %v1402
          %v2064 = vunpack.c.h.b16 %v1402
          %v2065 = vunpack.c.l.b16 %v1403
          %v2066 = vunpack.c.h.b16 %v1403
          %v2067 = vunpack.c.l.b16 %v1404
          %v2068 = vunpack.c.h.b16 %v1404
          %v2069 = vunpack.c.l.b16 %v1405
          %v2070 = vunpack.c.h.b16 %v1405
          %v2071 = vunpack.c.l.b16 %v1406
          %v2072 = vunpack.c.h.b16 %v1406
          %v2073 = vunpack.c.l.b16 %v1407
          %v2074 = vunpack.c.h.b16 %v1407
          %v2075 = vunpack.c.l.b16 %v1408
          %v2076 = vunpack.c.h.b16 %v1408
          %v2077 = vunpack.c.l.b16 %v1409
          %v2078 = vunpack.c.h.b16 %v1409
          %v2079 = vunpack.c.l.b16 %v1410
          %v2080 = vunpack.c.h.b16 %v1410
          %v2081 = vunpack.c.l.b16 %v1411
          %v2082 = vunpack.c.h.b16 %v1411
          %v2083 = vunpack.c.l.b16 %v1412
          %v2084 = vunpack.c.h.b16 %v1412
          %v2085 = vunpack.c.l.b16 %v1413
          %v2086 = vunpack.c.h.b16 %v1413
          %v2087 = vunpack.c.l.b16 %v1414
          %v2088 = vunpack.c.h.b16 %v1414
          %v2089 = vunpack.c.l.b16 %v1415
          %v2090 = vunpack.c.h.b16 %v1415
          %v2091 = vunpack.c.l.b16 %v1416
          %v2092 = vunpack.c.h.b16 %v1416
          %v2093 = vunpack.c.l.b16 %v1417
          %v2094 = vunpack.c.h.b16 %v1417
          %v2095 = vunpack.c.l.b16 %v1418
          %v2096 = vunpack.c.h.b16 %v1418
          %v2097 = vunpack.c.l.b16 %v1419
          %v2098 = vunpack.c.h.b16 %v1419
          %v2099 = vunpack.c.l.b16 %v1420
          %v2100 = vunpack.c.h.b16 %v1420
          %v2101 = vunpack.c.l.b16 %v1421
          %v2102 = vunpack.c.h.b16 %v1421
          %v2103 = vunpack.c.l.b16 %v1422
          %v2104 = vunpack.c.h.b16 %v1422
          %v2105 = vunpack.c.l.b16 %v1423
          %v2106 = vunpack.c.h.b16 %v1423
          %v2107 = vunpack.c.l.b16 %v1424
          %v2108 = vunpack.c.h.b16 %v1424
          %v2109 = vunpack.c.l.b16 %v1425
          %v2110 = vunpack.c.h.b16 %v1425
          %v2111 = vunpack.c.l.b16 %v1426
          %v2112 = vunpack.c.h.b16 %v1426
          %v2113 = vunpack.c.l.b16 %v1427
          %v2114 = vunpack.c.h.b16 %v1427
          %v2115 = vunpack.c.l.b16 %v1428
          %v2116 = vunpack.c.h.b16 %v1428
          %v2117 = vunpack.c.l.b16 %v1429
          %v2118 = vunpack.c.h.b16 %v1429
          %v2119 = vunpack.c.l.b16 %v1430
          %v2120 = vunpack.c.h.b16 %v1430
          %v2121 = vunpack.c.l.b16 %v1431
          %v2122 = vunpack.c.h.b16 %v1431
          %v2123 = vunpack.c.l.b16 %v1432
          %v2124 = vunpack.c.h.b16 %v1432
          %v2125 = vunpack.c.l.b16 %v1433
          %v2126 = vunpack.c.h.b16 %v1433
          %v2127 = vunpack.c.l.b16 %v1434
          %v2128 = vunpack.c.h.b16 %v1434
          %v2129 = vunpack.c.l.b16 %v1435
          %v2130 = vunpack.c.h.b16 %v1435
          %v2131 = vunpack.c.l.b16 %v1436
          %v2132 = vunpack.c.h.b16 %v1436
          %v2133 = vunpack.c.l.b16 %v1437
          %v2134 = vunpack.c.h.b16 %v1437
          %v2135 = vunpack.c.l.b16 %v1438
          %v2136 = vunpack.c.h.b16 %v1438
          %v2137 = vunpack.c.l.b16 %v1439
          %v2138 = vunpack.c.h.b16 %v1439
          %v2139 = vunpack.c.l.b16 %v1440
          %v2140 = vunpack.c.h.b16 %v1440
          %v2141 = vunpack.c.l.b16 %v1441
          %v2142 = vunpack.c.h.b16 %v1441
          %v2143 = vunpack.c.l.b16 %v1442
          %v2144 = vunpack.c.h.b16 %v1442
          %v2145 = vunpack.c.l.b16 %v1443
          %v2146 = vunpack.c.h.b16 %v1443
          %v2147 = vunpack.c.l.b16 %v1444
          %v2148 = vunpack.c.h.b16 %v1444
          %v2149 = vunpack.c.l.b16 %v1445
          %v2150 = vunpack.c.h.b16 %v1445
          %v2151 = vunpack.c.l.b16 %v1446
          %v2152 = vunpack.c.h.b16 %v1446
          %v2153 = vunpack.c.l.b16 %v1447
          %v2154 = vunpack.c.h.b16 %v1447
          %v2155 = vunpack.c.l.b16 %v1448
          %v2156 = vunpack.c.h.b16 %v1448
          %v2157 = vunpack.c.l.b16 %v1449
          %v2158 = vunpack.c.h.b16 %v1449
          %v2159 = vunpack.c.l.b16 %v1450
          %v2160 = vunpack.c.h.b16 %v1450
          %v2161 = vunpack.c.l.b16 %v1451
          %v2162 = vunpack.c.h.b16 %v1451
          %v2163 = vunpack.c.l.b16 %v1452
          %v2164 = vunpack.c.h.b16 %v1452
          %v2165 = vunpack.c.l.b16 %v1453
          %v2166 = vunpack.c.h.b16 %v1453
          %v2167 = vunpack.c.l.b16 %v1454
          %v2168 = vunpack.c.h.b16 %v1454
          %v2169 = vunpack.c.l.b16 %v1455
          %v2170 = vunpack.c.h.b16 %v1455
          %v2171 = vunpack.c.l.b16 %v1456
          %v2172 = vunpack.c.h.b16 %v1456
          %v2173 = vunpack.c.l.b16 %v1457
          %v2174 = vunpack.c.h.b16 %v1457
          %v2175 = vunpack.c.l.b16 %v1458
          %v2176 = vunpack.c.h.b16 %v1458
          %v2177 = vunpack.c.l.b16 %v1459
          %v2178 = vunpack.c.h.b16 %v1459
          %v2179 = vunpack.c.l.b16 %v1460
          %v2180 = vunpack.c.h.b16 %v1460
          %v2181 = vunpack.c.l.b16 %v1461
          %v2182 = vunpack.c.h.b16 %v1461
          %v2183 = vunpack.c.l.b16 %v1462
          %v2184 = vunpack.c.h.b16 %v1462
          %v2185 = vunpack.c.l.b16 %v1463
          %v2186 = vunpack.c.h.b16 %v1463
          %v2187 = vunpack.c.l.b16 %v1464
          %v2188 = vunpack.c.h.b16 %v1464
          %v2189 = vunpack.c.l.b16 %v1465
          %v2190 = vunpack.c.h.b16 %v1465
          %v2191 = vunpack.c.l.b16 %v1466
          %v2192 = vunpack.c.h.b16 %v1466
          %v2193 = vunpack.c.l.b16 %v1467
          %v2194 = vunpack.c.h.b16 %v1467
          %v2195 = vunpack.c.l.b16 %v1468
          %v2196 = vunpack.c.h.b16 %v1468
          %v2197 = vunpack.c.l.b16 %v1469
          %v2198 = vunpack.c.h.b16 %v1469
          %v2199 = vunpack.c.l.b16 %v1470
          %v2200 = vunpack.c.h.b16 %v1470
          %v2201 = vunpack.c.l.b16 %v1471
          %v2202 = vunpack.c.h.b16 %v1471
          %v2203 = vunpack.c.l.b16 %v1472
          %v2204 = vunpack.c.h.b16 %v1472
          %v2205 = vunpack.c.l.b16 %v1473
          %v2206 = vunpack.c.h.b16 %v1473
          %v2207 = vunpack.c.l.b16 %v1474
          %v2208 = vunpack.c.h.b16 %v1474
          %v2209 = vunpack.c.l.b16 %v1475
          %v2210 = vunpack.c.h.b16 %v1475
          %v2211 = vunpack.c.l.b16 %v1476
          %v2212 = vunpack.c.h.b16 %v1476
          %v2213 = vunpack.c.l.b16 %v1477
          %v2214 = vunpack.c.h.b16 %v1477
          %v2215 = vunpack.c.l.b16 %v1478
          %v2216 = vunpack.c.h.b16 %v1478
          %v2217 = vunpack.c.l.b16 %v1479
          %v2218 = vunpack.c.h.b16 %v1479
          %v2219 = vunpack.c.l.b16 %v1480
          %v2220 = vunpack.c.h.b16 %v1480
          %v2221 = vunpack.c.l.b16 %v1481
          %v2222 = vunpack.c.h.b16 %v1481
          %v2223 = vunpack.c.l.b16 %v1482
          %v2224 = vunpack.c.h.b16 %v1482
          %v2225 = vunpack.c.l.b16 %v1483
          %v2226 = vunpack.c.h.b16 %v1483
          %v2227 = vunpack.c.l.b16 %v1484
          %v2228 = vunpack.c.h.b16 %v1484
          %v2229 = vunpack.c.l.b16 %v1485
          %v2230 = vunpack.c.h.b16 %v1485
          %v2231 = vunpack.c.l.b16 %v1486
          %v2232 = vunpack.c.h.b16 %v1486
          %v2233 = vunpack.c.l.b16 %v1487
          %v2234 = vunpack.c.h.b16 %v1487
          %v2235 = vunpack.c.l.b16 %v1488
          %v2236 = vunpack.c.h.b16 %v1488
          %v2237 = vunpack.c.l.b16 %v1489
          %v2238 = vunpack.c.h.b16 %v1489
          %v2239 = vunpack.c.l.b16 %v1490
          %v2240 = vunpack.c.h.b16 %v1490
          %v2241 = vunpack.c.l.b16 %v1491
          %v2242 = vunpack.c.h.b16 %v1491
          %v2243 = vunpack.c.l.b16 %v1492
          %v2244 = vunpack.c.h.b16 %v1492
          %v2245 = vunpack.c.l.b16 %v1493
          %v2246 = vunpack.c.h.b16 %v1493
          %v2247 = vunpack.c.l.b16 %v1494
          %v2248 = vunpack.c.h.b16 %v1494
          %v2249 = vunpack.c.l.b16 %v1495
          %v2250 = vunpack.c.h.b16 %v1495
          %v2251 = vunpack.c.l.b16 %v1496
          %v2252 = vunpack.c.h.b16 %v1496
          %v2253 = vunpack.c.l.b16 %v1497
          %v2254 = vunpack.c.h.b16 %v1497
          %v2255 = vunpack.c.l.b16 %v1498
          %v2256 = vunpack.c.h.b16 %v1498
          %v2257 = vunpack.c.l.b16 %v1499
          %v2258 = vunpack.c.h.b16 %v1499
          %v2259 = vunpack.c.l.b16 %v1500
          %v2260 = vunpack.c.h.b16 %v1500
          %v2261 = vunpack.c.l.b16 %v1501
          %v2262 = vunpack.c.h.b16 %v1501
          %v2263 = vunpack.c.l.b16 %v1502
          %v2264 = vunpack.c.h.b16 %v1502
          %v2265 = vunpack.c.l.b16 %v1503
          %v2266 = vunpack.c.h.b16 %v1503
          %v2267 = vunpack.c.l.b16 %v1504
          %v2268 = vunpack.c.h.b16 %v1504
          %v2269 = vunpack.c.l.b16 %v1505
          %v2270 = vunpack.c.h.b16 %v1505
          %v2271 = vunpack.c.l.b16 %v1506
          %v2272 = vunpack.c.h.b16 %v1506
          %v2273 = vunpack.c.l.b16 %v1507
          %v2274 = vunpack.c.h.b16 %v1507
          %v2275 = vunpack.c.l.b16 %v1508
          %v2276 = vunpack.c.h.b16 %v1508
          %v2277 = vunpack.c.l.b16 %v1509
          %v2278 = vunpack.c.h.b16 %v1509
          %v2279 = vunpack.c.l.b16 %v1510
          %v2280 = vunpack.c.h.b16 %v1510
          %v2281 = vunpack.c.l.b16 %v1511
          %v2282 = vunpack.c.h.b16 %v1511
          %v2283 = vunpack.c.l.b16 %v1512
          %v2284 = vunpack.c.h.b16 %v1512
          %v2285 = vunpack.c.l.b16 %v1513
          %v2286 = vunpack.c.h.b16 %v1513
          %v2287 = vunpack.c.l.b16 %v1514
          %v2288 = vunpack.c.h.b16 %v1514
          %v2289 = vunpack.c.l.b16 %v1515
          %v2290 = vunpack.c.h.b16 %v1515
          %v2291 = vunpack.c.l.b16 %v1516
          %v2292 = vunpack.c.h.b16 %v1516
          %v2293 = vunpack.c.l.b16 %v1517
          %v2294 = vunpack.c.h.b16 %v1517
          %v2295 = vunpack.c.l.b16 %v1518
          %v2296 = vunpack.c.h.b16 %v1518
          %v2297 = vunpack.c.l.b16 %v1519
          %v2298 = vunpack.c.h.b16 %v1519
          %v2299 = vunpack.c.l.b16 %v1520
          %v2300 = vunpack.c.h.b16 %v1520
          %v2301 = vunpack.c.l.b16 %v1521
          %v2302 = vunpack.c.h.b16 %v1521
          %v2303 = vunpack.c.l.b16 %v1522
          %v2304 = vunpack.c.h.b16 %v1522
          %v2305 = vunpack.c.l.b16 %v1523
          %v2306 = vunpack.c.h.b16 %v1523
          %v2307 = vunpack.c.l.b16 %v1524
          %v2308 = vunpack.c.h.b16 %v1524
          %v2309 = vunpack.c.l.b16 %v1525
          %v2310 = vunpack.c.h.b16 %v1525
          %v2311 = vunpack.c.l.b16 %v1526
          %v2312 = vunpack.c.h.b16 %v1526
          %v2313 = vunpack.c.l.b16 %v1527
          %v2314 = vunpack.c.h.b16 %v1527
          %v2315 = vunpack.c.l.b16 %v1528
          %v2316 = vunpack.c.h.b16 %v1528
          %v2317 = vunpack.c.l.b16 %v1529
          %v2318 = vunpack.c.h.b16 %v1529
          %v2319 = vunpack.c.l.b16 %v1530
          %v2320 = vunpack.c.h.b16 %v1530
          %v2321 = vunpack.c.l.b16 %v1531
          %v2322 = vunpack.c.h.b16 %v1531
          %v2323 = vunpack.c.l.b16 %v1532
          %v2324 = vunpack.c.h.b16 %v1532
          %v2325 = vunpack.c.l.b16 %v1533
          %v2326 = vunpack.c.h.b16 %v1533
          %v2327 = vunpack.c.l.b16 %v1534
          %v2328 = vunpack.c.h.b16 %v1534
          %v2329 = vunpack.c.l.b16 %v1535
          %v2330 = vunpack.c.h.b16 %v1535
          %v2331 = vunpack.c.l.b16 %v1536
          %v2332 = vunpack.c.h.b16 %v1536
          %v2333 = vunpack.c.l.b16 %v1537
          %v2334 = vunpack.c.h.b16 %v1537
          %v2335 = vunpack.c.l.b16 %v1538
          %v2336 = vunpack.c.h.b16 %v1538
          %v2337 = vunpack.c.l.b16 %v1539
          %v2338 = vunpack.c.h.b16 %v1539
          %v2339 = vunpack.c.l.b16 %v1540
          %v2340 = vunpack.c.h.b16 %v1540
          %v2341 = vunpack.c.l.b16 %v1541
          %v2342 = vunpack.c.h.b16 %v1541
          %v2343 = vunpack.c.l.b16 %v1542
          %v2344 = vunpack.c.h.b16 %v1542
          %v2345 = vunpack.c.l.b16 %v1543
          %v2346 = vunpack.c.h.b16 %v1543
          %v2347 = vunpack.c.l.b16 %v1544
          %v2348 = vunpack.c.h.b16 %v1544
          %v2349 = vunpack.c.l.b16 %v1545
          %v2350 = vunpack.c.h.b16 %v1545
          %v2351 = vunpack.c.l.b16 %v1546
          %v2352 = vunpack.c.h.b16 %v1546
          %v2353 = vunpack.c.l.b16 %v1547
          %v2354 = vunpack.c.h.b16 %v1547
          %v2355 = vunpack.c.l.b16 %v1548
          %v2356 = vunpack.c.h.b16 %v1548
          %v2357 = vunpack.c.l.b16 %v1549
          %v2358 = vunpack.c.h.b16 %v1549
          %v2359 = vunpack.c.l.b16 %v1550
          %v2360 = vunpack.c.h.b16 %v1550
          %v2361 = vunpack.c.l.b16 %v1551
          %v2362 = vunpack.c.h.b16 %v1551
          %v2363 = vunpack.c.l.b16 %v1552
          %v2364 = vunpack.c.h.b16 %v1552
          %v2365 = vunpack.c.l.b16 %v1553
          %v2366 = vunpack.c.h.b16 %v1553
          %v2367 = vunpack.c.l.b16 %v1554
          %v2368 = vunpack.c.h.b16 %v1554
          %v2369 = vunpack.c.l.b16 %v1555
          %v2370 = vunpack.c.h.b16 %v1555
          %v2371 = vunpack.c.l.b16 %v1556
          %v2372 = vunpack.c.h.b16 %v1556
          %v2373 = vunpack.c.l.b16 %v1557
          %v2374 = vunpack.c.h.b16 %v1557
          %v2375 = vunpack.c.l.b16 %v1558
          %v2376 = vunpack.c.h.b16 %v1558
          %v2377 = vunpack.c.l.b16 %v1559
          %v2378 = vunpack.c.h.b16 %v1559
          %v2379 = vunpack.c.l.b16 %v1560
          %v2380 = vunpack.c.h.b16 %v1560
          %v2381 = vunpack.c.l.b16 %v1561
          %v2382 = vunpack.c.h.b16 %v1561
          %v2383 = vunpack.c.l.b16 %v1562
          %v2384 = vunpack.c.h.b16 %v1562
          %v2385 = vunpack.c.l.b16 %v1563
          %v2386 = vunpack.c.h.b16 %v1563
          %v2387 = vunpack.c.l.b16 %v1564
          %v2388 = vunpack.c.h.b16 %v1564
          %v2389 = vunpack.c.l.b16 %v1565
          %v2390 = vunpack.c.h.b16 %v1565
          %v2391 = vunpack.c.l.b16 %v1566
          %v2392 = vunpack.c.h.b16 %v1566
          %v2393 = vunpack.c.l.b16 %v1567
          %v2394 = vunpack.c.h.b16 %v1567
          %v2395 = vunpack.c.l.b16 %v1568
          %v2396 = vunpack.c.h.b16 %v1568
          %v2397 = vunpack.c.l.b16 %v1569
          %v2398 = vunpack.c.h.b16 %v1569
          %v2399 = vunpack.c.l.b16 %v1570
          %v2400 = vunpack.c.h.b16 %v1570
          %v2401 = vunpack.c.l.b16 %v1571
          %v2402 = vunpack.c.h.b16 %v1571
          %v2403 = vunpack.c.l.b16 %v1572
          %v2404 = vunpack.c.h.b16 %v1572
          %v2405 = vunpack.c.l.b16 %v1573
          %v2406 = vunpack.c.h.b16 %v1573
          %v2407 = vunpack.c.l.b16 %v1574
          %v2408 = vunpack.c.h.b16 %v1574
          %v2409 = vunpack.c.l.b16 %v1575
          %v2410 = vunpack.c.h.b16 %v1575
          %v2411 = vunpack.c.l.b16 %v1576
          %v2412 = vunpack.c.h.b16 %v1576
          %v2413 = vunpack.c.l.b16 %v1577
          %v2414 = vunpack.c.h.b16 %v1577
          %v2415 = vunpack.c.l.b16 %v1578
          %v2416 = vunpack.c.h.b16 %v1578
          %v2417 = vunpack.c.l.b16 %v1579
          %v2418 = vunpack.c.h.b16 %v1579
          %v2419 = vunpack.c.l.b16 %v1580
          %v2420 = vunpack.c.h.b16 %v1580
          %v2421 = vunpack.c.l.b16 %v1581
          %v2422 = vunpack.c.h.b16 %v1581
          %v2423 = vunpack.c.l.b16 %v1582
          %v2424 = vunpack.c.h.b16 %v1582
          %v2425 = vunpack.c.l.b16 %v1583
          %v2426 = vunpack.c.h.b16 %v1583
          %v2427 = vunpack.c.l.b16 %v1584
          %v2428 = vunpack.c.h.b16 %v1584
          %v2429 = vunpack.c.l.b16 %v1585
          %v2430 = vunpack.c.h.b16 %v1585
          %v2431 = vpack.c.b16 %v1927, %v1919
          %v2432 = vpack.c.b16 %v1928, %v1920
          %v2433 = vpack.c.b16 %v1929, %v1921
          %v2434 = vpack.c.b16 %v1930, %v1922
          %v2435 = vpack.c.b16 %v1931, %v1923
          %v2436 = vpack.c.b16 %v1932, %v1924
          %v2437 = vpack.c.b16 %v1933, %v1925
          %v2438 = vpack.c.b16 %v1934, %v1926
          %v2439 = vpack.c.b16 %v1943, %v1935
          %v2440 = vpack.c.b16 %v1944, %v1936
          %v2441 = vpack.c.b16 %v1945, %v1937
          %v2442 = vpack.c.b16 %v1946, %v1938
          %v2443 = vpack.c.b16 %v1947, %v1939
          %v2444 = vpack.c.b16 %v1948, %v1940
          %v2445 = vpack.c.b16 %v1949, %v1941
          %v2446 = vpack.c.b16 %v1950, %v1942
          %v2447 = vpack.c.b16 %v1959, %v1951
          %v2448 = vpack.c.b16 %v1960, %v1952
          %v2449 = vpack.c.b16 %v1961, %v1953
          %v2450 = vpack.c.b16 %v1962, %v1954
          %v2451 = vpack.c.b16 %v1963, %v1955
          %v2452 = vpack.c.b16 %v1964, %v1956
          %v2453 = vpack.c.b16 %v1965, %v1957
          %v2454 = vpack.c.b16 %v1966, %v1958
          %v2455 = vpack.c.b16 %v1975, %v1967
          %v2456 = vpack.c.b16 %v1976, %v1968
          %v2457 = vpack.c.b16 %v1977, %v1969
          %v2458 = vpack.c.b16 %v1978, %v1970
          %v2459 = vpack.c.b16 %v1979, %v1971
          %v2460 = vpack.c.b16 %v1980, %v1972
          %v2461 = vpack.c.b16 %v1981, %v1973
          %v2462 = vpack.c.b16 %v1982, %v1974
          %v2463 = vpack.c.b16 %v1991, %v1983
          %v2464 = vpack.c.b16 %v1992, %v1984
          %v2465 = vpack.c.b16 %v1993, %v1985
          %v2466 = vpack.c.b16 %v1994, %v1986
          %v2467 = vpack.c.b16 %v1995, %v1987
          %v2468 = vpack.c.b16 %v1996, %v1988
          %v2469 = vpack.c.b16 %v1997, %v1989
          %v2470 = vpack.c.b16 %v1998, %v1990
          %v2471 = vpack.c.b16 %v2007, %v1999
          %v2472 = vpack.c.b16 %v2008, %v2000
          %v2473 = vpack.c.b16 %v2009, %v2001
          %v2474 = vpack.c.b16 %v2010, %v2002
          %v2475 = vpack.c.b16 %v2011, %v2003
          %v2476 = vpack.c.b16 %v2012, %v2004
          %v2477 = vpack.c.b16 %v2013, %v2005
          %v2478 = vpack.c.b16 %v2014, %v2006
          %v2479 = vpack.c.b16 %v2023, %v2015
          %v2480 = vpack.c.b16 %v2024, %v2016
          %v2481 = vpack.c.b16 %v2025, %v2017
          %v2482 = vpack.c.b16 %v2026, %v2018
          %v2483 = vpack.c.b16 %v2027, %v2019
          %v2484 = vpack.c.b16 %v2028, %v2020
          %v2485 = vpack.c.b16 %v2029, %v2021
          %v2486 = vpack.c.b16 %v2030, %v2022
          %v2487 = vpack.c.b16 %v2039, %v2031
          %v2488 = vpack.c.b16 %v2040, %v2032
          %v2489 = vpack.c.b16 %v2041, %v2033
          %v2490 = vpack.c.b16 %v2042, %v2034
          %v2491 = vpack.c.b16 %v2043, %v2035
          %v2492 = vpack.c.b16 %v2044, %v2036
          %v2493 = vpack.c.b16 %v2045, %v2037
          %v2494 = vpack.c.b16 %v2046, %v2038
          %v2495 = vpack.c.b16 %v2055, %v2047
          %v2496 = vpack.c.b16 %v2056, %v2048
          %v2497 = vpack.c.b16 %v2057, %v2049
          %v2498 = vpack.c.b16 %v2058, %v2050
          %v2499 = vpack.c.b16 %v2059, %v2051
          %v2500 = vpack.c.b16 %v2060, %v2052
          %v2501 = vpack.c.b16 %v2061, %v2053
          %v2502 = vpack.c.b16 %v2062, %v2054
          %v2503 = vpack.c.b16 %v2071, %v2063
          %v2504 = vpack.c.b16 %v2072, %v2064
          %v2505 = vpack.c.b16 %v2073, %v2065
          %v2506 = vpack.c.b16 %v2074, %v2066
          %v2507 = vpack.c.b16 %v2075, %v2067
          %v2508 = vpack.c.b16 %v2076, %v2068
          %v2509 = vpack.c.b16 %v2077, %v2069
          %v2510 = vpack.c.b16 %v2078, %v2070
          %v2511 = vpack.c.b16 %v2087, %v2079
          %v2512 = vpack.c.b16 %v2088, %v2080
          %v2513 = vpack.c.b16 %v2089, %v2081
          %v2514 = vpack.c.b16 %v2090, %v2082
          %v2515 = vpack.c.b16 %v2091, %v2083
          %v2516 = vpack.c.b16 %v2092, %v2084
          %v2517 = vpack.c.b16 %v2093, %v2085
          %v2518 = vpack.c.b16 %v2094, %v2086
          %v2519 = vpack.c.b16 %v2103, %v2095
          %v2520 = vpack.c.b16 %v2104, %v2096
          %v2521 = vpack.c.b16 %v2105, %v2097
          %v2522 = vpack.c.b16 %v2106, %v2098
          %v2523 = vpack.c.b16 %v2107, %v2099
          %v2524 = vpack.c.b16 %v2108, %v2100
          %v2525 = vpack.c.b16 %v2109, %v2101
          %v2526 = vpack.c.b16 %v2110, %v2102
          %v2527 = vpack.c.b16 %v2119, %v2111
          %v2528 = vpack.c.b16 %v2120, %v2112
          %v2529 = vpack.c.b16 %v2121, %v2113
          %v2530 = vpack.c.b16 %v2122, %v2114
          %v2531 = vpack.c.b16 %v2123, %v2115
          %v2532 = vpack.c.b16 %v2124, %v2116
          %v2533 = vpack.c.b16 %v2125, %v2117
          %v2534 = vpack.c.b16 %v2126, %v2118
          %v2535 = vpack.c.b16 %v2135, %v2127
          %v2536 = vpack.c.b16 %v2136, %v2128
          %v2537 = vpack.c.b16 %v2137, %v2129
          %v2538 = vpack.c.b16 %v2138, %v2130
          %v2539 = vpack.c.b16 %v2139, %v2131
          %v2540 = vpack.c.b16 %v2140, %v2132
          %v2541 = vpack.c.b16 %v2141, %v2133
          %v2542 = vpack.c.b16 %v2142, %v2134
          %v2543 = vpack.c.b16 %v2151, %v2143
          %v2544 = vpack.c.b16 %v2152, %v2144
          %v2545 = vpack.c.b16 %v2153, %v2145
          %v2546 = vpack.c.b16 %v2154, %v2146
          %v2547 = vpack.c.b16 %v2155, %v2147
          %v2548 = vpack.c.b16 %v2156, %v2148
          %v2549 = vpack.c.b16 %v2157, %v2149
          %v2550 = vpack.c.b16 %v2158, %v2150
          %v2551 = vpack.c.b16 %v2167, %v2159
          %v2552 = vpack.c.b16 %v2168, %v2160
          %v2553 = vpack.c.b16 %v2169, %v2161
          %v2554 = vpack.c.b16 %v2170, %v2162
          %v2555 = vpack.c.b16 %v2171, %v2163
          %v2556 = vpack.c.b16 %v2172, %v2164
          %v2557 = vpack.c.b16 %v2173, %v2165
          %v2558 = vpack.c.b16 %v2174, %v2166
          %v2559 = vpack.c.b16 %v2183, %v2175
          %v2560 = vpack.c.b16 %v2184, %v2176
          %v2561 = vpack.c.b16 %v2185, %v2177
          %v2562 = vpack.c.b16 %v2186, %v2178
          %v2563 = vpack.c.b16 %v2187, %v2179
          %v2564 = vpack.c.b16 %v2188, %v2180
          %v2565 = vpack.c.b16 %v2189, %v2181
          %v2566 = vpack.c.b16 %v2190, %v2182
          %v2567 = vpack.c.b16 %v2199, %v2191
          %v2568 = vpack.c.b16 %v2200, %v2192
          %v2569 = vpack.c.b16 %v2201, %v2193
          %v2570 = vpack.c.b16 %v2202, %v2194
          %v2571 = vpack.c.b16 %v2203, %v2195
          %v2572 = vpack.c.b16 %v2204, %v2196
          %v2573 = vpack.c.b16 %v2205, %v2197
          %v2574 = vpack.c.b16 %v2206, %v2198
          %v2575 = vpack.c.b16 %v2215, %v2207
          %v2576 = vpack.c.b16 %v2216, %v2208
          %v2577 = vpack.c.b16 %v2217, %v2209
          %v2578 = vpack.c.b16 %v2218, %v2210
          %v2579 = vpack.c.b16 %v2219, %v2211
          %v2580 = vpack.c.b16 %v2220, %v2212
          %v2581 = vpack.c.b16 %v2221, %v2213
          %v2582 = vpack.c.b16 %v2222, %v2214
          %v2583 = vpack.c.b16 %v2231, %v2223
          %v2584 = vpack.c.b16 %v2232, %v2224
          %v2585 = vpack.c.b16 %v2233, %v2225
          %v2586 = vpack.c.b16 %v2234, %v2226
          %v2587 = vpack.c.b16 %v2235, %v2227
          %v2588 = vpack.c.b16 %v2236, %v2228
          %v2589 = vpack.c.b16 %v2237, %v2229
          %v2590 = vpack.c.b16 %v2238, %v2230
          %v2591 = vpack.c.b16 %v2247, %v2239
          %v2592 = vpack.c.b16 %v2248, %v2240
          %v2593 = vpack.c.b16 %v2249, %v2241
          %v2594 = vpack.c.b16 %v2250, %v2242
          %v2595 = vpack.c.b16 %v2251, %v2243
          %v2596 = vpack.c.b16 %v2252, %v2244
          %v2597 = vpack.c.b16 %v2253, %v2245
          %v2598 = vpack.c.b16 %v2254, %v2246
          %v2599 = vpack.c.b16 %v2263, %v2255
          %v2600 = vpack.c.b16 %v2264, %v2256
          %v2601 = vpack.c.b16 %v2265, %v2257
          %v2602 = vpack.c.b16 %v2266, %v2258
          %v2603 = vpack.c.b16 %v2267, %v2259
          %v2604 = vpack.c.b16 %v2268, %v2260
          %v2605 = vpack.c.b16 %v2269, %v2261
          %v2606 = vpack.c.b16 %v2270, %v2262
          %v2607 = vpack.c.b16 %v2279, %v2271
          %v2608 = vpack.c.b16 %v2280, %v2272
          %v2609 = vpack.c.b16 %v2281, %v2273
          %v2610 = vpack.c.b16 %v2282, %v2274
          %v2611 = vpack.c.b16 %v2283, %v2275
          %v2612 = vpack.c.b16 %v2284, %v2276
          %v2613 = vpack.c.b16 %v2285, %v2277
          %v2614 = vpack.c.b16 %v2286, %v2278
          %v2615 = vpack.c.b16 %v2295, %v2287
          %v2616 = vpack.c.b16 %v2296, %v2288
          %v2617 = vpack.c.b16 %v2297, %v2289
          %v2618 = vpack.c.b16 %v2298, %v2290
          %v2619 = vpack.c.b16 %v2299, %v2291
          %v2620 = vpack.c.b16 %v2300, %v2292
          %v2621 = vpack.c.b16 %v2301, %v2293
          %v2622 = vpack.c.b16 %v2302, %v2294
          %v2623 = vpack.c.b16 %v2311, %v2303
          %v2624 = vpack.c.b16 %v2312, %v2304
          %v2625 = vpack.c.b16 %v2313, %v2305
          %v2626 = vpack.c.b16 %v2314, %v2306
          %v2627 = vpack.c.b16 %v2315, %v2307
          %v2628 = vpack.c.b16 %v2316, %v2308
          %v2629 = vpack.c.b16 %v2317, %v2309
          %v2630 = vpack.c.b16 %v2318, %v2310
          %v2631 = vpack.c.b16 %v2327, %v2319
          %v2632 = vpack.c.b16 %v2328, %v2320
          %v2633 = vpack.c.b16 %v2329, %v2321
          %v2634 = vpack.c.b16 %v2330, %v2322
          %v2635 = vpack.c.b16 %v2331, %v2323
          %v2636 = vpack.c.b16 %v2332, %v2324
          %v2637 = vpack.c.b16 %v2333, %v2325
          %v2638 = vpack.c.b16 %v2334, %v2326
          %v2639 = vpack.c.b16 %v2343, %v2335
          %v2640 = vpack.c.b16 %v2344, %v2336
          %v2641 = vpack.c.b16 %v2345, %v2337
          %v2642 = vpack.c.b16 %v2346, %v2338
          %v2643 = vpack.c.b16 %v2347, %v2339
          %v2644 = vpack.c.b16 %v2348, %v2340
          %v2645 = vpack.c.b16 %v2349, %v2341
          %v2646 = vpack.c.b16 %v2350, %v2342
          %v2647 = vpack.c.b16 %v2359, %v2351
          %v2648 = vpack.c.b16 %v2360, %v2352
          %v2649 = vpack.c.b16 %v2361, %v2353
          %v2650 = vpack.c.b16 %v2362, %v2354
          %v2651 = vpack.c.b16 %v2363, %v2355
          %v2652 = vpack.c.b16 %v2364, %v2356
          %v2653 = vpack.c.b16 %v2365, %v2357
          %v2654 = vpack.c.b16 %v2366, %v2358
          %v2655 = vpack.c.b16 %v2375, %v2367
          %v2656 = vpack.c.b16 %v2376, %v2368
          %v2657 = vpack.c.b16 %v2377, %v2369
          %v2658 = vpack.c.b16 %v2378, %v2370
          %v2659 = vpack.c.b16 %v2379, %v2371
          %v2660 = vpack.c.b16 %v2380, %v2372
          %v2661 = vpack.c.b16 %v2381, %v2373
          %v2662 = vpack.c.b16 %v2382, %v2374
          %v2663 = vpack.c.b16 %v2391, %v2383
          %v2664 = vpack.c.b16 %v2392, %v2384
          %v2665 = vpack.c.b16 %v2393, %v2385
          %v2666 = vpack.c.b16 %v2394, %v2386
          %v2667 = vpack.c.b16 %v2395, %v2387
          %v2668 = vpack.c.b16 %v2396, %v2388
          %v2669 = vpack.c.b16 %v2397, %v2389
          %v2670 = vpack.c.b16 %v2398, %v2390
          %v2671 = vpack.c.b16 %v2407, %v2399
          %v2672 = vpack.c.b16 %v2408, %v2400
          %v2673 = vpack.c.b16 %v2409, %v2401
          %v2674 = vpack.c.b16 %v2410, %v2402
          %v2675 = vpack.c.b16 %v2411, %v2403
          %v2676 = vpack.c.b16 %v2412, %v2404
          %v2677 = vpack.c.b16 %v2413, %v2405
          %v2678 = vpack.c.b16 %v2414, %v2406
          %v2679 = vpack.c.b16 %v2423, %v2415
          %v2680 = vpack.c.b16 %v2424, %v2416
          %v2681 = vpack.c.b16 %v2425, %v2417
          %v2682 = vpack.c.b16 %v2426, %v2418
          %v2683 = vpack.c.b16 %v2427, %v2419
          %v2684 = vpack.c.b16 %v2428, %v2420
          %v2685 = vpack.c.b16 %v2429, %v2421
          %v2686 = vpack.c.b16 %v2430, %v2422
          %2943 = vmatprep.subr.bf16.mxu0 %v2432
          %2944 = vmatpush1.bf16.msra.mxu0 %v2431
          %2945 = vmatprep.subr.bf16.mxu0 %v2440
          %2946 = vmatpush1.bf16.msra.mxu0 %v2439
          %2947 = vmatprep.subr.bf16.mxu0 %v2448
          %2948 = vmatpush1.bf16.msra.mxu0 %v2447
          %2949 = vmatprep.subr.bf16.mxu0 %v2456
          %2950 = vmatpush1.bf16.msra.mxu0 %v2455
          %2951 = vmatprep.subr.bf16.mxu0 %v2464
          %2952 = vmatpush1.bf16.msra.mxu0 %v2463
          %2953 = vmatprep.subr.bf16.mxu0 %v2472
          %2954 = vmatpush1.bf16.msra.mxu0 %v2471
          %2955 = vmatprep.subr.bf16.mxu0 %v2480
          %2956 = vmatpush1.bf16.msra.mxu0 %v2479
          %2957 = vmatprep.subr.bf16.mxu0 %v2488
          %2958 = vmatpush1.bf16.msra.mxu0 %v2487
          %2959 = vmatprep.subr.bf16.mxu0 %v2496
          %2960 = vmatpush1.bf16.msra.mxu0 %v2495
          %2961 = vmatprep.subr.bf16.mxu0 %v2504
          %2962 = vmatpush1.bf16.msra.mxu0 %v2503
          %2963 = vmatprep.subr.bf16.mxu0 %v2512
          %2964 = vmatpush1.bf16.msra.mxu0 %v2511
          %2965 = vmatprep.subr.bf16.mxu0 %v2520
          %2966 = vmatpush1.bf16.msra.mxu0 %v2519
          %2967 = vmatprep.subr.bf16.mxu0 %v2528
          %2968 = vmatpush1.bf16.msra.mxu0 %v2527
          %2969 = vmatprep.subr.bf16.mxu0 %v2536
          %2970 = vmatpush1.bf16.msra.mxu0 %v2535
          %2971 = vmatprep.subr.bf16.mxu0 %v2544
          %2972 = vmatpush1.bf16.msra.mxu0 %v2543
          %2973 = vmatprep.subr.bf16.mxu0 %v2552
          %2974 = vmatpush1.bf16.msra.mxu0 %v2551
          %2975 = vmatprep.mubr.bf16.mxu0 %v1327
          %2976 = vmatmul.mubr.bf16.gmra.mrb[0].mxu0 %v1326
          %v2977 = vpop.f32.mrb[0].mxu0
          %v2978 = vadd.f32 %v1634, %v2977
          %v2979 = vpop.f32.mrb[0].mxu0
          %v2980 = vadd.f32 %v1638, %v2979
          %v2981 = vpop.f32.mrb[0].mxu0
          %v2982 = vpop.f32.mrb[0].mxu0
          %2983 = vdwg.mxu0
          %2984 = vmatprep.subr.bf16.mxu0 %v2560
          %2985 = vmatpush1.bf16.msra.mxu0 %v2559
          %2986 = vmatprep.subr.bf16.mxu0 %v2568
          %2987 = vmatpush1.bf16.msra.mxu0 %v2567
          %2988 = vmatprep.subr.bf16.mxu0 %v2576
          %2989 = vmatpush1.bf16.msra.mxu0 %v2575
          %2990 = vmatprep.subr.bf16.mxu0 %v2584
          %2991 = vmatpush1.bf16.msra.mxu0 %v2583
          %2992 = vmatprep.subr.bf16.mxu0 %v2592
          %2993 = vmatpush1.bf16.msra.mxu0 %v2591
          %2994 = vmatprep.subr.bf16.mxu0 %v2600
          %2995 = vmatpush1.bf16.msra.mxu0 %v2599
          %2996 = vmatprep.subr.bf16.mxu0 %v2608
          %2997 = vmatpush1.bf16.msra.mxu0 %v2607
          %2998 = vmatprep.subr.bf16.mxu0 %v2616
          %2999 = vmatpush1.bf16.msra.mxu0 %v2615
          %3000 = vmatprep.subr.bf16.mxu0 %v2624
          %3001 = vmatpush1.bf16.msra.mxu0 %v2623
          %3002 = vmatprep.subr.bf16.mxu0 %v2632
          %3003 = vmatpush1.bf16.msra.mxu0 %v2631
          %3004 = vmatprep.subr.bf16.mxu0 %v2640
          %3005 = vmatpush1.bf16.msra.mxu0 %v2639
          %3006 = vmatprep.subr.bf16.mxu0 %v2648
          %3007 = vmatpush1.bf16.msra.mxu0 %v2647
          %3008 = vmatprep.subr.bf16.mxu0 %v2656
          %3009 = vmatpush1.bf16.msra.mxu0 %v2655
          %3010 = vmatprep.subr.bf16.mxu0 %v2664
          %3011 = vmatpush1.bf16.msra.mxu0 %v2663
          %3012 = vmatprep.subr.bf16.mxu0 %v2672
          %3013 = vmatpush1.bf16.msra.mxu0 %v2671
          %3014 = vmatprep.subr.bf16.mxu0 %v2680
          %3015 = vmatpush1.bf16.msra.mxu0 %v2679
          %3016 = vmatprep.mubr.bf16.mxu0 %v1329
          %3017 = vmatmul.mubr.bf16.gmra.mrb[0].mxu0 %v1328
          %v3018 = vpop.f32.mrb[0].mxu0
          %v3019 = vadd.f32 %v2978, %v3018
          %v3020 = vpop.f32.mrb[0].mxu0
          %v3021 = vadd.f32 %v2980, %v3020
          %v3022 = vpop.f32.mrb[0].mxu0
          %v3023 = vpop.f32.mrb[0].mxu0
          %3024 = vdwg.mxu0
          %3025 = vmatprep.subr.bf16.mxu0 %v2434
          %3026 = vmatpush1.bf16.msra.mxu0 %v2433
          %3027 = vmatprep.subr.bf16.mxu0 %v2442
          %3028 = vmatpush1.bf16.msra.mxu0 %v2441
          %3029 = vmatprep.subr.bf16.mxu0 %v2450
          %3030 = vmatpush1.bf16.msra.mxu0 %v2449
          %3031 = vmatprep.subr.bf16.mxu0 %v2458
          %3032 = vmatpush1.bf16.msra.mxu0 %v2457
          %3033 = vmatprep.subr.bf16.mxu0 %v2466
          %3034 = vmatpush1.bf16.msra.mxu0 %v2465
          %3035 = vmatprep.subr.bf16.mxu0 %v2474
          %3036 = vmatpush1.bf16.msra.mxu0 %v2473
          %3037 = vmatprep.subr.bf16.mxu0 %v2482
          %3038 = vmatpush1.bf16.msra.mxu0 %v2481
          %3039 = vmatprep.subr.bf16.mxu0 %v2490
          %3040 = vmatpush1.bf16.msra.mxu0 %v2489
          %3041 = vmatprep.subr.bf16.mxu0 %v2498
          %3042 = vmatpush1.bf16.msra.mxu0 %v2497
          %3043 = vmatprep.subr.bf16.mxu0 %v2506
          %3044 = vmatpush1.bf16.msra.mxu0 %v2505
          %3045 = vmatprep.subr.bf16.mxu0 %v2514
          %3046 = vmatpush1.bf16.msra.mxu0 %v2513
          %3047 = vmatprep.subr.bf16.mxu0 %v2522
          %3048 = vmatpush1.bf16.msra.mxu0 %v2521
          %3049 = vmatprep.subr.bf16.mxu0 %v2530
          %3050 = vmatpush1.bf16.msra.mxu0 %v2529
          %3051 = vmatprep.subr.bf16.mxu0 %v2538
          %3052 = vmatpush1.bf16.msra.mxu0 %v2537
          %3053 = vmatprep.subr.bf16.mxu0 %v2546
          %3054 = vmatpush1.bf16.msra.mxu0 %v2545
          %3055 = vmatprep.subr.bf16.mxu0 %v2554
          %3056 = vmatpush1.bf16.msra.mxu0 %v2553
          %3057 = vmatprep.mubr.bf16.mxu0 %v1327
          %3058 = vmatmul.mubr.bf16.gmra.mrb[0].mxu0 %v1326
          %v3059 = vpop.f32.mrb[0].mxu0
          %v3060 = vadd.f32 %v1642, %v3059
          %v3061 = vpop.f32.mrb[0].mxu0
          %v3062 = vadd.f32 %v1646, %v3061
          %v3063 = vpop.f32.mrb[0].mxu0
          %v3064 = vpop.f32.mrb[0].mxu0
          %3065 = vdwg.mxu0
          %3066 = vmatprep.subr.bf16.mxu0 %v2562
          %3067 = vmatpush1.bf16.msra.mxu0 %v2561
          %3068 = vmatprep.subr.bf16.mxu0 %v2570
          %3069 = vmatpush1.bf16.msra.mxu0 %v2569
          %3070 = vmatprep.subr.bf16.mxu0 %v2578
          %3071 = vmatpush1.bf16.msra.mxu0 %v2577
          %3072 = vmatprep.subr.bf16.mxu0 %v2586
          %3073 = vmatpush1.bf16.msra.mxu0 %v2585
          %3074 = vmatprep.subr.bf16.mxu0 %v2594
          %3075 = vmatpush1.bf16.msra.mxu0 %v2593
          %3076 = vmatprep.subr.bf16.mxu0 %v2602
          %3077 = vmatpush1.bf16.msra.mxu0 %v2601
          %3078 = vmatprep.subr.bf16.mxu0 %v2610
          %3079 = vmatpush1.bf16.msra.mxu0 %v2609
          %3080 = vmatprep.subr.bf16.mxu0 %v2618
          %3081 = vmatpush1.bf16.msra.mxu0 %v2617
          %3082 = vmatprep.subr.bf16.mxu0 %v2626
          %3083 = vmatpush1.bf16.msra.mxu0 %v2625
          %3084 = vmatprep.subr.bf16.mxu0 %v2634
          %3085 = vmatpush1.bf16.msra.mxu0 %v2633
          %3086 = vmatprep.subr.bf16.mxu0 %v2642
          %3087 = vmatpush1.bf16.msra.mxu0 %v2641
          %3088 = vmatprep.subr.bf16.mxu0 %v2650
          %3089 = vmatpush1.bf16.msra.mxu0 %v2649
          %3090 = vmatprep.subr.bf16.mxu0 %v2658
          %3091 = vmatpush1.bf16.msra.mxu0 %v2657
          %3092 = vmatprep.subr.bf16.mxu0 %v2666
          %3093 = vmatpush1.bf16.msra.mxu0 %v2665
          %3094 = vmatprep.subr.bf16.mxu0 %v2674
          %3095 = vmatpush1.bf16.msra.mxu0 %v2673
          %3096 = vmatprep.subr.bf16.mxu0 %v2682
          %3097 = vmatpush1.bf16.msra.mxu0 %v2681
          %3098 = vmatprep.mubr.bf16.mxu0 %v1329
          %3099 = vmatmul.mubr.bf16.gmra.mrb[0].mxu0 %v1328
          %v3100 = vpop.f32.mrb[0].mxu0
          %v3101 = vadd.f32 %v3060, %v3100
          %v3102 = vpop.f32.mrb[0].mxu0
          %v3103 = vadd.f32 %v3062, %v3102
          %v3104 = vpop.f32.mrb[0].mxu0
          %v3105 = vpop.f32.mrb[0].mxu0
          %3106 = vdwg.mxu0
          %3107 = vmatprep.subr.bf16.mxu0 %v2436
          %3108 = vmatpush1.bf16.msra.mxu0 %v2435
          %3109 = vmatprep.subr.bf16.mxu0 %v2444
          %3110 = vmatpush1.bf16.msra.mxu0 %v2443
          %3111 = vmatprep.subr.bf16.mxu0 %v2452
          %3112 = vmatpush1.bf16.msra.mxu0 %v2451
          %3113 = vmatprep.subr.bf16.mxu0 %v2460
          %3114 = vmatpush1.bf16.msra.mxu0 %v2459
          %3115 = vmatprep.subr.bf16.mxu0 %v2468
          %3116 = vmatpush1.bf16.msra.mxu0 %v2467
          %3117 = vmatprep.subr.bf16.mxu0 %v2476
          %3118 = vmatpush1.bf16.msra.mxu0 %v2475
          %3119 = vmatprep.subr.bf16.mxu0 %v2484
          %3120 = vmatpush1.bf16.msra.mxu0 %v2483
          %3121 = vmatprep.subr.bf16.mxu0 %v2492
          %3122 = vmatpush1.bf16.msra.mxu0 %v2491
          %3123 = vmatprep.subr.bf16.mxu0 %v2500
          %3124 = vmatpush1.bf16.msra.mxu0 %v2499
          %3125 = vmatprep.subr.bf16.mxu0 %v2508
          %3126 = vmatpush1.bf16.msra.mxu0 %v2507
          %3127 = vmatprep.subr.bf16.mxu0 %v2516
          %3128 = vmatpush1.bf16.msra.mxu0 %v2515
          %3129 = vmatprep.subr.bf16.mxu0 %v2524
          %3130 = vmatpush1.bf16.msra.mxu0 %v2523
          %3131 = vmatprep.subr.bf16.mxu0 %v2532
          %3132 = vmatpush1.bf16.msra.mxu0 %v2531
          %3133 = vmatprep.subr.bf16.mxu0 %v2540
          %3134 = vmatpush1.bf16.msra.mxu0 %v2539
          %3135 = vmatprep.subr.bf16.mxu0 %v2548
          %3136 = vmatpush1.bf16.msra.mxu0 %v2547
          %3137 = vmatprep.subr.bf16.mxu0 %v2556
          %3138 = vmatpush1.bf16.msra.mxu0 %v2555
          %3139 = vmatprep.mubr.bf16.mxu0 %v1327
          %3140 = vmatmul.mubr.bf16.gmra.mrb[0].mxu0 %v1326
          %v3141 = vpop.f32.mrb[0].mxu0
          %v3142 = vadd.f32 %v1650, %v3141
          %v3143 = vpop.f32.mrb[0].mxu0
          %v3144 = vadd.f32 %v1654, %v3143
          %v3145 = vpop.f32.mrb[0].mxu0
          %v3146 = vpop.f32.mrb[0].mxu0
          %3147 = vdwg.mxu0
          %3148 = vmatprep.subr.bf16.mxu0 %v2564
          %3149 = vmatpush1.bf16.msra.mxu0 %v2563
          %3150 = vmatprep.subr.bf16.mxu0 %v2572
          %3151 = vmatpush1.bf16.msra.mxu0 %v2571
          %3152 = vmatprep.subr.bf16.mxu0 %v2580
          %3153 = vmatpush1.bf16.msra.mxu0 %v2579
          %3154 = vmatprep.subr.bf16.mxu0 %v2588
          %3155 = vmatpush1.bf16.msra.mxu0 %v2587
          %3156 = vmatprep.subr.bf16.mxu0 %v2596
          %3157 = vmatpush1.bf16.msra.mxu0 %v2595
          %3158 = vmatprep.subr.bf16.mxu0 %v2604
          %3159 = vmatpush1.bf16.msra.mxu0 %v2603
          %3160 = vmatprep.subr.bf16.mxu0 %v2612
          %3161 = vmatpush1.bf16.msra.mxu0 %v2611
          %3162 = vmatprep.subr.bf16.mxu0 %v2620
          %3163 = vmatpush1.bf16.msra.mxu0 %v2619
          %3164 = vmatprep.subr.bf16.mxu0 %v2628
          %3165 = vmatpush1.bf16.msra.mxu0 %v2627
          %3166 = vmatprep.subr.bf16.mxu0 %v2636
          %3167 = vmatpush1.bf16.msra.mxu0 %v2635
          %3168 = vmatprep.subr.bf16.mxu0 %v2644
          %3169 = vmatpush1.bf16.msra.mxu0 %v2643
          %3170 = vmatprep.subr.bf16.mxu0 %v2652
          %3171 = vmatpush1.bf16.msra.mxu0 %v2651
          %3172 = vmatprep.subr.bf16.mxu0 %v2660
          %3173 = vmatpush1.bf16.msra.mxu0 %v2659
          %3174 = vmatprep.subr.bf16.mxu0 %v2668
          %3175 = vmatpush1.bf16.msra.mxu0 %v2667
          %3176 = vmatprep.subr.bf16.mxu0 %v2676
          %3177 = vmatpush1.bf16.msra.mxu0 %v2675
          %3178 = vmatprep.subr.bf16.mxu0 %v2684
          %3179 = vmatpush1.bf16.msra.mxu0 %v2683
          %3180 = vmatprep.mubr.bf16.mxu0 %v1329
          %3181 = vmatmul.mubr.bf16.gmra.mrb[0].mxu0 %v1328
          %v3182 = vpop.f32.mrb[0].mxu0
          %v3183 = vadd.f32 %v3142, %v3182
          %v3184 = vpop.f32.mrb[0].mxu0
          %v3185 = vadd.f32 %v3144, %v3184
          %v3186 = vpop.f32.mrb[0].mxu0
          %v3187 = vpop.f32.mrb[0].mxu0
          %3188 = vdwg.mxu0
          %3189 = vmatprep.subr.bf16.mxu0 %v2438
          %3190 = vmatpush1.bf16.msra.mxu0 %v2437
          %3191 = vmatprep.subr.bf16.mxu0 %v2446
          %3192 = vmatpush1.bf16.msra.mxu0 %v2445
          %3193 = vmatprep.subr.bf16.mxu0 %v2454
          %3194 = vmatpush1.bf16.msra.mxu0 %v2453
          %3195 = vmatprep.subr.bf16.mxu0 %v2462
          %3196 = vmatpush1.bf16.msra.mxu0 %v2461
          %3197 = vmatprep.subr.bf16.mxu0 %v2470
          %3198 = vmatpush1.bf16.msra.mxu0 %v2469
          %3199 = vmatprep.subr.bf16.mxu0 %v2478
          %3200 = vmatpush1.bf16.msra.mxu0 %v2477
          %3201 = vmatprep.subr.bf16.mxu0 %v2486
          %3202 = vmatpush1.bf16.msra.mxu0 %v2485
          %3203 = vmatprep.subr.bf16.mxu0 %v2494
          %3204 = vmatpush1.bf16.msra.mxu0 %v2493
          %3205 = vmatprep.subr.bf16.mxu0 %v2502
          %3206 = vmatpush1.bf16.msra.mxu0 %v2501
          %3207 = vmatprep.subr.bf16.mxu0 %v2510
          %3208 = vmatpush1.bf16.msra.mxu0 %v2509
          %3209 = vmatprep.subr.bf16.mxu0 %v2518
          %3210 = vmatpush1.bf16.msra.mxu0 %v2517
          %3211 = vmatprep.subr.bf16.mxu0 %v2526
          %3212 = vmatpush1.bf16.msra.mxu0 %v2525
          %3213 = vmatprep.subr.bf16.mxu0 %v2534
          %3214 = vmatpush1.bf16.msra.mxu0 %v2533
          %3215 = vmatprep.subr.bf16.mxu0 %v2542
          %3216 = vmatpush1.bf16.msra.mxu0 %v2541
          %3217 = vmatprep.subr.bf16.mxu0 %v2550
          %3218 = vmatpush1.bf16.msra.mxu0 %v2549
          %3219 = vmatprep.subr.bf16.mxu0 %v2558
          %3220 = vmatpush1.bf16.msra.mxu0 %v2557
          %3221 = vmatprep.mubr.bf16.mxu0 %v1327
          %3222 = vmatmul.mubr.bf16.gmra.mrb[0].mxu0 %v1326
          %v3223 = vpop.f32.mrb[0].mxu0
          %v3224 = vadd.f32 %v1658, %v3223
          %v3225 = vpop.f32.mrb[0].mxu0
          %v3226 = vadd.f32 %v1662, %v3225
          %v3227 = vpop.f32.mrb[0].mxu0
          %v3228 = vpop.f32.mrb[0].mxu0
          %3229 = vdwg.mxu0
          %3230 = vmatprep.subr.bf16.mxu0 %v2566
          %3231 = vmatpush1.bf16.msra.mxu0 %v2565
          %3232 = vmatprep.subr.bf16.mxu0 %v2574
          %3233 = vmatpush1.bf16.msra.mxu0 %v2573
          %3234 = vmatprep.subr.bf16.mxu0 %v2582
          %3235 = vmatpush1.bf16.msra.mxu0 %v2581
          %3236 = vmatprep.subr.bf16.mxu0 %v2590
          %3237 = vmatpush1.bf16.msra.mxu0 %v2589
          %3238 = vmatprep.subr.bf16.mxu0 %v2598
          %3239 = vmatpush1.bf16.msra.mxu0 %v2597
          %3240 = vmatprep.subr.bf16.mxu0 %v2606
          %3241 = vmatpush1.bf16.msra.mxu0 %v2605
          %3242 = vmatprep.subr.bf16.mxu0 %v2614
          %3243 = vmatpush1.bf16.msra.mxu0 %v2613
          %3244 = vmatprep.subr.bf16.mxu0 %v2622
          %3245 = vmatpush1.bf16.msra.mxu0 %v2621
          %3246 = vmatprep.subr.bf16.mxu0 %v2630
          %3247 = vmatpush1.bf16.msra.mxu0 %v2629
          %3248 = vmatprep.subr.bf16.mxu0 %v2638
          %3249 = vmatpush1.bf16.msra.mxu0 %v2637
          %3250 = vmatprep.subr.bf16.mxu0 %v2646
          %3251 = vmatpush1.bf16.msra.mxu0 %v2645
          %3252 = vmatprep.subr.bf16.mxu0 %v2654
          %3253 = vmatpush1.bf16.msra.mxu0 %v2653
          %3254 = vmatprep.subr.bf16.mxu0 %v2662
          %3255 = vmatpush1.bf16.msra.mxu0 %v2661
          %3256 = vmatprep.subr.bf16.mxu0 %v2670
          %3257 = vmatpush1.bf16.msra.mxu0 %v2669
          %3258 = vmatprep.subr.bf16.mxu0 %v2678
          %3259 = vmatpush1.bf16.msra.mxu0 %v2677
          %3260 = vmatprep.subr.bf16.mxu0 %v2686
          %3261 = vmatpush1.bf16.msra.mxu0 %v2685
          %3262 = vmatprep.mubr.bf16.mxu0 %v1329
          %3263 = vmatmul.mubr.bf16.gmra.mrb[0].mxu0 %v1328
          %v3264 = vpop.f32.mrb[0].mxu0
          %v3265 = vadd.f32 %v3224, %v3264
          %v3266 = vpop.f32.mrb[0].mxu0
          %v3267 = vadd.f32 %v3226, %v3266
          %v3268 = vpop.f32.mrb[0].mxu0
          %v3269 = vpop.f32.mrb[0].mxu0
          %3270 = vdwg.mxu0
          %vm3271 = vcmp.gt.f32.partialorder %v3019, 0.0
          %vm3272 = vcmp.gt.f32.partialorder %v3021, 0.0
          %vm3273 = vcmp.gt.f32.partialorder %v3101, 0.0
          %vm3274 = vcmp.gt.f32.partialorder %v3103, 0.0
          %vm3275 = vcmp.gt.f32.partialorder %v3183, 0.0
          %vm3276 = vcmp.gt.f32.partialorder %v3185, 0.0
          %vm3277 = vcmp.gt.f32.partialorder %v3265, 0.0
          %vm3278 = vcmp.gt.f32.partialorder %v3267, 0.0
          %v3279 = vmul.f32 %v3019, 0.2
          %v3280 = vmul.f32 %v3021, 0.2
          %v3281 = vmul.f32 %v3101, 0.2
          %v3282 = vmul.f32 %v3103, 0.2
          %v3283 = vmul.f32 %v3183, 0.2
          %v3284 = vmul.f32 %v3185, 0.2
          %v3285 = vmul.f32 %v3265, 0.2
          %v3286 = vmul.f32 %v3267, 0.2
          %v3287 = vsel %vm3271, %v3019, %v3279
          %v3288 = vsel %vm3272, %v3021, %v3280
          %v3289 = vsel %vm3273, %v3101, %v3281
          %v3290 = vsel %vm3274, %v3103, %v3282
          %v3291 = vsel %vm3275, %v3183, %v3283
          %v3292 = vsel %vm3276, %v3185, %v3284
          %v3293 = vsel %vm3277, %v3265, %v3285
          %v3294 = vsel %vm3278, %v3267, %v3286
          %v3295 = vpack.c.bf16 %v3287, %v3287
          %v3296 = vpack.c.bf16 %v3288, %v3288
          %v3297 = vpack.c.bf16 %v3289, %v3289
          %v3298 = vpack.c.bf16 %v3290, %v3290
          %v3299 = vpack.c.bf16 %v3291, %v3291
          %v3300 = vpack.c.bf16 %v3292, %v3292
          %v3301 = vpack.c.bf16 %v3293, %v3293
          %v3302 = vpack.c.bf16 %v3294, %v3294
          %v3311 = vcombine.low %v3295, %v3296
          %v3312 = vcombine.low %v3297, %v3298
          %v3313 = vcombine.low %v3299, %v3300
          %v3314 = vcombine.low %v3301, %v3302
          %v3316 = vunpack.c.l.s4 1966171168
          %v3317 = vunpack.c.0.s8 %v3316
          %v3318 = vlaneseq
          %v3319 = vshrl.u32 %v3318, 7
          %v3320 = vsub.s32 %v3317, %v3319
          %v3321 = vrot.slane %v3311, %v3320
          %v3323 = vunpack.c.l.s4 1966171168
          %v3324 = vunpack.c.0.s8 %v3323
          %v3325 = vlaneseq
          %v3326 = vshrl.u32 %v3325, 7
          %v3327 = vsub.s32 %v3324, %v3326
          %v3328 = vrot.slane %v3312, %v3327
          %v3330 = vunpack.c.l.s4 1966171168
          %v3331 = vunpack.c.0.s8 %v3330
          %v3332 = vlaneseq
          %v3333 = vshrl.u32 %v3332, 7
          %v3334 = vsub.s32 %v3331, %v3333
          %v3335 = vrot.slane %v3313, %v3334
          %v3337 = vunpack.c.l.s4 1966171168
          %v3338 = vunpack.c.0.s8 %v3337
          %v3339 = vlaneseq
          %v3340 = vshrl.u32 %v3339, 7
          %v3341 = vsub.s32 %v3338, %v3340
          %v3342 = vrot.slane %v3314, %v3341
          %v3343 = vcombine.low %v3321, %v3328
          %v3344 = vcombine.low %v3335, %v3342
          %v3346 = vunpack.c.l.s4 1966171168
          %v3347 = vunpack.c.0.s8 %v3346
          %v3348 = vlaneseq
          %v3349 = vshrl.u32 %v3348, 7
          %v3350 = vsub.s32 %v3347, %v3349
          %v3351 = vrot.slane %v3343, %v3350
          %v3353 = vunpack.c.l.s4 1966171168
          %v3354 = vunpack.c.0.s8 %v3353
          %v3355 = vlaneseq
          %v3356 = vshrl.u32 %v3355, 7
          %v3357 = vsub.s32 %v3354, %v3356
          %v3358 = vrot.slane %v3344, %v3357
          %v3359 = vcombine.low %v3351, %v3358
          %3361 = vst [vmem:[#allocation2] sm:$0xff] %v3359
        $region112: #{generator_forward.1} parent=63 // pred_fallthru
          _
        %v3362 = vld [vmem:[#allocation2] sm:$0xff]
        %v3363 = vld [vmem:[%s505] sm:$0xff]
        %v3364 = vld [vmem:[%s505 + $0x8] sm:$0xff]
        %v3365 = vld [vmem:[%s505 + $0x10] sm:$0xff]
        %v3366 = vld [vmem:[%s505 + $0x18] sm:$0xff]
        %v3367 = vld [vmem:[%s505 + $0x20] sm:$0xff]
        %v3368 = vld [vmem:[%s505 + $0x28] sm:$0xff]
        %v3369 = vld [vmem:[%s505 + $0x30] sm:$0xff]
        %v3370 = vld [vmem:[%s505 + $0x38] sm:$0xff]
        %v3371 = vld [vmem:[%s505 + $0x40] sm:$0xff]
        %v3372 = vld [vmem:[%s505 + $0x48] sm:$0xff]
        %v3373 = vld [vmem:[%s505 + $0x50] sm:$0xff]
        %v3374 = vld [vmem:[%s505 + $0x58] sm:$0xff]
        %v3375 = vld [vmem:[%s505 + $0x60] sm:$0xff]
        %v3376 = vld [vmem:[%s505 + $0x68] sm:$0xff]
        %v3377 = vld [vmem:[%s505 + $0x70] sm:$0xff]
        %v3378 = vld [vmem:[%s505 + $0x78] sm:$0xff]
        %v3379 = vld [vmem:[%s505 + $0x80] sm:$0xff]
        %v3380 = vld [vmem:[%s505 + $0x88] sm:$0xff]
        %v3381 = vld [vmem:[%s505 + $0x90] sm:$0xff]
        %v3382 = vld [vmem:[%s505 + $0x98] sm:$0xff]
        %v3383 = vld [vmem:[%s505 + $0xa0] sm:$0xff]
        %v3384 = vld [vmem:[%s505 + $0xa8] sm:$0xff]
        %v3385 = vld [vmem:[%s505 + $0xb0] sm:$0xff]
        %v3386 = vld [vmem:[%s505 + $0xb8] sm:$0xff]
        %v3387 = vld [vmem:[%s505 + $0xc0] sm:$0xff]
        %v3388 = vld [vmem:[%s505 + $0xc8] sm:$0xff]
        %v3389 = vld [vmem:[%s505 + $0xd0] sm:$0xff]
        %v3390 = vld [vmem:[%s505 + $0xd8] sm:$0xff]
        %v3391 = vld [vmem:[%s505 + $0xe0] sm:$0xff]
        %v3392 = vld [vmem:[%s505 + $0xe8] sm:$0xff]
        %v3393 = vld [vmem:[%s505 + $0xf0] sm:$0xff]
        %v3394 = vld [vmem:[%s505 + $0xf8] sm:$0xff]
        %v3395 = vld [vmem:[%s505 + $0x100] sm:$0xff]
        %v3396 = vld [vmem:[%s505 + $0x108] sm:$0xff]
        %v3397 = vld [vmem:[%s505 + $0x110] sm:$0xff]
        %v3398 = vld [vmem:[%s505 + $0x118] sm:$0xff]
        %v3399 = vld [vmem:[%s505 + $0x120] sm:$0xff]
        %v3400 = vld [vmem:[%s505 + $0x128] sm:$0xff]
        %v3401 = vld [vmem:[%s505 + $0x130] sm:$0xff]
        %v3402 = vld [vmem:[%s505 + $0x138] sm:$0xff]
        %v3403 = vld [vmem:[%s505 + $0x140] sm:$0xff]
        %v3404 = vld [vmem:[%s505 + $0x148] sm:$0xff]
        %v3405 = vld [vmem:[%s505 + $0x150] sm:$0xff]
        %v3406 = vld [vmem:[%s505 + $0x158] sm:$0xff]
        %v3407 = vld [vmem:[%s505 + $0x160] sm:$0xff]
        %v3408 = vld [vmem:[%s505 + $0x168] sm:$0xff]
        %v3409 = vld [vmem:[%s505 + $0x170] sm:$0xff]
        %v3410 = vld [vmem:[%s505 + $0x178] sm:$0xff]
        %v3411 = vld [vmem:[%s505 + $0x180] sm:$0xff]
        %v3412 = vld [vmem:[%s505 + $0x188] sm:$0xff]
        %v3413 = vld [vmem:[%s505 + $0x190] sm:$0xff]
        %v3414 = vld [vmem:[%s505 + $0x198] sm:$0xff]
        %v3415 = vld [vmem:[%s505 + $0x1a0] sm:$0xff]
        %v3416 = vld [vmem:[%s505 + $0x1a8] sm:$0xff]
        %v3417 = vld [vmem:[%s505 + $0x1b0] sm:$0xff]
        %v3418 = vld [vmem:[%s505 + $0x1b8] sm:$0xff]
        %v3419 = vld [vmem:[%s505 + $0x1c0] sm:$0xff]
        %v3420 = vld [vmem:[%s505 + $0x1c8] sm:$0xff]
        %v3421 = vld [vmem:[%s505 + $0x1d0] sm:$0xff]
        %v3422 = vld [vmem:[%s505 + $0x1d8] sm:$0xff]
        %v3423 = vld [vmem:[%s505 + $0x1e0] sm:$0xff]
        %v3424 = vld [vmem:[%s505 + $0x1e8] sm:$0xff]
        %v3425 = vld [vmem:[%s505 + $0x1f0] sm:$0xff]
        %v3426 = vld [vmem:[%s505 + $0x1f8] sm:$0xff]
        %v3427 = vld [vmem:[%s505 + $0x200] sm:$0xff]
        %v3428 = vld [vmem:[%s505 + $0x208] sm:$0xff]
        %v3429 = vld [vmem:[%s505 + $0x210] sm:$0xff]
        %v3430 = vld [vmem:[%s505 + $0x218] sm:$0xff]
        %v3431 = vld [vmem:[%s505 + $0x220] sm:$0xff]
        %v3432 = vld [vmem:[%s505 + $0x228] sm:$0xff]
        %v3433 = vld [vmem:[%s505 + $0x230] sm:$0xff]
        %v3434 = vld [vmem:[%s505 + $0x238] sm:$0xff]
        %v3435 = vld [vmem:[%s505 + $0x240] sm:$0xff]
        %v3436 = vld [vmem:[%s505 + $0x248] sm:$0xff]
        %v3437 = vld [vmem:[%s505 + $0x250] sm:$0xff]
        %v3438 = vld [vmem:[%s505 + $0x258] sm:$0xff]
        %v3439 = vld [vmem:[%s505 + $0x260] sm:$0xff]
        %v3440 = vld [vmem:[%s505 + $0x268] sm:$0xff]
        %v3441 = vld [vmem:[%s505 + $0x270] sm:$0xff]
        %v3442 = vld [vmem:[%s505 + $0x278] sm:$0xff]
        %v3443 = vld [vmem:[%s505 + $0x280] sm:$0xff]
        %v3444 = vld [vmem:[%s505 + $0x288] sm:$0xff]
        %v3445 = vld [vmem:[%s505 + $0x290] sm:$0xff]
        %v3446 = vld [vmem:[%s505 + $0x298] sm:$0xff]
        %v3447 = vld [vmem:[%s505 + $0x2a0] sm:$0xff]
        %v3448 = vld [vmem:[%s505 + $0x2a8] sm:$0xff]
        %v3449 = vld [vmem:[%s505 + $0x2b0] sm:$0xff]
        %v3450 = vld [vmem:[%s505 + $0x2b8] sm:$0xff]
        %v3451 = vld [vmem:[%s505 + $0x2c0] sm:$0xff]
        %v3452 = vld [vmem:[%s505 + $0x2c8] sm:$0xff]
        %v3453 = vld [vmem:[%s505 + $0x2d0] sm:$0xff]
        %v3454 = vld [vmem:[%s505 + $0x2d8] sm:$0xff]
        %v3455 = vld [vmem:[%s505 + $0x2e0] sm:$0xff]
        %v3456 = vld [vmem:[%s505 + $0x2e8] sm:$0xff]
        %v3457 = vld [vmem:[%s505 + $0x2f0] sm:$0xff]
        %v3458 = vld [vmem:[%s505 + $0x2f8] sm:$0xff]
        %v3459 = vld [vmem:[%s505 + $0x300] sm:$0xff]
        %v3460 = vld [vmem:[%s505 + $0x308] sm:$0xff]
        %v3461 = vld [vmem:[%s505 + $0x310] sm:$0xff]
        %v3462 = vld [vmem:[%s505 + $0x318] sm:$0xff]
        %v3463 = vld [vmem:[%s505 + $0x320] sm:$0xff]
        %v3464 = vld [vmem:[%s505 + $0x328] sm:$0xff]
        %v3465 = vld [vmem:[%s505 + $0x330] sm:$0xff]
        %v3466 = vld [vmem:[%s505 + $0x338] sm:$0xff]
        %v3467 = vld [vmem:[%s505 + $0x340] sm:$0xff]
        %v3468 = vld [vmem:[%s505 + $0x348] sm:$0xff]
        %v3469 = vld [vmem:[%s505 + $0x350] sm:$0xff]
        %v3470 = vld [vmem:[%s505 + $0x358] sm:$0xff]
        %v3471 = vld [vmem:[%s505 + $0x360] sm:$0xff]
        %v3472 = vld [vmem:[%s505 + $0x368] sm:$0xff]
        %v3473 = vld [vmem:[%s505 + $0x370] sm:$0xff]
        %v3474 = vld [vmem:[%s505 + $0x378] sm:$0xff]
        %v3475 = vld [vmem:[%s505 + $0x380] sm:$0xff]
        %v3476 = vld [vmem:[%s505 + $0x388] sm:$0xff]
        %v3477 = vld [vmem:[%s505 + $0x390] sm:$0xff]
        %v3478 = vld [vmem:[%s505 + $0x398] sm:$0xff]
        %v3479 = vld [vmem:[%s505 + $0x3a0] sm:$0xff]
        %v3480 = vld [vmem:[%s505 + $0x3a8] sm:$0xff]
        %v3481 = vld [vmem:[%s505 + $0x3b0] sm:$0xff]
        %v3482 = vld [vmem:[%s505 + $0x3b8] sm:$0xff]
        %v3483 = vld [vmem:[%s505 + $0x3c0] sm:$0xff]
        %v3484 = vld [vmem:[%s505 + $0x3c8] sm:$0xff]
        %v3485 = vld [vmem:[%s505 + $0x3d0] sm:$0xff]
        %v3486 = vld [vmem:[%s505 + $0x3d8] sm:$0xff]
        %v3487 = vld [vmem:[%s505 + $0x3e0] sm:$0xff]
        %v3488 = vld [vmem:[%s505 + $0x3e8] sm:$0xff]
        %v3489 = vld [vmem:[%s505 + $0x3f0] sm:$0xff]
        %v3490 = vld [vmem:[%s505 + $0x3f8] sm:$0xff]
        %v3491 = vld [vmem:[%s514] sm:$0x3]
        %v3492 = vunpack.c.l.bf16 %v3491
        %v3494 = vlaneseq
        %v3495 = vshrl.u32 %v3494, 7
        %v3496 = vsub.s32 0, %v3495
        %v3497 = vrot.slane %v3492, %v3496
        %v3498 = vlaneseq
        %v3499 = vshrl.u32 %v3498, 7
        %v3500 = vsub.s32 2, %v3499
        %v3501 = vrot.slane %v3492, %v3500
        %v3504 = vlaneseq
        %v3505 = vshrl.u32 %v3504, 7
        %v3506 = vsub.s32 0, %v3505
        %v3507 = vrot.slane %v3497, %v3506
        %v3508 = vlaneseq
        %v3509 = vshrl.u32 %v3508, 7
        %v3510 = vsub.s32 0, %v3509
        %v3511 = vrot.slane %v3501, %v3510
        %v3513 = vcombine.high %v3362, %v3362
        %v3515 = vunpack.c.l.s4 1966171168
        %v3516 = vunpack.c.0.s8 %v3515
        %v3517 = vlaneseq
        %v3518 = vshrl.u32 %v3517, 7
        %v3519 = vsub.s32 %v3516, %v3518
        %v3520 = vrot.slane %v3362, %v3519
        %v3522 = vunpack.c.l.s4 1966171168
        %v3523 = vunpack.c.0.s8 %v3522
        %v3524 = vlaneseq
        %v3525 = vshrl.u32 %v3524, 7
        %v3526 = vsub.s32 %v3523, %v3525
        %v3527 = vrot.slane %v3513, %v3526
        %v3528 = vcombine.high %v3520, %v3520
        %v3529 = vcombine.high %v3527, %v3527
        %v3531 = vunpack.c.l.s4 1966171168
        %v3532 = vunpack.c.0.s8 %v3531
        %v3533 = vlaneseq
        %v3534 = vshrl.u32 %v3533, 7
        %v3535 = vsub.s32 %v3532, %v3534
        %v3536 = vrot.slane %v3520, %v3535
        %v3538 = vunpack.c.l.s4 1966171168
        %v3539 = vunpack.c.0.s8 %v3538
        %v3540 = vlaneseq
        %v3541 = vshrl.u32 %v3540, 7
        %v3542 = vsub.s32 %v3539, %v3541
        %v3543 = vrot.slane %v3527, %v3542
        %v3545 = vunpack.c.l.s4 1966171168
        %v3546 = vunpack.c.0.s8 %v3545
        %v3547 = vlaneseq
        %v3548 = vshrl.u32 %v3547, 7
        %v3549 = vsub.s32 %v3546, %v3548
        %v3550 = vrot.slane %v3528, %v3549
        %v3552 = vunpack.c.l.s4 1966171168
        %v3553 = vunpack.c.0.s8 %v3552
        %v3554 = vlaneseq
        %v3555 = vshrl.u32 %v3554, 7
        %v3556 = vsub.s32 %v3553, %v3555
        %v3557 = vrot.slane %v3529, %v3556
        %v3558 = vcombine.high %v3536, %v3536
        %v3559 = vcombine.high %v3543, %v3543
        %v3560 = vcombine.high %v3550, %v3550
        %v3561 = vcombine.high %v3557, %v3557
        %v3698 = vunpack.c.l.b16 %v3363
        %v3699 = vunpack.c.h.b16 %v3363
        %v3700 = vunpack.c.l.b16 %v3364
        %v3701 = vunpack.c.h.b16 %v3364
        %v3702 = vunpack.c.l.b16 %v3365
        %v3703 = vunpack.c.h.b16 %v3365
        %v3704 = vunpack.c.l.b16 %v3366
        %v3705 = vunpack.c.h.b16 %v3366
        %v3706 = vunpack.c.l.b16 %v3367
        %v3707 = vunpack.c.h.b16 %v3367
        %v3708 = vunpack.c.l.b16 %v3368
        %v3709 = vunpack.c.h.b16 %v3368
        %v3710 = vunpack.c.l.b16 %v3369
        %v3711 = vunpack.c.h.b16 %v3369
        %v3712 = vunpack.c.l.b16 %v3370
        %v3713 = vunpack.c.h.b16 %v3370
        %v3714 = vunpack.c.l.b16 %v3371
        %v3715 = vunpack.c.h.b16 %v3371
        %v3716 = vunpack.c.l.b16 %v3372
        %v3717 = vunpack.c.h.b16 %v3372
        %v3718 = vunpack.c.l.b16 %v3373
        %v3719 = vunpack.c.h.b16 %v3373
        %v3720 = vunpack.c.l.b16 %v3374
        %v3721 = vunpack.c.h.b16 %v3374
        %v3722 = vunpack.c.l.b16 %v3375
        %v3723 = vunpack.c.h.b16 %v3375
        %v3724 = vunpack.c.l.b16 %v3376
        %v3725 = vunpack.c.h.b16 %v3376
        %v3726 = vunpack.c.l.b16 %v3377
        %v3727 = vunpack.c.h.b16 %v3377
        %v3728 = vunpack.c.l.b16 %v3378
        %v3729 = vunpack.c.h.b16 %v3378
        %v3730 = vunpack.c.l.b16 %v3379
        %v3731 = vunpack.c.h.b16 %v3379
        %v3732 = vunpack.c.l.b16 %v3380
        %v3733 = vunpack.c.h.b16 %v3380
        %v3734 = vunpack.c.l.b16 %v3381
        %v3735 = vunpack.c.h.b16 %v3381
        %v3736 = vunpack.c.l.b16 %v3382
        %v3737 = vunpack.c.h.b16 %v3382
        %v3738 = vunpack.c.l.b16 %v3383
        %v3739 = vunpack.c.h.b16 %v3383
        %v3740 = vunpack.c.l.b16 %v3384
        %v3741 = vunpack.c.h.b16 %v3384
        %v3742 = vunpack.c.l.b16 %v3385
        %v3743 = vunpack.c.h.b16 %v3385
        %v3744 = vunpack.c.l.b16 %v3386
        %v3745 = vunpack.c.h.b16 %v3386
        %v3746 = vunpack.c.l.b16 %v3387
        %v3747 = vunpack.c.h.b16 %v3387
        %v3748 = vunpack.c.l.b16 %v3388
        %v3749 = vunpack.c.h.b16 %v3388
        %v3750 = vunpack.c.l.b16 %v3389
        %v3751 = vunpack.c.h.b16 %v3389
        %v3752 = vunpack.c.l.b16 %v3390
        %v3753 = vunpack.c.h.b16 %v3390
        %v3754 = vunpack.c.l.b16 %v3391
        %v3755 = vunpack.c.h.b16 %v3391
        %v3756 = vunpack.c.l.b16 %v3392
        %v3757 = vunpack.c.h.b16 %v3392
        %v3758 = vunpack.c.l.b16 %v3393
        %v3759 = vunpack.c.h.b16 %v3393
        %v3760 = vunpack.c.l.b16 %v3394
        %v3761 = vunpack.c.h.b16 %v3394
        %v3762 = vunpack.c.l.b16 %v3395
        %v3763 = vunpack.c.h.b16 %v3395
        %v3764 = vunpack.c.l.b16 %v3396
        %v3765 = vunpack.c.h.b16 %v3396
        %v3766 = vunpack.c.l.b16 %v3397
        %v3767 = vunpack.c.h.b16 %v3397
        %v3768 = vunpack.c.l.b16 %v3398
        %v3769 = vunpack.c.h.b16 %v3398
        %v3770 = vunpack.c.l.b16 %v3399
        %v3771 = vunpack.c.h.b16 %v3399
        %v3772 = vunpack.c.l.b16 %v3400
        %v3773 = vunpack.c.h.b16 %v3400
        %v3774 = vunpack.c.l.b16 %v3401
        %v3775 = vunpack.c.h.b16 %v3401
        %v3776 = vunpack.c.l.b16 %v3402
        %v3777 = vunpack.c.h.b16 %v3402
        %v3778 = vunpack.c.l.b16 %v3403
        %v3779 = vunpack.c.h.b16 %v3403
        %v3780 = vunpack.c.l.b16 %v3404
        %v3781 = vunpack.c.h.b16 %v3404
        %v3782 = vunpack.c.l.b16 %v3405
        %v3783 = vunpack.c.h.b16 %v3405
        %v3784 = vunpack.c.l.b16 %v3406
        %v3785 = vunpack.c.h.b16 %v3406
        %v3786 = vunpack.c.l.b16 %v3407
        %v3787 = vunpack.c.h.b16 %v3407
        %v3788 = vunpack.c.l.b16 %v3408
        %v3789 = vunpack.c.h.b16 %v3408
        %v3790 = vunpack.c.l.b16 %v3409
        %v3791 = vunpack.c.h.b16 %v3409
        %v3792 = vunpack.c.l.b16 %v3410
        %v3793 = vunpack.c.h.b16 %v3410
        %v3794 = vunpack.c.l.b16 %v3411
        %v3795 = vunpack.c.h.b16 %v3411
        %v3796 = vunpack.c.l.b16 %v3412
        %v3797 = vunpack.c.h.b16 %v3412
        %v3798 = vunpack.c.l.b16 %v3413
        %v3799 = vunpack.c.h.b16 %v3413
        %v3800 = vunpack.c.l.b16 %v3414
        %v3801 = vunpack.c.h.b16 %v3414
        %v3802 = vunpack.c.l.b16 %v3415
        %v3803 = vunpack.c.h.b16 %v3415
        %v3804 = vunpack.c.l.b16 %v3416
        %v3805 = vunpack.c.h.b16 %v3416
        %v3806 = vunpack.c.l.b16 %v3417
        %v3807 = vunpack.c.h.b16 %v3417
        %v3808 = vunpack.c.l.b16 %v3418
        %v3809 = vunpack.c.h.b16 %v3418
        %v3810 = vunpack.c.l.b16 %v3419
        %v3811 = vunpack.c.h.b16 %v3419
        %v3812 = vunpack.c.l.b16 %v3420
        %v3813 = vunpack.c.h.b16 %v3420
        %v3814 = vunpack.c.l.b16 %v3421
        %v3815 = vunpack.c.h.b16 %v3421
        %v3816 = vunpack.c.l.b16 %v3422
        %v3817 = vunpack.c.h.b16 %v3422
        %v3818 = vunpack.c.l.b16 %v3423
        %v3819 = vunpack.c.h.b16 %v3423
        %v3820 = vunpack.c.l.b16 %v3424
        %v3821 = vunpack.c.h.b16 %v3424
        %v3822 = vunpack.c.l.b16 %v3425
        %v3823 = vunpack.c.h.b16 %v3425
        %v3824 = vunpack.c.l.b16 %v3426
        %v3825 = vunpack.c.h.b16 %v3426
        %v3826 = vunpack.c.l.b16 %v3427
        %v3827 = vunpack.c.h.b16 %v3427
        %v3828 = vunpack.c.l.b16 %v3428
        %v3829 = vunpack.c.h.b16 %v3428
        %v3830 = vunpack.c.l.b16 %v3429
        %v3831 = vunpack.c.h.b16 %v3429
        %v3832 = vunpack.c.l.b16 %v3430
        %v3833 = vunpack.c.h.b16 %v3430
        %v3834 = vunpack.c.l.b16 %v3431
        %v3835 = vunpack.c.h.b16 %v3431
        %v3836 = vunpack.c.l.b16 %v3432
        %v3837 = vunpack.c.h.b16 %v3432
        %v3838 = vunpack.c.l.b16 %v3433
        %v3839 = vunpack.c.h.b16 %v3433
        %v3840 = vunpack.c.l.b16 %v3434
        %v3841 = vunpack.c.h.b16 %v3434
        %v3842 = vunpack.c.l.b16 %v3435
        %v3843 = vunpack.c.h.b16 %v3435
        %v3844 = vunpack.c.l.b16 %v3436
        %v3845 = vunpack.c.h.b16 %v3436
        %v3846 = vunpack.c.l.b16 %v3437
        %v3847 = vunpack.c.h.b16 %v3437
        %v3848 = vunpack.c.l.b16 %v3438
        %v3849 = vunpack.c.h.b16 %v3438
        %v3850 = vunpack.c.l.b16 %v3439
        %v3851 = vunpack.c.h.b16 %v3439
        %v3852 = vunpack.c.l.b16 %v3440
        %v3853 = vunpack.c.h.b16 %v3440
        %v3854 = vunpack.c.l.b16 %v3441
        %v3855 = vunpack.c.h.b16 %v3441
        %v3856 = vunpack.c.l.b16 %v3442
        %v3857 = vunpack.c.h.b16 %v3442
        %v3858 = vunpack.c.l.b16 %v3443
        %v3859 = vunpack.c.h.b16 %v3443
        %v3860 = vunpack.c.l.b16 %v3444
        %v3861 = vunpack.c.h.b16 %v3444
        %v3862 = vunpack.c.l.b16 %v3445
        %v3863 = vunpack.c.h.b16 %v3445
        %v3864 = vunpack.c.l.b16 %v3446
        %v3865 = vunpack.c.h.b16 %v3446
        %v3866 = vunpack.c.l.b16 %v3447
        %v3867 = vunpack.c.h.b16 %v3447
        %v3868 = vunpack.c.l.b16 %v3448
        %v3869 = vunpack.c.h.b16 %v3448
        %v3870 = vunpack.c.l.b16 %v3449
        %v3871 = vunpack.c.h.b16 %v3449
        %v3872 = vunpack.c.l.b16 %v3450
        %v3873 = vunpack.c.h.b16 %v3450
        %v3874 = vunpack.c.l.b16 %v3451
        %v3875 = vunpack.c.h.b16 %v3451
        %v3876 = vunpack.c.l.b16 %v3452
        %v3877 = vunpack.c.h.b16 %v3452
        %v3878 = vunpack.c.l.b16 %v3453
        %v3879 = vunpack.c.h.b16 %v3453
        %v3880 = vunpack.c.l.b16 %v3454
        %v3881 = vunpack.c.h.b16 %v3454
        %v3882 = vunpack.c.l.b16 %v3455
        %v3883 = vunpack.c.h.b16 %v3455
        %v3884 = vunpack.c.l.b16 %v3456
        %v3885 = vunpack.c.h.b16 %v3456
        %v3886 = vunpack.c.l.b16 %v3457
        %v3887 = vunpack.c.h.b16 %v3457
        %v3888 = vunpack.c.l.b16 %v3458
        %v3889 = vunpack.c.h.b16 %v3458
        %v3890 = vunpack.c.l.b16 %v3459
        %v3891 = vunpack.c.h.b16 %v3459
        %v3892 = vunpack.c.l.b16 %v3460
        %v3893 = vunpack.c.h.b16 %v3460
        %v3894 = vunpack.c.l.b16 %v3461
        %v3895 = vunpack.c.h.b16 %v3461
        %v3896 = vunpack.c.l.b16 %v3462
        %v3897 = vunpack.c.h.b16 %v3462
        %v3898 = vunpack.c.l.b16 %v3463
        %v3899 = vunpack.c.h.b16 %v3463
        %v3900 = vunpack.c.l.b16 %v3464
        %v3901 = vunpack.c.h.b16 %v3464
        %v3902 = vunpack.c.l.b16 %v3465
        %v3903 = vunpack.c.h.b16 %v3465
        %v3904 = vunpack.c.l.b16 %v3466
        %v3905 = vunpack.c.h.b16 %v3466
        %v3906 = vunpack.c.l.b16 %v3467
        %v3907 = vunpack.c.h.b16 %v3467
        %v3908 = vunpack.c.l.b16 %v3468
        %v3909 = vunpack.c.h.b16 %v3468
        %v3910 = vunpack.c.l.b16 %v3469
        %v3911 = vunpack.c.h.b16 %v3469
        %v3912 = vunpack.c.l.b16 %v3470
        %v3913 = vunpack.c.h.b16 %v3470
        %v3914 = vunpack.c.l.b16 %v3471
        %v3915 = vunpack.c.h.b16 %v3471
        %v3916 = vunpack.c.l.b16 %v3472
        %v3917 = vunpack.c.h.b16 %v3472
        %v3918 = vunpack.c.l.b16 %v3473
        %v3919 = vunpack.c.h.b16 %v3473
        %v3920 = vunpack.c.l.b16 %v3474
        %v3921 = vunpack.c.h.b16 %v3474
        %v3922 = vunpack.c.l.b16 %v3475
        %v3923 = vunpack.c.h.b16 %v3475
        %v3924 = vunpack.c.l.b16 %v3476
        %v3925 = vunpack.c.h.b16 %v3476
        %v3926 = vunpack.c.l.b16 %v3477
        %v3927 = vunpack.c.h.b16 %v3477
        %v3928 = vunpack.c.l.b16 %v3478
        %v3929 = vunpack.c.h.b16 %v3478
        %v3930 = vunpack.c.l.b16 %v3479
        %v3931 = vunpack.c.h.b16 %v3479
        %v3932 = vunpack.c.l.b16 %v3480
        %v3933 = vunpack.c.h.b16 %v3480
        %v3934 = vunpack.c.l.b16 %v3481
        %v3935 = vunpack.c.h.b16 %v3481
        %v3936 = vunpack.c.l.b16 %v3482
        %v3937 = vunpack.c.h.b16 %v3482
        %v3938 = vunpack.c.l.b16 %v3483
        %v3939 = vunpack.c.h.b16 %v3483
        %v3940 = vunpack.c.l.b16 %v3484
        %v3941 = vunpack.c.h.b16 %v3484
        %v3942 = vunpack.c.l.b16 %v3485
        %v3943 = vunpack.c.h.b16 %v3485
        %v3944 = vunpack.c.l.b16 %v3486
        %v3945 = vunpack.c.h.b16 %v3486
        %v3946 = vunpack.c.l.b16 %v3487
        %v3947 = vunpack.c.h.b16 %v3487
        %v3948 = vunpack.c.l.b16 %v3488
        %v3949 = vunpack.c.h.b16 %v3488
        %v3950 = vunpack.c.l.b16 %v3489
        %v3951 = vunpack.c.h.b16 %v3489
        %v3952 = vunpack.c.l.b16 %v3490
        %v3953 = vunpack.c.h.b16 %v3490
        %v3954 = vpack.c.b16 %v3700, %v3698
        %v3955 = vpack.c.b16 %v3701, %v3699
        %v3956 = vpack.c.b16 %v3704, %v3702
        %v3957 = vpack.c.b16 %v3705, %v3703
        %v3958 = vpack.c.b16 %v3708, %v3706
        %v3959 = vpack.c.b16 %v3709, %v3707
        %v3960 = vpack.c.b16 %v3712, %v3710
        %v3961 = vpack.c.b16 %v3713, %v3711
        %v3962 = vpack.c.b16 %v3716, %v3714
        %v3963 = vpack.c.b16 %v3717, %v3715
        %v3964 = vpack.c.b16 %v3720, %v3718
        %v3965 = vpack.c.b16 %v3721, %v3719
        %v3966 = vpack.c.b16 %v3724, %v3722
        %v3967 = vpack.c.b16 %v3725, %v3723
        %v3968 = vpack.c.b16 %v3728, %v3726
        %v3969 = vpack.c.b16 %v3729, %v3727
        %v3970 = vpack.c.b16 %v3732, %v3730
        %v3971 = vpack.c.b16 %v3733, %v3731
        %v3972 = vpack.c.b16 %v3736, %v3734
        %v3973 = vpack.c.b16 %v3737, %v3735
        %v3974 = vpack.c.b16 %v3740, %v3738
        %v3975 = vpack.c.b16 %v3741, %v3739
        %v3976 = vpack.c.b16 %v3744, %v3742
        %v3977 = vpack.c.b16 %v3745, %v3743
        %v3978 = vpack.c.b16 %v3748, %v3746
        %v3979 = vpack.c.b16 %v3749, %v3747
        %v3980 = vpack.c.b16 %v3752, %v3750
        %v3981 = vpack.c.b16 %v3753, %v3751
        %v3982 = vpack.c.b16 %v3756, %v3754
        %v3983 = vpack.c.b16 %v3757, %v3755
        %v3984 = vpack.c.b16 %v3760, %v3758
        %v3985 = vpack.c.b16 %v3761, %v3759
        %v3986 = vpack.c.b16 %v3764, %v3762
        %v3987 = vpack.c.b16 %v3765, %v3763
        %v3988 = vpack.c.b16 %v3768, %v3766
        %v3989 = vpack.c.b16 %v3769, %v3767
        %v3990 = vpack.c.b16 %v3772, %v3770
        %v3991 = vpack.c.b16 %v3773, %v3771
        %v3992 = vpack.c.b16 %v3776, %v3774
        %v3993 = vpack.c.b16 %v3777, %v3775
        %v3994 = vpack.c.b16 %v3780, %v3778
        %v3995 = vpack.c.b16 %v3781, %v3779
        %v3996 = vpack.c.b16 %v3784, %v3782
        %v3997 = vpack.c.b16 %v3785, %v3783
        %v3998 = vpack.c.b16 %v3788, %v3786
        %v3999 = vpack.c.b16 %v3789, %v3787
        %v4000 = vpack.c.b16 %v3792, %v3790
        %v4001 = vpack.c.b16 %v3793, %v3791
        %v4002 = vpack.c.b16 %v3796, %v3794
        %v4003 = vpack.c.b16 %v3797, %v3795
        %v4004 = vpack.c.b16 %v3800, %v3798
        %v4005 = vpack.c.b16 %v3801, %v3799
        %v4006 = vpack.c.b16 %v3804, %v3802
        %v4007 = vpack.c.b16 %v3805, %v3803
        %v4008 = vpack.c.b16 %v3808, %v3806
        %v4009 = vpack.c.b16 %v3809, %v3807
        %v4010 = vpack.c.b16 %v3812, %v3810
        %v4011 = vpack.c.b16 %v3813, %v3811
        %v4012 = vpack.c.b16 %v3816, %v3814
        %v4013 = vpack.c.b16 %v3817, %v3815
        %v4014 = vpack.c.b16 %v3820, %v3818
        %v4015 = vpack.c.b16 %v3821, %v3819
        %v4016 = vpack.c.b16 %v3824, %v3822
        %v4017 = vpack.c.b16 %v3825, %v3823
        %v4018 = vpack.c.b16 %v3828, %v3826
        %v4019 = vpack.c.b16 %v3829, %v3827
        %v4020 = vpack.c.b16 %v3832, %v3830
        %v4021 = vpack.c.b16 %v3833, %v3831
        %v4022 = vpack.c.b16 %v3836, %v3834
        %v4023 = vpack.c.b16 %v3837, %v3835
        %v4024 = vpack.c.b16 %v3840, %v3838
        %v4025 = vpack.c.b16 %v3841, %v3839
        %v4026 = vpack.c.b16 %v3844, %v3842
        %v4027 = vpack.c.b16 %v3845, %v3843
        %v4028 = vpack.c.b16 %v3848, %v3846
        %v4029 = vpack.c.b16 %v3849, %v3847
        %v4030 = vpack.c.b16 %v3852, %v3850
        %v4031 = vpack.c.b16 %v3853, %v3851
        %v4032 = vpack.c.b16 %v3856, %v3854
        %v4033 = vpack.c.b16 %v3857, %v3855
        %v4034 = vpack.c.b16 %v3860, %v3858
        %v4035 = vpack.c.b16 %v3861, %v3859
        %v4036 = vpack.c.b16 %v3864, %v3862
        %v4037 = vpack.c.b16 %v3865, %v3863
        %v4038 = vpack.c.b16 %v3868, %v3866
        %v4039 = vpack.c.b16 %v3869, %v3867
        %v4040 = vpack.c.b16 %v3872, %v3870
        %v4041 = vpack.c.b16 %v3873, %v3871
        %v4042 = vpack.c.b16 %v3876, %v3874
        %v4043 = vpack.c.b16 %v3877, %v3875
        %v4044 = vpack.c.b16 %v3880, %v3878
        %v4045 = vpack.c.b16 %v3881, %v3879
        %v4046 = vpack.c.b16 %v3884, %v3882
        %v4047 = vpack.c.b16 %v3885, %v3883
        %v4048 = vpack.c.b16 %v3888, %v3886
        %v4049 = vpack.c.b16 %v3889, %v3887
        %v4050 = vpack.c.b16 %v3892, %v3890
        %v4051 = vpack.c.b16 %v3893, %v3891
        %v4052 = vpack.c.b16 %v3896, %v3894
        %v4053 = vpack.c.b16 %v3897, %v3895
        %v4054 = vpack.c.b16 %v3900, %v3898
        %v4055 = vpack.c.b16 %v3901, %v3899
        %v4056 = vpack.c.b16 %v3904, %v3902
        %v4057 = vpack.c.b16 %v3905, %v3903
        %v4058 = vpack.c.b16 %v3908, %v3906
        %v4059 = vpack.c.b16 %v3909, %v3907
        %v4060 = vpack.c.b16 %v3912, %v3910
        %v4061 = vpack.c.b16 %v3913, %v3911
        %v4062 = vpack.c.b16 %v3916, %v3914
        %v4063 = vpack.c.b16 %v3917, %v3915
        %v4064 = vpack.c.b16 %v3920, %v3918
        %v4065 = vpack.c.b16 %v3921, %v3919
        %v4066 = vpack.c.b16 %v3924, %v3922
        %v4067 = vpack.c.b16 %v3925, %v3923
        %v4068 = vpack.c.b16 %v3928, %v3926
        %v4069 = vpack.c.b16 %v3929, %v3927
        %v4070 = vpack.c.b16 %v3932, %v3930
        %v4071 = vpack.c.b16 %v3933, %v3931
        %v4072 = vpack.c.b16 %v3936, %v3934
        %v4073 = vpack.c.b16 %v3937, %v3935
        %v4074 = vpack.c.b16 %v3940, %v3938
        %v4075 = vpack.c.b16 %v3941, %v3939
        %v4076 = vpack.c.b16 %v3944, %v3942
        %v4077 = vpack.c.b16 %v3945, %v3943
        %v4078 = vpack.c.b16 %v3948, %v3946
        %v4079 = vpack.c.b16 %v3949, %v3947
        %v4080 = vpack.c.b16 %v3952, %v3950
        %v4081 = vpack.c.b16 %v3953, %v3951
        %4210 = vmatprep.subr.bf16.mxu0 %v3955
        %4211 = vmatpush1.bf16.msra.mxu0 %v3954
        %4212 = vmatprep.subr.bf16.mxu0 %v3957
        %4213 = vmatpush1.bf16.msra.mxu0 %v3956
        %4214 = vmatprep.subr.bf16.mxu0 %v3959
        %4215 = vmatpush1.bf16.msra.mxu0 %v3958
        %4216 = vmatprep.subr.bf16.mxu0 %v3961
        %4217 = vmatpush1.bf16.msra.mxu0 %v3960
        %4218 = vmatprep.subr.bf16.mxu0 %v3963
        %4219 = vmatpush1.bf16.msra.mxu0 %v3962
        %4220 = vmatprep.subr.bf16.mxu0 %v3965
        %4221 = vmatpush1.bf16.msra.mxu0 %v3964
        %4222 = vmatprep.subr.bf16.mxu0 %v3967
        %4223 = vmatpush1.bf16.msra.mxu0 %v3966
        %4224 = vmatprep.subr.bf16.mxu0 %v3969
        %4225 = vmatpush1.bf16.msra.mxu0 %v3968
        %4226 = vmatprep.subr.bf16.mxu0 %v3971
        %4227 = vmatpush1.bf16.msra.mxu0 %v3970
        %4228 = vmatprep.subr.bf16.mxu0 %v3973
        %4229 = vmatpush1.bf16.msra.mxu0 %v3972
        %4230 = vmatprep.subr.bf16.mxu0 %v3975
        %4231 = vmatpush1.bf16.msra.mxu0 %v3974
        %4232 = vmatprep.subr.bf16.mxu0 %v3977
        %4233 = vmatpush1.bf16.msra.mxu0 %v3976
        %4234 = vmatprep.subr.bf16.mxu0 %v3979
        %4235 = vmatpush1.bf16.msra.mxu0 %v3978
        %4236 = vmatprep.subr.bf16.mxu0 %v3981
        %4237 = vmatpush1.bf16.msra.mxu0 %v3980
        %4238 = vmatprep.subr.bf16.mxu0 %v3983
        %4239 = vmatpush1.bf16.msra.mxu0 %v3982
        %4240 = vmatprep.subr.bf16.mxu0 %v3985
        %4241 = vmatpush1.bf16.msra.mxu0 %v3984
        %4242 = vmatprep.mubr.bf16.mxu0 %v3550
        %4243 = vmatmul.mubr.bf16.gmra.mrb[0].mxu0 %v3536
        %v4244 = vpop.f32.mrb[0].mxu0
        %v4245 = vadd.f32 %v3507, %v4244
        %v4246 = vpop.f32.mrb[0].mxu0
        %v4247 = vadd.f32 %v3511, %v4246
        %v4248 = vpop.f32.mrb[0].mxu0
        %v4249 = vpop.f32.mrb[0].mxu0
        %4250 = vdwg.mxu0
        %4251 = vmatprep.subr.bf16.mxu0 %v3987
        %4252 = vmatpush1.bf16.msra.mxu0 %v3986
        %4253 = vmatprep.subr.bf16.mxu0 %v3989
        %4254 = vmatpush1.bf16.msra.mxu0 %v3988
        %4255 = vmatprep.subr.bf16.mxu0 %v3991
        %4256 = vmatpush1.bf16.msra.mxu0 %v3990
        %4257 = vmatprep.subr.bf16.mxu0 %v3993
        %4258 = vmatpush1.bf16.msra.mxu0 %v3992
        %4259 = vmatprep.subr.bf16.mxu0 %v3995
        %4260 = vmatpush1.bf16.msra.mxu0 %v3994
        %4261 = vmatprep.subr.bf16.mxu0 %v3997
        %4262 = vmatpush1.bf16.msra.mxu0 %v3996
        %4263 = vmatprep.subr.bf16.mxu0 %v3999
        %4264 = vmatpush1.bf16.msra.mxu0 %v3998
        %4265 = vmatprep.subr.bf16.mxu0 %v4001
        %4266 = vmatpush1.bf16.msra.mxu0 %v4000
        %4267 = vmatprep.subr.bf16.mxu0 %v4003
        %4268 = vmatpush1.bf16.msra.mxu0 %v4002
        %4269 = vmatprep.subr.bf16.mxu0 %v4005
        %4270 = vmatpush1.bf16.msra.mxu0 %v4004
        %4271 = vmatprep.subr.bf16.mxu0 %v4007
        %4272 = vmatpush1.bf16.msra.mxu0 %v4006
        %4273 = vmatprep.subr.bf16.mxu0 %v4009
        %4274 = vmatpush1.bf16.msra.mxu0 %v4008
        %4275 = vmatprep.subr.bf16.mxu0 %v4011
        %4276 = vmatpush1.bf16.msra.mxu0 %v4010
        %4277 = vmatprep.subr.bf16.mxu0 %v4013
        %4278 = vmatpush1.bf16.msra.mxu0 %v4012
        %4279 = vmatprep.subr.bf16.mxu0 %v4015
        %4280 = vmatpush1.bf16.msra.mxu0 %v4014
        %4281 = vmatprep.subr.bf16.mxu0 %v4017
        %4282 = vmatpush1.bf16.msra.mxu0 %v4016
        %4283 = vmatprep.mubr.bf16.mxu0 %v3560
        %4284 = vmatmul.mubr.bf16.gmra.mrb[0].mxu0 %v3558
        %v4285 = vpop.f32.mrb[0].mxu0
        %v4286 = vadd.f32 %v4245, %v4285
        %v4287 = vpop.f32.mrb[0].mxu0
        %v4288 = vadd.f32 %v4247, %v4287
        %v4289 = vpop.f32.mrb[0].mxu0
        %v4290 = vpop.f32.mrb[0].mxu0
        %4291 = vdwg.mxu0
        %4292 = vmatprep.subr.bf16.mxu0 %v4019
        %4293 = vmatpush1.bf16.msra.mxu0 %v4018
        %4294 = vmatprep.subr.bf16.mxu0 %v4021
        %4295 = vmatpush1.bf16.msra.mxu0 %v4020
        %4296 = vmatprep.subr.bf16.mxu0 %v4023
        %4297 = vmatpush1.bf16.msra.mxu0 %v4022
        %4298 = vmatprep.subr.bf16.mxu0 %v4025
        %4299 = vmatpush1.bf16.msra.mxu0 %v4024
        %4300 = vmatprep.subr.bf16.mxu0 %v4027
        %4301 = vmatpush1.bf16.msra.mxu0 %v4026
        %4302 = vmatprep.subr.bf16.mxu0 %v4029
        %4303 = vmatpush1.bf16.msra.mxu0 %v4028
        %4304 = vmatprep.subr.bf16.mxu0 %v4031
        %4305 = vmatpush1.bf16.msra.mxu0 %v4030
        %4306 = vmatprep.subr.bf16.mxu0 %v4033
        %4307 = vmatpush1.bf16.msra.mxu0 %v4032
        %4308 = vmatprep.subr.bf16.mxu0 %v4035
        %4309 = vmatpush1.bf16.msra.mxu0 %v4034
        %4310 = vmatprep.subr.bf16.mxu0 %v4037
        %4311 = vmatpush1.bf16.msra.mxu0 %v4036
        %4312 = vmatprep.subr.bf16.mxu0 %v4039
        %4313 = vmatpush1.bf16.msra.mxu0 %v4038
        %4314 = vmatprep.subr.bf16.mxu0 %v4041
        %4315 = vmatpush1.bf16.msra.mxu0 %v4040
        %4316 = vmatprep.subr.bf16.mxu0 %v4043
        %4317 = vmatpush1.bf16.msra.mxu0 %v4042
        %4318 = vmatprep.subr.bf16.mxu0 %v4045
        %4319 = vmatpush1.bf16.msra.mxu0 %v4044
        %4320 = vmatprep.subr.bf16.mxu0 %v4047
        %4321 = vmatpush1.bf16.msra.mxu0 %v4046
        %4322 = vmatprep.subr.bf16.mxu0 %v4049
        %4323 = vmatpush1.bf16.msra.mxu0 %v4048
        %4324 = vmatprep.mubr.bf16.mxu0 %v3557
        %4325 = vmatmul.mubr.bf16.gmra.mrb[0].mxu0 %v3543
        %v4326 = vpop.f32.mrb[0].mxu0
        %v4327 = vadd.f32 %v4286, %v4326
        %v4328 = vpop.f32.mrb[0].mxu0
        %v4329 = vadd.f32 %v4288, %v4328
        %v4330 = vpop.f32.mrb[0].mxu0
        %v4331 = vpop.f32.mrb[0].mxu0
        %4332 = vdwg.mxu0
        %4333 = vmatprep.subr.bf16.mxu0 %v4051
        %4334 = vmatpush1.bf16.msra.mxu0 %v4050
        %4335 = vmatprep.subr.bf16.mxu0 %v4053
        %4336 = vmatpush1.bf16.msra.mxu0 %v4052
        %4337 = vmatprep.subr.bf16.mxu0 %v4055
        %4338 = vmatpush1.bf16.msra.mxu0 %v4054
        %4339 = vmatprep.subr.bf16.mxu0 %v4057
        %4340 = vmatpush1.bf16.msra.mxu0 %v4056
        %4341 = vmatprep.subr.bf16.mxu0 %v4059
        %4342 = vmatpush1.bf16.msra.mxu0 %v4058
        %4343 = vmatprep.subr.bf16.mxu0 %v4061
        %4344 = vmatpush1.bf16.msra.mxu0 %v4060
        %4345 = vmatprep.subr.bf16.mxu0 %v4063
        %4346 = vmatpush1.bf16.msra.mxu0 %v4062
        %4347 = vmatprep.subr.bf16.mxu0 %v4065
        %4348 = vmatpush1.bf16.msra.mxu0 %v4064
        %4349 = vmatprep.subr.bf16.mxu0 %v4067
        %4350 = vmatpush1.bf16.msra.mxu0 %v4066
        %4351 = vmatprep.subr.bf16.mxu0 %v4069
        %4352 = vmatpush1.bf16.msra.mxu0 %v4068
        %4353 = vmatprep.subr.bf16.mxu0 %v4071
        %4354 = vmatpush1.bf16.msra.mxu0 %v4070
        %4355 = vmatprep.subr.bf16.mxu0 %v4073
        %4356 = vmatpush1.bf16.msra.mxu0 %v4072
        %4357 = vmatprep.subr.bf16.mxu0 %v4075
        %4358 = vmatpush1.bf16.msra.mxu0 %v4074
        %4359 = vmatprep.subr.bf16.mxu0 %v4077
        %4360 = vmatpush1.bf16.msra.mxu0 %v4076
        %4361 = vmatprep.subr.bf16.mxu0 %v4079
        %4362 = vmatpush1.bf16.msra.mxu0 %v4078
        %4363 = vmatprep.subr.bf16.mxu0 %v4081
        %4364 = vmatpush1.bf16.msra.mxu0 %v4080
        %4365 = vmatprep.mubr.bf16.mxu0 %v3561
        %4366 = vmatmul.mubr.bf16.gmra.mrb[0].mxu0 %v3559
        %v4367 = vpop.f32.mrb[0].mxu0
        %v4368 = vadd.f32 %v4327, %v4367
        %v4369 = vpop.f32.mrb[0].mxu0
        %v4370 = vadd.f32 %v4329, %v4369
        %v4371 = vpop.f32.mrb[0].mxu0
        %v4372 = vpop.f32.mrb[0].mxu0
        %4373 = vdwg.mxu0
        %v4374 = vtanh.pop %v4368
        %v4375 = vtanh.pop %v4370
        %v4378 = vcombine.low %v4374, %v4375
        %v4380 = vunpack.c.l.s4 1983009808
        %v4381 = vunpack.c.0.s8 %v4380
        %v4382 = vlaneseq
        %v4383 = vshrl.u32 %v4382, 7
        %v4384 = vsub.s32 %v4381, %v4383
        %v4385 = vrot.slane %v4378, %v4384
        %4387 = vst [vmem:[%s564] sm:$0xf] %v4385
        %s4388 = smul.u32 2, %s30
        %p4389 = scmp.lt.s32.totalorder %s4388, 7
        %s4390 = scalar_select %p4389, %s4388, 7
        %s4391 = smul.addr %s4390, 2
        %s4392 = scalar_lea.vmem %s11, %s4391
        // Predicated region
        $region113: #{generator_forward.1} parent=63 // pred_check
          %p4393 = pneg %p289
        $region114: #{generator_forward.1} parent=63 // pred_check_branch
          %4395 = sbr.rel (%p4393) target = $region116
        $region115: #{generator_forward.1} parent=63 // pred_region
          %s4396 = smul.u32 2, %s30
        $region116: #{generator_forward.1} parent=63 // pred_fallthru
          _
      $region64: #{generator_forward.1} parent=5 // pred_fallthru
        _
      %p4397 = scmp.le.s32.totalorder 2, %s25
      // Predicated region
      $region117: #{generator_forward.1} parent=5 // pred_check
        %p4398 = pneg %p4397
      $region118: #{generator_forward.1} parent=5 // pred_check_branch
        %4400 = sbr.rel (%p4398) target = $region120
      $region119: #{generator_forward.1} parent=5 // pred_region
        %s4401 = ssub.s32 %s25, 2
        // Predicated region
        $region121: #{generator_forward.1} parent=119 // pred_check
          %p4402 = pneg %p295
        $region122: #{generator_forward.1} parent=119 // pred_check_branch
          %4404 = sbr.rel (%p4402) target = $region124
        $region123: #{generator_forward.1} parent=119 // pred_region
          %s4405 = smul.u32 2, %s31
          %p4406 = scmp.lt.s32.totalorder %s4405, 7
          %s4407 = scalar_select %p4406, %s4405, 7
          %s4408 = smul.addr %s4407, 2
          %s4409 = scalar_lea.vmem %s11, %s4408
        $region124: #{generator_forward.1} parent=119 // pred_fallthru
          _
      $region120: #{generator_forward.1} parent=5 // pred_fallthru
        _
    $region6: #{generator_forward.1} parent=1 // loop_footer
      %s29 = sadd.s32 1, %s25
    $region7: #{generator_forward.1} parent=1 // loop_footer_branch
      %24 = sbr.rel target = $region3
    $region8: #{generator_forward.1} parent=1 // loop_exit
      _
    %4410 = vsyncpa [#allocation4], 1
    %s4411 = scalar_lea.sflag [#allocation4], 1
    %4412 = vsyncpa %s4411, 1
    %4413 = vsyncpa [#allocation6], 1
    %4414 = vsyncpa [#allocation9], 1
    %4415 = vsyncpa [#allocation12], 1
    %4416 = vsyncpa [#allocation15], 1
    %4417 = vsyncpa [#allocation18], 1
    %s4418 = scalar_lea.sflag [#allocation18], 1
    %4419 = vsyncpa %s4418, 1

</llo_original>
